<compile_context>
chip_gen: v7x
topology: tpu7x:2x2x1
jax: 0.10.0
libtpu: 0.0.40
codegen_flags: <defaults>
</compile_context>

<pallas_src>
import jax
import jax.numpy as jnp
from jax.experimental import pallas as pl
from jax.experimental.pallas import tpu as pltpu

# small deterministic sizes
B, T, S = 2, 5, 8        # batch, dec_seq_len, enc_seq_len
H = 32                   # hidden_size
D = 32                   # dim_word
M = 32                   # attn_input_size (memory feature dim)
A = 32                   # attn_size
V = 50                   # num_words
VP = 128                 # num_words padded to a full lane tile
H4 = 4 * H

# ---- weight slab column offsets (every segment starts on a 128-lane tile) --
WC_XAG = 0          # wx_a_g               (H, 4H)   glob -> attn-LSTM gates
WC_XAE = 128        # wx_a_e               (D, 4H)   embed -> attn-LSTM gates
WC_HATTN = 256      # [wx_l_h | wq | wh_a] (H, 288)  fused h_attn head
WC_XLM = 640        # wx_l_m               (M, 4H)   attn_memory -> lang gates
WC_MEM = 768        # [wk | wm1_m]         (M, 64)   fused memory projection
WC_HLANG = 896      # [fc|wm1_h|ws1|wx_a_h|wh_l] (H, 448) fused h_lang head
WC_WM2 = 1408       # wm2                  (M, 2M)
NW = 1536
W_HATTN_W = H4 + A + H4            # 288
W_HLANG_W = VP + M + H + 2 * H4    # 448

# ---- bias slab column offsets ----------------------------------------------
BC_A = 0            # b_a                 (1, 4H)
BC_HATTN = 128      # [b_l | 0]           (1, 288)
BC_HLANG = 512      # [bfc | bm1 | bs1 | 0] (1, 448)
BC_M2 = 1024        # bm2                 (1, 2M)
BC_V = 1152         # v^T                 (1, A)
BC_WS2 = 1280       # ws2^T               (1, H)
BC_BS2 = 1408       # bs2                 (1, 1)
NB = 1536


def memory_decoder_kernel(embeds_ref, glob_ref, mem0_ref, maskb_ref,
                          w_ref, b_ref, out_ref):
  f32 = jnp.float32

  # ---- hoisted loop invariants (tiny rows + precomputed gate blocks) ----
  mask_bias = maskb_ref[...]                              # (B, S, 1)
  v_row = b_ref[:, BC_V:BC_V + A]                         # (1, A)
  ws2_row = b_ref[:, BC_WS2:BC_WS2 + H]                   # (1, H)
  bs2 = b_ref[:, BC_BS2:BC_BS2 + 1]                       # (1, 1)

  # enc_globals and all T embeddings contribute fixed attn-LSTM gate
  # pre-activations: one (T*B)-row MXU dot + one hoisted dot, done once.
  glob_gate = (jnp.dot(glob_ref[...], w_ref[:, WC_XAG:WC_XAG + H4],
                       preferred_element_type=f32)
               + b_ref[:, BC_A:BC_A + H4])                # (B, 4H)
  emb_gates = jnp.dot(embeds_ref[...].reshape(T * B, D),
                      w_ref[:, WC_XAE:WC_XAE + H4],
                      preferred_element_type=f32).reshape(T, B, H4)
  emb_glob_gates = emb_gates + glob_gate[None, :, :]      # (T, B, 4H)

  def lstm_gates(g, c_prev):
    # gate order permuted in the wrapper to (i, f, o, g): sigmoid over 3H
    # lanes only, tanh over the last H lanes only (halves EUP work).
    sig = jax.nn.sigmoid(g[:, :3 * H])
    gg = jnp.tanh(g[:, 3 * H:])
    i, f, o = sig[:, :H], sig[:, H:2 * H], sig[:, 2 * H:]
    c_new = f * c_prev + i * gg
    return o * jnp.tanh(c_new), c_new

  zeros_bh = jnp.zeros((B, H), f32)
  zeros_g = jnp.zeros((B, H4), f32)
  c_a = zeros_bh
  c_l = zeros_bh
  # cross-step carried recurrent-gate blocks (zeros: all states start at 0)
  rec_a = zeros_g      # h_attn(t-1) @ wh_a
  hl_attn = zeros_g    # h_lang(t-1) @ wx_a_h
  hl_lang = zeros_g    # h_lang(t-1) @ wh_l
  mem = mem0_ref[...]  # (B, S, M) evolving external memory

  logits_steps = []
  # Static unroll: T is tiny, the whole recurrence is one straight-line graph.
  # TODO(synk): for long T switch to lax.fori_loop with a VMEM logits scratch.
  for t in range(T):
    # ---- attention LSTM: every gate piece came from an earlier dot ----
    g_a = emb_glob_gates[t] + hl_attn + rec_a
    h_a, c_a = lstm_gates(g_a, c_a)

    # fused h_attn head: [lang-LSTM input gates (+b_l) | query | wh_a block]
    ha_out = (jnp.dot(h_a, w_ref[:, WC_HATTN:WC_HATTN + W_HATTN_W],
                      preferred_element_type=f32)
              + b_ref[:, BC_HATTN:BC_HATTN + W_HATTN_W])  # (B, 288)
    lang_gate_ha = ha_out[:, :H4]
    query = ha_out[:, H4:H4 + A]
    rec_a = ha_out[:, H4 + A:]       # attn-LSTM recurrent block for step t+1

    # ---- masked MLP attention over current memory (S kept on sublanes) ----
    mem_flat = mem.reshape(B * S, M)
    mp = jnp.dot(mem_flat, w_ref[:, WC_MEM:WC_MEM + A + M],
                 preferred_element_type=f32)              # fused [wk | wm1_m]
    keys = mp[:, :A].reshape(B, S, A)
    um = mp[:, A:].reshape(B, S, M)
    hidden = jnp.tanh(keys + query[:, None, :])
    scores = jnp.sum(hidden * v_row, axis=-1, keepdims=True) + mask_bias
    # additive -1e30 mask + max-subtraction: an all-masked row degenerates to
    # a uniform softmax (same as the jnp.where reference), never a 0 denom.
    scores = scores - jnp.max(scores, axis=1, keepdims=True)
    e = jnp.exp(scores)
    denom = jnp.sum(e, axis=1, keepdims=True)
    # approx=True would shave a few VPU refinement ops but drops to ~12-bit
    # accuracy; kept exact to hold the 1e-4 validation tolerance.
    attn = e * pl.reciprocal(denom, approx=False)         # (B, S, 1)
    attn_memory = jnp.sum(attn * mem, axis=1)             # (B, M)

    # ---- language LSTM ----
    g_l = (lang_gate_ha + hl_lang
           + jnp.dot(attn_memory, w_ref[:, WC_XLM:WC_XLM + H4],
                     preferred_element_type=f32))
    h_l, c_l = lstm_gates(g_l, c_l)

    # fused h_lang head:
    #   [logits(128) | mem-update h part (+bm1) | sentinel (+bs1) | wx_a_h | wh_l]
    lo = (jnp.dot(h_l, w_ref[:, WC_HLANG:WC_HLANG + W_HLANG_W],
                  preferred_element_type=f32)
          + b_ref[:, BC_HLANG:BC_HLANG + W_HLANG_W])      # (B, 448)
    logits_steps.append(lo[:, :VP])
    uh = lo[:, VP:VP + M]                                  # 128-lane aligned
    s1 = jax.nn.relu(lo[:, VP + M:VP + M + H])
    hl_attn = lo[:, VP + M + H:VP + M + H + H4]            # for step t+1
    hl_lang = lo[:, VP + M + H + H4:]                      # for step t+1

    # ---- memory update (erase / add gated by attention * sentinel) ----
    u1 = jax.nn.relu(um + uh[:, None, :])                  # bm1 already in uh
    u2 = (jnp.dot(u1.reshape(B * S, M), w_ref[:, WC_WM2:WC_WM2 + 2 * M],
                  preferred_element_type=f32)
          + b_ref[:, BC_M2:BC_M2 + 2 * M]).reshape(B, S, 2 * M)
    erase = jax.nn.sigmoid(u2[:, :, :M])
    add = u2[:, :, M:]
    sent = jax.nn.sigmoid(jnp.sum(s1 * ws2_row, axis=-1, keepdims=True) + bs2)
    ms = attn * sent[:, :, None]                           # (B, S, 1)
    mem = mem * (1.0 - ms * erase) + ms * add

  # single dense store of all T steps (no per-step masked sublane stores)
  out_ref[...] = jnp.stack(logits_steps, axis=1)           # (B, T, VP)


def pack_params(p):
  """One-time packing of all parameters into two contiguous f32 slabs."""
  f32 = jnp.float32

  def perm(w):  # LSTM gate columns: torch (i, f, g, o) -> (i, f, o, g)
    return jnp.concatenate([w[..., :2 * H], w[..., 3 * H:], w[..., 2 * H:3 * H]],
                           axis=-1)

  wx_a = perm(p["wx_a"]); wh_a = perm(p["wh_a"]); b_a = perm(p["b_a"])
  wx_l = perm(p["wx_l"]); wh_l = perm(p["wh_l"]); b_l = perm(p["b_l"])

  wx_a_h, wx_a_g, wx_a_e = wx_a[:H], wx_a[H:2 * H], wx_a[2 * H:]
  wx_l_h, wx_l_m = wx_l[:H], wx_l[H:]
  wm1_h, wm1_m = p["wm1"][:H], p["wm1"][H:]

  wfc_pad = jnp.zeros((H, VP), f32).at[:, :V].set(p["wfc"])
  bfc_pad = jnp.zeros((1, VP), f32).at[:, :V].set(p["bfc"])

  w_hattn = jnp.concatenate([wx_l_h, p["wq"], wh_a], axis=1)              # (H,288)
  w_hlang = jnp.concatenate([wfc_pad, wm1_h, p["ws1"], wx_a_h, wh_l], 1)  # (H,448)
  b_hattn = jnp.concatenate([b_l, jnp.zeros((1, A + H4), f32)], axis=1)
  b_hlang = jnp.concatenate([bfc_pad, p["bm1"], p["bs1"],
                             jnp.zeros((1, 2 * H4), f32)], axis=1)

  def seg(dst, col, arr):
    return dst.at[:arr.shape[0], col:col + arr.shape[1]].set(arr)

  w_slab = jnp.zeros((H, NW), f32)
  w_slab = seg(w_slab, WC_XAG, wx_a_g)
  w_slab = seg(w_slab, WC_XAE, wx_a_e)
  w_slab = seg(w_slab, WC_HATTN, w_hattn)
  w_slab = seg(w_slab, WC_XLM, wx_l_m)
  w_slab = seg(w_slab, WC_MEM, jnp.concatenate([p["wk"], wm1_m], axis=1))
  w_slab = seg(w_slab, WC_HLANG, w_hlang)
  w_slab = seg(w_slab, WC_WM2, p["wm2"])

  b_slab = jnp.zeros((1, NB), f32)
  b_slab = seg(b_slab, BC_A, b_a)
  b_slab = seg(b_slab, BC_HATTN, b_hattn)
  b_slab = seg(b_slab, BC_HLANG, b_hlang)
  b_slab = seg(b_slab, BC_M2, p["bm2"])
  b_slab = seg(b_slab, BC_V, p["v"].T)
  b_slab = seg(b_slab, BC_WS2, p["ws2"].T)
  b_slab = seg(b_slab, BC_BS2, p["bs2"])
  return w_slab, b_slab


def memory_decoder(embeds, enc_globals, enc_memories, enc_masks, w_slab, b_slab):
  """embeds: (T, B, D) time-major.  Returns (B*T, V) logits, batch-major rows."""
  mask_bias = ((1.0 - enc_masks) * (-1e30))[:, :, None]    # (B, S, 1)
  vmem = pl.BlockSpec(memory_space=pltpu.MemorySpace.VMEM)
  out = pl.pallas_call(
      memory_decoder_kernel,
      out_shape=jax.ShapeDtypeStruct((B, T, VP), jnp.float32),
      in_specs=[vmem] * 6,
      out_specs=vmem,
  )(embeds, enc_globals, enc_memories, mask_bias, w_slab, b_slab)
  # PyTorch: stack(step_outs, dim=1).view(-1, num_words) -> (B*T, V)
  return out[:, :, :V].reshape(B * T, V)


def memory_decoder_ref(embeds, enc_globals, enc_masks, enc_memories, p):
  """Pure-JAX reference with the original (unfused) math."""
  h_a = jnp.zeros((B, H)); c_a = jnp.zeros((B, H))
  h_l = jnp.zeros((B, H)); c_l = jnp.zeros((B, H))
  mem = enc_memories
  outs = []

  def cell(x, h, c, wx, wh, b):
    g = x @ wx + h @ wh + b
    i = jax.nn.sigmoid(g[:, :H]); f = jax.nn.sigmoid(g[:, H:2 * H])
    gg = jnp.tanh(g[:, 2 * H:3 * H]); o = jax.nn.sigmoid(g[:, 3 * H:])
    c2 = f * c + i * gg
    return o * jnp.tanh(c2), c2

  for t in range(T):
    embed = embeds[t]
    h_a, c_a = cell(jnp.concatenate([h_l, enc_globals, embed], 1),
                    h_a, c_a, p['wx_a'], p['wh_a'], p['b_a'])
    keys = jnp.einsum('bsm,ma->bsa', mem, p['wk'])
    q = h_a @ p['wq']
    scr = (jnp.tanh(keys + q[:, None, :]) @ p['v'])[:, :, 0]
    scr = jnp.where(enc_masks > 0, scr, -1e30)
    attn = jax.nn.softmax(scr, axis=1)
    attn_mem = jnp.sum(attn[:, :, None] * mem, axis=1)
    h_l, c_l = cell(jnp.concatenate([h_a, attn_mem], 1),
                    h_l, c_l, p['wx_l'], p['wh_l'], p['b_l'])
    indiv = jnp.concatenate(
        [jnp.broadcast_to(h_l[:, None, :], (B, S, H)), mem], 2)
    u1 = jax.nn.relu(jnp.einsum('bsk,km->bsm', indiv, p['wm1']) + p['bm1'])
    u2 = jnp.einsum('bsm,mn->bsn', u1, p['wm2']) + p['bm2']
    erase = jax.nn.sigmoid(u2[:, :, :M]); add = u2[:, :, M:]
    sent = jax.nn.sigmoid(jax.nn.relu(h_l @ p['ws1'] + p['bs1']) @ p['ws2'] + p['bs2'])
    ms = attn * sent
    mem = mem * (1 - ms[:, :, None] * erase) + ms[:, :, None] * add
    outs.append(h_l @ p['wfc'] + p['bfc'])
  return jnp.stack(outs, 1).reshape(B * T, V)


if __name__ == "__main__":
  key = jax.random.PRNGKey(0)
  ks = jax.random.split(key, 24)

  def nrm(k, shape):
    return 0.1 * jax.random.normal(k, shape, dtype=jnp.float32)

  # LSTM combined bias (b_ih + b_hh): zeros with forget-gate segment = 1,
  # matching init_rnn_weights.
  b_lstm = jnp.zeros((1, 4 * H), jnp.float32).at[:, H:2 * H].set(1.0)

  params = {
      "wx_a": nrm(ks[0], (H + H + D, 4 * H)),
      "wh_a": nrm(ks[1], (H, 4 * H)),
      "b_a": b_lstm,
      "wx_l": nrm(ks[2], (H + M, 4 * H)),
      "wh_l": nrm(ks[3], (H, 4 * H)),
      "b_l": b_lstm,
      "wk": nrm(ks[4], (M, A)),
      "wq": nrm(ks[5], (H, A)),
      "v": nrm(ks[6], (A, 1)),
      "wm1": nrm(ks[7], (H + M, M)),
      "bm1": jnp.zeros((1, M), jnp.float32),
      "wm2": nrm(ks[8], (M, 2 * M)),
      "bm2": jnp.zeros((1, 2 * M), jnp.float32),
      "ws1": nrm(ks[9], (H, H)),
      "bs1": jnp.zeros((1, H), jnp.float32),
      "ws2": nrm(ks[10], (H, 1)),
      "bs2": jnp.zeros((1, 1), jnp.float32),
      "wfc": nrm(ks[11], (H, V)),
      "bfc": jnp.zeros((1, V), jnp.float32),
  }
  embedding_table = nrm(ks[12], (V, D))

  # inputs
  inputs = jax.random.randint(ks[13], (B, T), 0, V)               # (B, T) word ids
  enc_globals = jax.random.normal(ks[14], (B, H), jnp.float32)
  enc_memories = jax.random.normal(ks[15], (B, S, M), jnp.float32)
  valid_lens = jnp.array([S, S - 2])
  enc_masks = (jnp.arange(S)[None, :] < valid_lens[:, None]).astype(jnp.float32)

  # glue: embedding lookup (gather) outside the kernel, time-major
  embeds = jnp.transpose(embedding_table[inputs], (1, 0, 2))       # (T, B, D)

  # one-time parameter packing (outside the per-step jitted decode path)
  w_slab, b_slab = pack_params(params)
  w_slab, b_slab = jax.block_until_ready((w_slab, b_slab))

  run = jax.jit(memory_decoder)
  logits = run(embeds, enc_globals, enc_memories, enc_masks, w_slab, b_slab)
  logits = jax.block_until_ready(logits)
  assert logits.shape == (B * T, V)

  ref = memory_decoder_ref(embeds, enc_globals, enc_masks, enc_memories, params)
  assert jnp.allclose(logits, ref, atol=1e-4, rtol=1e-4), "mismatch vs JAX reference"

  print("KERNEL_OK")
</pallas_src>

<mosaic_0001>
module attributes {stable_mosaic.version = 11 : i64} {
  func.func @memory_decoder_kernel(%arg0: memref<5x2x32xf32, #tpu.memory_space<vmem>>, %arg1: memref<2x32xf32, #tpu.memory_space<vmem>>, %arg2: memref<2x8x32xf32, #tpu.memory_space<vmem>>, %arg3: memref<2x8x1xf32, #tpu.memory_space<vmem>>, %arg4: memref<32x1536xf32, #tpu.memory_space<vmem>>, %arg5: memref<1x1536xf32, #tpu.memory_space<vmem>>, %arg6: memref<2x5x128xf32, #tpu.memory_space<vmem>>) attributes {dimension_semantics = [], scalar_prefetch = 0 : i64, scratch_operands = 0 : i64, tpu.core_type = #tpu.core_type<tc>} {
    %c0 = arith.constant 0 : index
    %c0_0 = arith.constant 0 : index
    %c0_1 = arith.constant 0 : index
    %0 = vector.load %arg3[%c0, %c0_0, %c0_1] : memref<2x8x1xf32, #tpu.memory_space<vmem>>, vector<2x8x1xf32>
    %c0_2 = arith.constant 0 : index
    %c1152 = arith.constant 1152 : index
    %1 = vector.load %arg5[%c0_2, %c1152] : memref<1x1536xf32, #tpu.memory_space<vmem>>, vector<1x32xf32>
    %c0_3 = arith.constant 0 : index
    %c1280 = arith.constant 1280 : index
    %2 = vector.load %arg5[%c0_3, %c1280] : memref<1x1536xf32, #tpu.memory_space<vmem>>, vector<1x32xf32>
    %c0_4 = arith.constant 0 : index
    %c1408 = arith.constant 1408 : index
    %3 = vector.load %arg5[%c0_4, %c1408] : memref<1x1536xf32, #tpu.memory_space<vmem>>, vector<1x1xf32>
    %c0_5 = arith.constant 0 : index
    %c0_6 = arith.constant 0 : index
    %4 = vector.load %arg1[%c0_5, %c0_6] : memref<2x32xf32, #tpu.memory_space<vmem>>, vector<2x32xf32>
    %c0_7 = arith.constant 0 : index
    %c0_8 = arith.constant 0 : index
    %5 = vector.load %arg4[%c0_7, %c0_8] : memref<32x1536xf32, #tpu.memory_space<vmem>>, vector<32x128xf32>
    %cst = arith.constant dense<0.000000e+00> : vector<2x128xf32>
    %6 = tpu.matmul %4, %5, %cst {dimension_numbers = #tpu.dot_dimension_numbers<[1], [0], [0], [1], [0, 0, 1, 1], [], []>} : vector<2x32xf32>, vector<32x128xf32>, vector<2x128xf32> -> vector<2x128xf32>
    %c0_9 = arith.constant 0 : index
    %c0_10 = arith.constant 0 : index
    %7 = vector.load %arg5[%c0_9, %c0_10] : memref<1x1536xf32, #tpu.memory_space<vmem>>, vector<1x128xf32>
    %8 = vector.broadcast %7 : vector<1x128xf32> to vector<2x128xf32>
    %9 = arith.addf %6, %8 : vector<2x128xf32>
    %c0_11 = arith.constant 0 : index
    %c0_12 = arith.constant 0 : index
    %c0_13 = arith.constant 0 : index
    %10 = vector.load %arg0[%c0_11, %c0_12, %c0_13] : memref<5x2x32xf32, #tpu.memory_space<vmem>>, vector<5x2x32xf32>
    %11 = vector.shape_cast %10 : vector<5x2x32xf32> to vector<10x32xf32>
    %c0_14 = arith.constant 0 : index
    %c128 = arith.constant 128 : index
    %12 = vector.load %arg4[%c0_14, %c128] : memref<32x1536xf32, #tpu.memory_space<vmem>>, vector<32x128xf32>
    %cst_15 = arith.constant dense<0.000000e+00> : vector<10x128xf32>
    %13 = tpu.matmul %11, %12, %cst_15 {dimension_numbers = #tpu.dot_dimension_numbers<[1], [0], [0], [1], [0, 0, 1, 1], [], []>} : vector<10x32xf32>, vector<32x128xf32>, vector<10x128xf32> -> vector<10x128xf32>
    %14 = vector.shape_cast %13 : vector<10x128xf32> to vector<5x2x128xf32>
    %15 = vector.shape_cast %9 : vector<2x128xf32> to vector<1x2x128xf32>
    %16 = vector.broadcast %15 : vector<1x2x128xf32> to vector<5x2x128xf32>
    %17 = arith.addf %14, %16 : vector<5x2x128xf32>
    %cst_16 = arith.constant 0.000000e+00 : f32
    %18 = vector.broadcast %cst_16 : f32 to vector<2x32xf32>
    %cst_17 = arith.constant 0.000000e+00 : f32
    %19 = vector.broadcast %cst_17 : f32 to vector<2x128xf32>
    %c0_18 = arith.constant 0 : index
    %c0_19 = arith.constant 0 : index
    %c0_20 = arith.constant 0 : index
    %20 = vector.load %arg2[%c0_18, %c0_19, %c0_20] : memref<2x8x32xf32, #tpu.memory_space<vmem>>, vector<2x8x32xf32>
    %21 = vector.extract_strided_slice %17 {offsets = [0, 0, 0], sizes = [1, 2, 128], strides = [1, 1, 1]} : vector<5x2x128xf32> to vector<1x2x128xf32>
    %22 = vector.shape_cast %21 : vector<1x2x128xf32> to vector<2x128xf32>
    %23 = arith.addf %22, %19 : vector<2x128xf32>
    %24 = arith.addf %23, %19 : vector<2x128xf32>
    %25 = vector.extract_strided_slice %24 {offsets = [0, 0], sizes = [2, 96], strides = [1, 1]} : vector<2x128xf32> to vector<2x96xf32>
    %26 = arith.negf %25 : vector<2x96xf32>
    %27 = math.exp %26 : vector<2x96xf32>
    %cst_21 = arith.constant 1.000000e+00 : f32
    %28 = vector.broadcast %cst_21 : f32 to vector<2x96xf32>
    %29 = arith.addf %28, %27 : vector<2x96xf32>
    %30 = arith.divf %28, %29 : vector<2x96xf32>
    %31 = vector.extract_strided_slice %24 {offsets = [0, 96], sizes = [2, 32], strides = [1, 1]} : vector<2x128xf32> to vector<2x32xf32>
    %32 = math.tanh %31 : vector<2x32xf32>
    %33 = vector.extract_strided_slice %30 {offsets = [0, 0], sizes = [2, 32], strides = [1, 1]} : vector<2x96xf32> to vector<2x32xf32>
    %34 = vector.extract_strided_slice %30 {offsets = [0, 32], sizes = [2, 32], strides = [1, 1]} : vector<2x96xf32> to vector<2x32xf32>
    %35 = vector.extract_strided_slice %30 {offsets = [0, 64], sizes = [2, 32], strides = [1, 1]} : vector<2x96xf32> to vector<2x32xf32>
    %36 = arith.mulf %34, %18 : vector<2x32xf32>
    %37 = arith.mulf %33, %32 : vector<2x32xf32>
    %38 = arith.addf %36, %37 : vector<2x32xf32>
    %39 = math.tanh %38 : vector<2x32xf32>
    %40 = arith.mulf %35, %39 : vector<2x32xf32>
    %c0_22 = arith.constant 0 : index
    %c256 = arith.constant 256 : index
    %41 = vector.load %arg4[%c0_22, %c256] : memref<32x1536xf32, #tpu.memory_space<vmem>>, vector<32x288xf32>
    %cst_23 = arith.constant dense<0.000000e+00> : vector<2x288xf32>
    %42 = tpu.matmul %40, %41, %cst_23 {dimension_numbers = #tpu.dot_dimension_numbers<[1], [0], [0], [1], [0, 0, 1, 1], [], []>} : vector<2x32xf32>, vector<32x288xf32>, vector<2x288xf32> -> vector<2x288xf32>
    %c0_24 = arith.constant 0 : index
    %c128_25 = arith.constant 128 : index
    %43 = vector.load %arg5[%c0_24, %c128_25] : memref<1x1536xf32, #tpu.memory_space<vmem>>, vector<1x288xf32>
    %44 = vector.broadcast %43 : vector<1x288xf32> to vector<2x288xf32>
    %45 = arith.addf %42, %44 : vector<2x288xf32>
    %46 = vector.extract_strided_slice %45 {offsets = [0, 0], sizes = [2, 128], strides = [1, 1]} : vector<2x288xf32> to vector<2x128xf32>
    %47 = vector.extract_strided_slice %45 {offsets = [0, 128], sizes = [2, 32], strides = [1, 1]} : vector<2x288xf32> to vector<2x32xf32>
    %48 = vector.extract_strided_slice %45 {offsets = [0, 160], sizes = [2, 128], strides = [1, 1]} : vector<2x288xf32> to vector<2x128xf32>
    %49 = vector.shape_cast %20 : vector<2x8x32xf32> to vector<16x32xf32>
    %c0_26 = arith.constant 0 : index
    %c768 = arith.constant 768 : index
    %50 = vector.load %arg4[%c0_26, %c768] : memref<32x1536xf32, #tpu.memory_space<vmem>>, vector<32x64xf32>
    %cst_27 = arith.constant dense<0.000000e+00> : vector<16x64xf32>
    %51 = tpu.matmul %49, %50, %cst_27 {dimension_numbers = #tpu.dot_dimension_numbers<[1], [0], [0], [1], [0, 0, 1, 1], [], []>} : vector<16x32xf32>, vector<32x64xf32>, vector<16x64xf32> -> vector<16x64xf32>
    %52 = vector.extract_strided_slice %51 {offsets = [0, 0], sizes = [16, 32], strides = [1, 1]} : vector<16x64xf32> to vector<16x32xf32>
    %53 = vector.shape_cast %52 : vector<16x32xf32> to vector<2x8x32xf32>
    %54 = vector.extract_strided_slice %51 {offsets = [0, 32], sizes = [16, 32], strides = [1, 1]} : vector<16x64xf32> to vector<16x32xf32>
    %55 = vector.shape_cast %54 : vector<16x32xf32> to vector<2x8x32xf32>
    %56 = vector.shape_cast %47 : vector<2x32xf32> to vector<2x1x32xf32>
    %57 = vector.broadcast %56 : vector<2x1x32xf32> to vector<2x8x32xf32>
    %58 = arith.addf %53, %57 : vector<2x8x32xf32>
    %59 = math.tanh %58 : vector<2x8x32xf32>
    %60 = vector.shape_cast %1 : vector<1x32xf32> to vector<1x1x32xf32>
    %61 = vector.broadcast %60 : vector<1x1x32xf32> to vector<2x8x32xf32>
    %62 = arith.mulf %59, %61 : vector<2x8x32xf32>
    %cst_28 = arith.constant dense<0.000000e+00> : vector<2x8xf32>
    %63 = vector.multi_reduction <add>, %62, %cst_28 [2] : vector<2x8x32xf32> to vector<2x8xf32>
    %64 = vector.shape_cast %63 : vector<2x8xf32> to vector<2x8x1xf32>
    %65 = arith.addf %64, %0 : vector<2x8x1xf32>
    %cst_29 = arith.constant dense<0xFF800000> : vector<2x1xf32>
    %66 = vector.multi_reduction <maximumf>, %65, %cst_29 [1] : vector<2x8x1xf32> to vector<2x1xf32>
    %67 = vector.shape_cast %66 : vector<2x1xf32> to vector<2x1x1xf32>
    %68 = vector.broadcast %67 : vector<2x1x1xf32> to vector<2x8x1xf32>
    %69 = arith.subf %65, %68 : vector<2x8x1xf32>
    %70 = math.exp %69 : vector<2x8x1xf32>
    %cst_30 = arith.constant dense<0.000000e+00> : vector<2x1xf32>
    %71 = vector.multi_reduction <add>, %70, %cst_30 [1] : vector<2x8x1xf32> to vector<2x1xf32>
    %72 = vector.shape_cast %71 : vector<2x1xf32> to vector<2x1x1xf32>
    %73 = tpu.reciprocal %72 : vector<2x1x1xf32> -> vector<2x1x1xf32>
    %74 = vector.broadcast %73 : vector<2x1x1xf32> to vector<2x8x1xf32>
    %75 = arith.mulf %70, %74 : vector<2x8x1xf32>
    %76 = vector.broadcast %75 : vector<2x8x1xf32> to vector<2x8x32xf32>
    %77 = arith.mulf %76, %20 : vector<2x8x32xf32>
    %cst_31 = arith.constant dense<0.000000e+00> : vector<2x32xf32>
    %78 = vector.multi_reduction <add>, %77, %cst_31 [1] : vector<2x8x32xf32> to vector<2x32xf32>
    %79 = arith.addf %46, %19 : vector<2x128xf32>
    %c0_32 = arith.constant 0 : index
    %c640 = arith.constant 640 : index
    %80 = vector.load %arg4[%c0_32, %c640] : memref<32x1536xf32, #tpu.memory_space<vmem>>, vector<32x128xf32>
    %cst_33 = arith.constant dense<0.000000e+00> : vector<2x128xf32>
    %81 = tpu.matmul %78, %80, %cst_33 {dimension_numbers = #tpu.dot_dimension_numbers<[1], [0], [0], [1], [0, 0, 1, 1], [], []>} : vector<2x32xf32>, vector<32x128xf32>, vector<2x128xf32> -> vector<2x128xf32>
    %82 = arith.addf %79, %81 : vector<2x128xf32>
    %83 = vector.extract_strided_slice %82 {offsets = [0, 0], sizes = [2, 96], strides = [1, 1]} : vector<2x128xf32> to vector<2x96xf32>
    %84 = arith.negf %83 : vector<2x96xf32>
    %85 = math.exp %84 : vector<2x96xf32>
    %cst_34 = arith.constant 1.000000e+00 : f32
    %86 = vector.broadcast %cst_34 : f32 to vector<2x96xf32>
    %87 = arith.addf %86, %85 : vector<2x96xf32>
    %88 = arith.divf %86, %87 : vector<2x96xf32>
    %89 = vector.extract_strided_slice %82 {offsets = [0, 96], sizes = [2, 32], strides = [1, 1]} : vector<2x128xf32> to vector<2x32xf32>
    %90 = math.tanh %89 : vector<2x32xf32>
    %91 = vector.extract_strided_slice %88 {offsets = [0, 0], sizes = [2, 32], strides = [1, 1]} : vector<2x96xf32> to vector<2x32xf32>
    %92 = vector.extract_strided_slice %88 {offsets = [0, 32], sizes = [2, 32], strides = [1, 1]} : vector<2x96xf32> to vector<2x32xf32>
    %93 = vector.extract_strided_slice %88 {offsets = [0, 64], sizes = [2, 32], strides = [1, 1]} : vector<2x96xf32> to vector<2x32xf32>
    %94 = arith.mulf %92, %18 : vector<2x32xf32>
    %95 = arith.mulf %91, %90 : vector<2x32xf32>
    %96 = arith.addf %94, %95 : vector<2x32xf32>
    %97 = math.tanh %96 : vector<2x32xf32>
    %98 = arith.mulf %93, %97 : vector<2x32xf32>
    %c0_35 = arith.constant 0 : index
    %c896 = arith.constant 896 : index
    %99 = vector.load %arg4[%c0_35, %c896] : memref<32x1536xf32, #tpu.memory_space<vmem>>, vector<32x448xf32>
    %cst_36 = arith.constant dense<0.000000e+00> : vector<2x448xf32>
    %100 = tpu.matmul %98, %99, %cst_36 {dimension_numbers = #tpu.dot_dimension_numbers<[1], [0], [0], [1], [0, 0, 1, 1], [], []>} : vector<2x32xf32>, vector<32x448xf32>, vector<2x448xf32> -> vector<2x448xf32>
    %c0_37 = arith.constant 0 : index
    %c512 = arith.constant 512 : index
    %101 = vector.load %arg5[%c0_37, %c512] : memref<1x1536xf32, #tpu.memory_space<vmem>>, vector<1x448xf32>
    %102 = vector.broadcast %101 : vector<1x448xf32> to vector<2x448xf32>
    %103 = arith.addf %100, %102 : vector<2x448xf32>
    %104 = vector.extract_strided_slice %103 {offsets = [0, 0], sizes = [2, 128], strides = [1, 1]} : vector<2x448xf32> to vector<2x128xf32>
    %105 = vector.extract_strided_slice %103 {offsets = [0, 128], sizes = [2, 32], strides = [1, 1]} : vector<2x448xf32> to vector<2x32xf32>
    %106 = vector.extract_strided_slice %103 {offsets = [0, 160], sizes = [2, 32], strides = [1, 1]} : vector<2x448xf32> to vector<2x32xf32>
    %cst_38 = arith.constant 0.000000e+00 : f32
    %107 = vector.broadcast %cst_38 : f32 to vector<2x32xf32>
    %108 = arith.maximumf %106, %107 : vector<2x32xf32>
    %109 = vector.extract_strided_slice %103 {offsets = [0, 192], sizes = [2, 128], strides = [1, 1]} : vector<2x448xf32> to vector<2x128xf32>
    %110 = vector.extract_strided_slice %103 {offsets = [0, 320], sizes = [2, 128], strides = [1, 1]} : vector<2x448xf32> to vector<2x128xf32>
    %111 = vector.shape_cast %105 : vector<2x32xf32> to vector<2x1x32xf32>
    %112 = vector.broadcast %111 : vector<2x1x32xf32> to vector<2x8x32xf32>
    %113 = arith.addf %55, %112 : vector<2x8x32xf32>
    %cst_39 = arith.constant 0.000000e+00 : f32
    %114 = vector.broadcast %cst_39 : f32 to vector<2x8x32xf32>
    %115 = arith.maximumf %113, %114 : vector<2x8x32xf32>
    %116 = vector.shape_cast %115 : vector<2x8x32xf32> to vector<16x32xf32>
    %c0_40 = arith.constant 0 : index
    %c1408_41 = arith.constant 1408 : index
    %117 = vector.load %arg4[%c0_40, %c1408_41] : memref<32x1536xf32, #tpu.memory_space<vmem>>, vector<32x64xf32>
    %cst_42 = arith.constant dense<0.000000e+00> : vector<16x64xf32>
    %118 = tpu.matmul %116, %117, %cst_42 {dimension_numbers = #tpu.dot_dimension_numbers<[1], [0], [0], [1], [0, 0, 1, 1], [], []>} : vector<16x32xf32>, vector<32x64xf32>, vector<16x64xf32> -> vector<16x64xf32>
    %c0_43 = arith.constant 0 : index
    %c1024 = arith.constant 1024 : index
    %119 = vector.load %arg5[%c0_43, %c1024] : memref<1x1536xf32, #tpu.memory_space<vmem>>, vector<1x64xf32>
    %120 = vector.broadcast %119 : vector<1x64xf32> to vector<16x64xf32>
    %121 = arith.addf %118, %120 : vector<16x64xf32>
    %122 = vector.shape_cast %121 : vector<16x64xf32> to vector<2x8x64xf32>
    %123 = vector.extract_strided_slice %122 {offsets = [0, 0, 0], sizes = [2, 8, 32], strides = [1, 1, 1]} : vector<2x8x64xf32> to vector<2x8x32xf32>
    %124 = arith.negf %123 : vector<2x8x32xf32>
    %125 = math.exp %124 : vector<2x8x32xf32>
    %cst_44 = arith.constant 1.000000e+00 : f32
    %126 = vector.broadcast %cst_44 : f32 to vector<2x8x32xf32>
    %127 = arith.addf %126, %125 : vector<2x8x32xf32>
    %128 = arith.divf %126, %127 : vector<2x8x32xf32>
    %129 = vector.extract_strided_slice %122 {offsets = [0, 0, 32], sizes = [2, 8, 32], strides = [1, 1, 1]} : vector<2x8x64xf32> to vector<2x8x32xf32>
    %130 = vector.broadcast %2 : vector<1x32xf32> to vector<2x32xf32>
    %131 = arith.mulf %108, %130 : vector<2x32xf32>
    %cst_45 = arith.constant dense<0.000000e+00> : vector<2xf32>
    %132 = vector.multi_reduction <add>, %131, %cst_45 [1] : vector<2x32xf32> to vector<2xf32>
    %133 = vector.shape_cast %132 : vector<2xf32> to vector<2x1xf32>
    %134 = vector.broadcast %3 : vector<1x1xf32> to vector<2x1xf32>
    %135 = arith.addf %133, %134 : vector<2x1xf32>
    %136 = arith.negf %135 : vector<2x1xf32>
    %137 = math.exp %136 : vector<2x1xf32>
    %cst_46 = arith.constant 1.000000e+00 : f32
    %138 = vector.broadcast %cst_46 : f32 to vector<2x1xf32>
    %139 = arith.addf %138, %137 : vector<2x1xf32>
    %140 = arith.divf %138, %139 : vector<2x1xf32>
    %141 = vector.shape_cast %140 : vector<2x1xf32> to vector<2x1x1xf32>
    %142 = vector.broadcast %141 : vector<2x1x1xf32> to vector<2x8x1xf32>
    %143 = arith.mulf %75, %142 : vector<2x8x1xf32>
    %144 = vector.broadcast %143 : vector<2x8x1xf32> to vector<2x8x32xf32>
    %145 = arith.mulf %144, %128 : vector<2x8x32xf32>
    %cst_47 = arith.constant 1.000000e+00 : f32
    %146 = vector.broadcast %cst_47 : f32 to vector<2x8x32xf32>
    %147 = arith.subf %146, %145 : vector<2x8x32xf32>
    %148 = arith.mulf %20, %147 : vector<2x8x32xf32>
    %149 = vector.broadcast %143 : vector<2x8x1xf32> to vector<2x8x32xf32>
    %150 = arith.mulf %149, %129 : vector<2x8x32xf32>
    %151 = arith.addf %148, %150 : vector<2x8x32xf32>
    %152 = vector.extract_strided_slice %17 {offsets = [1, 0, 0], sizes = [1, 2, 128], strides = [1, 1, 1]} : vector<5x2x128xf32> to vector<1x2x128xf32>
    %153 = vector.shape_cast %152 : vector<1x2x128xf32> to vector<2x128xf32>
    %154 = arith.addf %153, %109 : vector<2x128xf32>
    %155 = arith.addf %154, %48 : vector<2x128xf32>
    %156 = vector.extract_strided_slice %155 {offsets = [0, 0], sizes = [2, 96], strides = [1, 1]} : vector<2x128xf32> to vector<2x96xf32>
    %157 = arith.negf %156 : vector<2x96xf32>
    %158 = math.exp %157 : vector<2x96xf32>
    %cst_48 = arith.constant 1.000000e+00 : f32
    %159 = vector.broadcast %cst_48 : f32 to vector<2x96xf32>
    %160 = arith.addf %159, %158 : vector<2x96xf32>
    %161 = arith.divf %159, %160 : vector<2x96xf32>
    %162 = vector.extract_strided_slice %155 {offsets = [0, 96], sizes = [2, 32], strides = [1, 1]} : vector<2x128xf32> to vector<2x32xf32>
    %163 = math.tanh %162 : vector<2x32xf32>
    %164 = vector.extract_strided_slice %161 {offsets = [0, 0], sizes = [2, 32], strides = [1, 1]} : vector<2x96xf32> to vector<2x32xf32>
    %165 = vector.extract_strided_slice %161 {offsets = [0, 32], sizes = [2, 32], strides = [1, 1]} : vector<2x96xf32> to vector<2x32xf32>
    %166 = vector.extract_strided_slice %161 {offsets = [0, 64], sizes = [2, 32], strides = [1, 1]} : vector<2x96xf32> to vector<2x32xf32>
    %167 = arith.mulf %165, %38 : vector<2x32xf32>
    %168 = arith.mulf %164, %163 : vector<2x32xf32>
    %169 = arith.addf %167, %168 : vector<2x32xf32>
    %170 = math.tanh %169 : vector<2x32xf32>
    %171 = arith.mulf %166, %170 : vector<2x32xf32>
    %c0_49 = arith.constant 0 : index
    %c256_50 = arith.constant 256 : index
    %172 = vector.load %arg4[%c0_49, %c256_50] : memref<32x1536xf32, #tpu.memory_space<vmem>>, vector<32x288xf32>
    %cst_51 = arith.constant dense<0.000000e+00> : vector<2x288xf32>
    %173 = tpu.matmul %171, %172, %cst_51 {dimension_numbers = #tpu.dot_dimension_numbers<[1], [0], [0], [1], [0, 0, 1, 1], [], []>} : vector<2x32xf32>, vector<32x288xf32>, vector<2x288xf32> -> vector<2x288xf32>
    %c0_52 = arith.constant 0 : index
    %c128_53 = arith.constant 128 : index
    %174 = vector.load %arg5[%c0_52, %c128_53] : memref<1x1536xf32, #tpu.memory_space<vmem>>, vector<1x288xf32>
    %175 = vector.broadcast %174 : vector<1x288xf32> to vector<2x288xf32>
    %176 = arith.addf %173, %175 : vector<2x288xf32>
    %177 = vector.extract_strided_slice %176 {offsets = [0, 0], sizes = [2, 128], strides = [1, 1]} : vector<2x288xf32> to vector<2x128xf32>
    %178 = vector.extract_strided_slice %176 {offsets = [0, 128], sizes = [2, 32], strides = [1, 1]} : vector<2x288xf32> to vector<2x32xf32>
    %179 = vector.extract_strided_slice %176 {offsets = [0, 160], sizes = [2, 128], strides = [1, 1]} : vector<2x288xf32> to vector<2x128xf32>
    %180 = vector.shape_cast %151 : vector<2x8x32xf32> to vector<16x32xf32>
    %c0_54 = arith.constant 0 : index
    %c768_55 = arith.constant 768 : index
    %181 = vector.load %arg4[%c0_54, %c768_55] : memref<32x1536xf32, #tpu.memory_space<vmem>>, vector<32x64xf32>
    %cst_56 = arith.constant dense<0.000000e+00> : vector<16x64xf32>
    %182 = tpu.matmul %180, %181, %cst_56 {dimension_numbers = #tpu.dot_dimension_numbers<[1], [0], [0], [1], [0, 0, 1, 1], [], []>} : vector<16x32xf32>, vector<32x64xf32>, vector<16x64xf32> -> vector<16x64xf32>
    %183 = vector.extract_strided_slice %182 {offsets = [0, 0], sizes = [16, 32], strides = [1, 1]} : vector<16x64xf32> to vector<16x32xf32>
    %184 = vector.shape_cast %183 : vector<16x32xf32> to vector<2x8x32xf32>
    %185 = vector.extract_strided_slice %182 {offsets = [0, 32], sizes = [16, 32], strides = [1, 1]} : vector<16x64xf32> to vector<16x32xf32>
    %186 = vector.shape_cast %185 : vector<16x32xf32> to vector<2x8x32xf32>
    %187 = vector.shape_cast %178 : vector<2x32xf32> to vector<2x1x32xf32>
    %188 = vector.broadcast %187 : vector<2x1x32xf32> to vector<2x8x32xf32>
    %189 = arith.addf %184, %188 : vector<2x8x32xf32>
    %190 = math.tanh %189 : vector<2x8x32xf32>
    %191 = vector.shape_cast %1 : vector<1x32xf32> to vector<1x1x32xf32>
    %192 = vector.broadcast %191 : vector<1x1x32xf32> to vector<2x8x32xf32>
    %193 = arith.mulf %190, %192 : vector<2x8x32xf32>
    %cst_57 = arith.constant dense<0.000000e+00> : vector<2x8xf32>
    %194 = vector.multi_reduction <add>, %193, %cst_57 [2] : vector<2x8x32xf32> to vector<2x8xf32>
    %195 = vector.shape_cast %194 : vector<2x8xf32> to vector<2x8x1xf32>
    %196 = arith.addf %195, %0 : vector<2x8x1xf32>
    %cst_58 = arith.constant dense<0xFF800000> : vector<2x1xf32>
    %197 = vector.multi_reduction <maximumf>, %196, %cst_58 [1] : vector<2x8x1xf32> to vector<2x1xf32>
    %198 = vector.shape_cast %197 : vector<2x1xf32> to vector<2x1x1xf32>
    %199 = vector.broadcast %198 : vector<2x1x1xf32> to vector<2x8x1xf32>
    %200 = arith.subf %196, %199 : vector<2x8x1xf32>
    %201 = math.exp %200 : vector<2x8x1xf32>
    %cst_59 = arith.constant dense<0.000000e+00> : vector<2x1xf32>
    %202 = vector.multi_reduction <add>, %201, %cst_59 [1] : vector<2x8x1xf32> to vector<2x1xf32>
    %203 = vector.shape_cast %202 : vector<2x1xf32> to vector<2x1x1xf32>
    %204 = tpu.reciprocal %203 : vector<2x1x1xf32> -> vector<2x1x1xf32>
    %205 = vector.broadcast %204 : vector<2x1x1xf32> to vector<2x8x1xf32>
    %206 = arith.mulf %201, %205 : vector<2x8x1xf32>
    %207 = vector.broadcast %206 : vector<2x8x1xf32> to vector<2x8x32xf32>
    %208 = arith.mulf %207, %151 : vector<2x8x32xf32>
    %cst_60 = arith.constant dense<0.000000e+00> : vector<2x32xf32>
    %209 = vector.multi_reduction <add>, %208, %cst_60 [1] : vector<2x8x32xf32> to vector<2x32xf32>
    %210 = arith.addf %177, %110 : vector<2x128xf32>
    %c0_61 = arith.constant 0 : index
    %c640_62 = arith.constant 640 : index
    %211 = vector.load %arg4[%c0_61, %c640_62] : memref<32x1536xf32, #tpu.memory_space<vmem>>, vector<32x128xf32>
    %cst_63 = arith.constant dense<0.000000e+00> : vector<2x128xf32>
    %212 = tpu.matmul %209, %211, %cst_63 {dimension_numbers = #tpu.dot_dimension_numbers<[1], [0], [0], [1], [0, 0, 1, 1], [], []>} : vector<2x32xf32>, vector<32x128xf32>, vector<2x128xf32> -> vector<2x128xf32>
    %213 = arith.addf %210, %212 : vector<2x128xf32>
    %214 = vector.extract_strided_slice %213 {offsets = [0, 0], sizes = [2, 96], strides = [1, 1]} : vector<2x128xf32> to vector<2x96xf32>
    %215 = arith.negf %214 : vector<2x96xf32>
    %216 = math.exp %215 : vector<2x96xf32>
    %cst_64 = arith.constant 1.000000e+00 : f32
    %217 = vector.broadcast %cst_64 : f32 to vector<2x96xf32>
    %218 = arith.addf %217, %216 : vector<2x96xf32>
    %219 = arith.divf %217, %218 : vector<2x96xf32>
    %220 = vector.extract_strided_slice %213 {offsets = [0, 96], sizes = [2, 32], strides = [1, 1]} : vector<2x128xf32> to vector<2x32xf32>
    %221 = math.tanh %220 : vector<2x32xf32>
    %222 = vector.extract_strided_slice %219 {offsets = [0, 0], sizes = [2, 32], strides = [1, 1]} : vector<2x96xf32> to vector<2x32xf32>
    %223 = vector.extract_strided_slice %219 {offsets = [0, 32], sizes = [2, 32], strides = [1, 1]} : vector<2x96xf32> to vector<2x32xf32>
    %224 = vector.extract_strided_slice %219 {offsets = [0, 64], sizes = [2, 32], strides = [1, 1]} : vector<2x96xf32> to vector<2x32xf32>
    %225 = arith.mulf %223, %96 : vector<2x32xf32>
    %226 = arith.mulf %222, %221 : vector<2x32xf32>
    %227 = arith.addf %225, %226 : vector<2x32xf32>
    %228 = math.tanh %227 : vector<2x32xf32>
    %229 = arith.mulf %224, %228 : vector<2x32xf32>
    %c0_65 = arith.constant 0 : index
    %c896_66 = arith.constant 896 : index
    %230 = vector.load %arg4[%c0_65, %c896_66] : memref<32x1536xf32, #tpu.memory_space<vmem>>, vector<32x448xf32>
    %cst_67 = arith.constant dense<0.000000e+00> : vector<2x448xf32>
    %231 = tpu.matmul %229, %230, %cst_67 {dimension_numbers = #tpu.dot_dimension_numbers<[1], [0], [0], [1], [0, 0, 1, 1], [], []>} : vector<2x32xf32>, vector<32x448xf32>, vector<2x448xf32> -> vector<2x448xf32>
    %c0_68 = arith.constant 0 : index
    %c512_69 = arith.constant 512 : index
    %232 = vector.load %arg5[%c0_68, %c512_69] : memref<1x1536xf32, #tpu.memory_space<vmem>>, vector<1x448xf32>
    %233 = vector.broadcast %232 : vector<1x448xf32> to vector<2x448xf32>
    %234 = arith.addf %231, %233 : vector<2x448xf32>
    %235 = vector.extract_strided_slice %234 {offsets = [0, 0], sizes = [2, 128], strides = [1, 1]} : vector<2x448xf32> to vector<2x128xf32>
    %236 = vector.extract_strided_slice %234 {offsets = [0, 128], sizes = [2, 32], strides = [1, 1]} : vector<2x448xf32> to vector<2x32xf32>
    %237 = vector.extract_strided_slice %234 {offsets = [0, 160], sizes = [2, 32], strides = [1, 1]} : vector<2x448xf32> to vector<2x32xf32>
    %cst_70 = arith.constant 0.000000e+00 : f32
    %238 = vector.broadcast %cst_70 : f32 to vector<2x32xf32>
    %239 = arith.maximumf %237, %238 : vector<2x32xf32>
    %240 = vector.extract_strided_slice %234 {offsets = [0, 192], sizes = [2, 128], strides = [1, 1]} : vector<2x448xf32> to vector<2x128xf32>
    %241 = vector.extract_strided_slice %234 {offsets = [0, 320], sizes = [2, 128], strides = [1, 1]} : vector<2x448xf32> to vector<2x128xf32>
    %242 = vector.shape_cast %236 : vector<2x32xf32> to vector<2x1x32xf32>
    %243 = vector.broadcast %242 : vector<2x1x32xf32> to vector<2x8x32xf32>
    %244 = arith.addf %186, %243 : vector<2x8x32xf32>
    %cst_71 = arith.constant 0.000000e+00 : f32
    %245 = vector.broadcast %cst_71 : f32 to vector<2x8x32xf32>
    %246 = arith.maximumf %244, %245 : vector<2x8x32xf32>
    %247 = vector.shape_cast %246 : vector<2x8x32xf32> to vector<16x32xf32>
    %c0_72 = arith.constant 0 : index
    %c1408_73 = arith.constant 1408 : index
    %248 = vector.load %arg4[%c0_72, %c1408_73] : memref<32x1536xf32, #tpu.memory_space<vmem>>, vector<32x64xf32>
    %cst_74 = arith.constant dense<0.000000e+00> : vector<16x64xf32>
    %249 = tpu.matmul %247, %248, %cst_74 {dimension_numbers = #tpu.dot_dimension_numbers<[1], [0], [0], [1], [0, 0, 1, 1], [], []>} : vector<16x32xf32>, vector<32x64xf32>, vector<16x64xf32> -> vector<16x64xf32>
    %c0_75 = arith.constant 0 : index
    %c1024_76 = arith.constant 1024 : index
    %250 = vector.load %arg5[%c0_75, %c1024_76] : memref<1x1536xf32, #tpu.memory_space<vmem>>, vector<1x64xf32>
    %251 = vector.broadcast %250 : vector<1x64xf32> to vector<16x64xf32>
    %252 = arith.addf %249, %251 : vector<16x64xf32>
    %253 = vector.shape_cast %252 : vector<16x64xf32> to vector<2x8x64xf32>
    %254 = vector.extract_strided_slice %253 {offsets = [0, 0, 0], sizes = [2, 8, 32], strides = [1, 1, 1]} : vector<2x8x64xf32> to vector<2x8x32xf32>
    %255 = arith.negf %254 : vector<2x8x32xf32>
    %256 = math.exp %255 : vector<2x8x32xf32>
    %cst_77 = arith.constant 1.000000e+00 : f32
    %257 = vector.broadcast %cst_77 : f32 to vector<2x8x32xf32>
    %258 = arith.addf %257, %256 : vector<2x8x32xf32>
    %259 = arith.divf %257, %258 : vector<2x8x32xf32>
    %260 = vector.extract_strided_slice %253 {offsets = [0, 0, 32], sizes = [2, 8, 32], strides = [1, 1, 1]} : vector<2x8x64xf32> to vector<2x8x32xf32>
    %261 = vector.broadcast %2 : vector<1x32xf32> to vector<2x32xf32>
    %262 = arith.mulf %239, %261 : vector<2x32xf32>
    %cst_78 = arith.constant dense<0.000000e+00> : vector<2xf32>
    %263 = vector.multi_reduction <add>, %262, %cst_78 [1] : vector<2x32xf32> to vector<2xf32>
    %264 = vector.shape_cast %263 : vector<2xf32> to vector<2x1xf32>
    %265 = vector.broadcast %3 : vector<1x1xf32> to vector<2x1xf32>
    %266 = arith.addf %264, %265 : vector<2x1xf32>
    %267 = arith.negf %266 : vector<2x1xf32>
    %268 = math.exp %267 : vector<2x1xf32>
    %cst_79 = arith.constant 1.000000e+00 : f32
    %269 = vector.broadcast %cst_79 : f32 to vector<2x1xf32>
    %270 = arith.addf %269, %268 : vector<2x1xf32>
    %271 = arith.divf %269, %270 : vector<2x1xf32>
    %272 = vector.shape_cast %271 : vector<2x1xf32> to vector<2x1x1xf32>
    %273 = vector.broadcast %272 : vector<2x1x1xf32> to vector<2x8x1xf32>
    %274 = arith.mulf %206, %273 : vector<2x8x1xf32>
    %275 = vector.broadcast %274 : vector<2x8x1xf32> to vector<2x8x32xf32>
    %276 = arith.mulf %275, %259 : vector<2x8x32xf32>
    %cst_80 = arith.constant 1.000000e+00 : f32
    %277 = vector.broadcast %cst_80 : f32 to vector<2x8x32xf32>
    %278 = arith.subf %277, %276 : vector<2x8x32xf32>
    %279 = arith.mulf %151, %278 : vector<2x8x32xf32>
    %280 = vector.broadcast %274 : vector<2x8x1xf32> to vector<2x8x32xf32>
    %281 = arith.mulf %280, %260 : vector<2x8x32xf32>
    %282 = arith.addf %279, %281 : vector<2x8x32xf32>
    %283 = vector.extract_strided_slice %17 {offsets = [2, 0, 0], sizes = [1, 2, 128], strides = [1, 1, 1]} : vector<5x2x128xf32> to vector<1x2x128xf32>
    %284 = vector.shape_cast %283 : vector<1x2x128xf32> to vector<2x128xf32>
    %285 = arith.addf %284, %240 : vector<2x128xf32>
    %286 = arith.addf %285, %179 : vector<2x128xf32>
    %287 = vector.extract_strided_slice %286 {offsets = [0, 0], sizes = [2, 96], strides = [1, 1]} : vector<2x128xf32> to vector<2x96xf32>
    %288 = arith.negf %287 : vector<2x96xf32>
    %289 = math.exp %288 : vector<2x96xf32>
    %cst_81 = arith.constant 1.000000e+00 : f32
    %290 = vector.broadcast %cst_81 : f32 to vector<2x96xf32>
    %291 = arith.addf %290, %289 : vector<2x96xf32>
    %292 = arith.divf %290, %291 : vector<2x96xf32>
    %293 = vector.extract_strided_slice %286 {offsets = [0, 96], sizes = [2, 32], strides = [1, 1]} : vector<2x128xf32> to vector<2x32xf32>
    %294 = math.tanh %293 : vector<2x32xf32>
    %295 = vector.extract_strided_slice %292 {offsets = [0, 0], sizes = [2, 32], strides = [1, 1]} : vector<2x96xf32> to vector<2x32xf32>
    %296 = vector.extract_strided_slice %292 {offsets = [0, 32], sizes = [2, 32], strides = [1, 1]} : vector<2x96xf32> to vector<2x32xf32>
    %297 = vector.extract_strided_slice %292 {offsets = [0, 64], sizes = [2, 32], strides = [1, 1]} : vector<2x96xf32> to vector<2x32xf32>
    %298 = arith.mulf %296, %169 : vector<2x32xf32>
    %299 = arith.mulf %295, %294 : vector<2x32xf32>
    %300 = arith.addf %298, %299 : vector<2x32xf32>
    %301 = math.tanh %300 : vector<2x32xf32>
    %302 = arith.mulf %297, %301 : vector<2x32xf32>
    %c0_82 = arith.constant 0 : index
    %c256_83 = arith.constant 256 : index
    %303 = vector.load %arg4[%c0_82, %c256_83] : memref<32x1536xf32, #tpu.memory_space<vmem>>, vector<32x288xf32>
    %cst_84 = arith.constant dense<0.000000e+00> : vector<2x288xf32>
    %304 = tpu.matmul %302, %303, %cst_84 {dimension_numbers = #tpu.dot_dimension_numbers<[1], [0], [0], [1], [0, 0, 1, 1], [], []>} : vector<2x32xf32>, vector<32x288xf32>, vector<2x288xf32> -> vector<2x288xf32>
    %c0_85 = arith.constant 0 : index
    %c128_86 = arith.constant 128 : index
    %305 = vector.load %arg5[%c0_85, %c128_86] : memref<1x1536xf32, #tpu.memory_space<vmem>>, vector<1x288xf32>
    %306 = vector.broadcast %305 : vector<1x288xf32> to vector<2x288xf32>
    %307 = arith.addf %304, %306 : vector<2x288xf32>
    %308 = vector.extract_strided_slice %307 {offsets = [0, 0], sizes = [2, 128], strides = [1, 1]} : vector<2x288xf32> to vector<2x128xf32>
    %309 = vector.extract_strided_slice %307 {offsets = [0, 128], sizes = [2, 32], strides = [1, 1]} : vector<2x288xf32> to vector<2x32xf32>
    %310 = vector.extract_strided_slice %307 {offsets = [0, 160], sizes = [2, 128], strides = [1, 1]} : vector<2x288xf32> to vector<2x128xf32>
    %311 = vector.shape_cast %282 : vector<2x8x32xf32> to vector<16x32xf32>
    %c0_87 = arith.constant 0 : index
    %c768_88 = arith.constant 768 : index
    %312 = vector.load %arg4[%c0_87, %c768_88] : memref<32x1536xf32, #tpu.memory_space<vmem>>, vector<32x64xf32>
    %cst_89 = arith.constant dense<0.000000e+00> : vector<16x64xf32>
    %313 = tpu.matmul %311, %312, %cst_89 {dimension_numbers = #tpu.dot_dimension_numbers<[1], [0], [0], [1], [0, 0, 1, 1], [], []>} : vector<16x32xf32>, vector<32x64xf32>, vector<16x64xf32> -> vector<16x64xf32>
    %314 = vector.extract_strided_slice %313 {offsets = [0, 0], sizes = [16, 32], strides = [1, 1]} : vector<16x64xf32> to vector<16x32xf32>
    %315 = vector.shape_cast %314 : vector<16x32xf32> to vector<2x8x32xf32>
    %316 = vector.extract_strided_slice %313 {offsets = [0, 32], sizes = [16, 32], strides = [1, 1]} : vector<16x64xf32> to vector<16x32xf32>
    %317 = vector.shape_cast %316 : vector<16x32xf32> to vector<2x8x32xf32>
    %318 = vector.shape_cast %309 : vector<2x32xf32> to vector<2x1x32xf32>
    %319 = vector.broadcast %318 : vector<2x1x32xf32> to vector<2x8x32xf32>
    %320 = arith.addf %315, %319 : vector<2x8x32xf32>
    %321 = math.tanh %320 : vector<2x8x32xf32>
    %322 = vector.shape_cast %1 : vector<1x32xf32> to vector<1x1x32xf32>
    %323 = vector.broadcast %322 : vector<1x1x32xf32> to vector<2x8x32xf32>
    %324 = arith.mulf %321, %323 : vector<2x8x32xf32>
    %cst_90 = arith.constant dense<0.000000e+00> : vector<2x8xf32>
    %325 = vector.multi_reduction <add>, %324, %cst_90 [2] : vector<2x8x32xf32> to vector<2x8xf32>
    %326 = vector.shape_cast %325 : vector<2x8xf32> to vector<2x8x1xf32>
    %327 = arith.addf %326, %0 : vector<2x8x1xf32>
    %cst_91 = arith.constant dense<0xFF800000> : vector<2x1xf32>
    %328 = vector.multi_reduction <maximumf>, %327, %cst_91 [1] : vector<2x8x1xf32> to vector<2x1xf32>
    %329 = vector.shape_cast %328 : vector<2x1xf32> to vector<2x1x1xf32>
    %330 = vector.broadcast %329 : vector<2x1x1xf32> to vector<2x8x1xf32>
    %331 = arith.subf %327, %330 : vector<2x8x1xf32>
    %332 = math.exp %331 : vector<2x8x1xf32>
    %cst_92 = arith.constant dense<0.000000e+00> : vector<2x1xf32>
    %333 = vector.multi_reduction <add>, %332, %cst_92 [1] : vector<2x8x1xf32> to vector<2x1xf32>
    %334 = vector.shape_cast %333 : vector<2x1xf32> to vector<2x1x1xf32>
    %335 = tpu.reciprocal %334 : vector<2x1x1xf32> -> vector<2x1x1xf32>
    %336 = vector.broadcast %335 : vector<2x1x1xf32> to vector<2x8x1xf32>
    %337 = arith.mulf %332, %336 : vector<2x8x1xf32>
    %338 = vector.broadcast %337 : vector<2x8x1xf32> to vector<2x8x32xf32>
    %339 = arith.mulf %338, %282 : vector<2x8x32xf32>
    %cst_93 = arith.constant dense<0.000000e+00> : vector<2x32xf32>
    %340 = vector.multi_reduction <add>, %339, %cst_93 [1] : vector<2x8x32xf32> to vector<2x32xf32>
    %341 = arith.addf %308, %241 : vector<2x128xf32>
    %c0_94 = arith.constant 0 : index
    %c640_95 = arith.constant 640 : index
    %342 = vector.load %arg4[%c0_94, %c640_95] : memref<32x1536xf32, #tpu.memory_space<vmem>>, vector<32x128xf32>
    %cst_96 = arith.constant dense<0.000000e+00> : vector<2x128xf32>
    %343 = tpu.matmul %340, %342, %cst_96 {dimension_numbers = #tpu.dot_dimension_numbers<[1], [0], [0], [1], [0, 0, 1, 1], [], []>} : vector<2x32xf32>, vector<32x128xf32>, vector<2x128xf32> -> vector<2x128xf32>
    %344 = arith.addf %341, %343 : vector<2x128xf32>
    %345 = vector.extract_strided_slice %344 {offsets = [0, 0], sizes = [2, 96], strides = [1, 1]} : vector<2x128xf32> to vector<2x96xf32>
    %346 = arith.negf %345 : vector<2x96xf32>
    %347 = math.exp %346 : vector<2x96xf32>
    %cst_97 = arith.constant 1.000000e+00 : f32
    %348 = vector.broadcast %cst_97 : f32 to vector<2x96xf32>
    %349 = arith.addf %348, %347 : vector<2x96xf32>
    %350 = arith.divf %348, %349 : vector<2x96xf32>
    %351 = vector.extract_strided_slice %344 {offsets = [0, 96], sizes = [2, 32], strides = [1, 1]} : vector<2x128xf32> to vector<2x32xf32>
    %352 = math.tanh %351 : vector<2x32xf32>
    %353 = vector.extract_strided_slice %350 {offsets = [0, 0], sizes = [2, 32], strides = [1, 1]} : vector<2x96xf32> to vector<2x32xf32>
    %354 = vector.extract_strided_slice %350 {offsets = [0, 32], sizes = [2, 32], strides = [1, 1]} : vector<2x96xf32> to vector<2x32xf32>
    %355 = vector.extract_strided_slice %350 {offsets = [0, 64], sizes = [2, 32], strides = [1, 1]} : vector<2x96xf32> to vector<2x32xf32>
    %356 = arith.mulf %354, %227 : vector<2x32xf32>
    %357 = arith.mulf %353, %352 : vector<2x32xf32>
    %358 = arith.addf %356, %357 : vector<2x32xf32>
    %359 = math.tanh %358 : vector<2x32xf32>
    %360 = arith.mulf %355, %359 : vector<2x32xf32>
    %c0_98 = arith.constant 0 : index
    %c896_99 = arith.constant 896 : index
    %361 = vector.load %arg4[%c0_98, %c896_99] : memref<32x1536xf32, #tpu.memory_space<vmem>>, vector<32x448xf32>
    %cst_100 = arith.constant dense<0.000000e+00> : vector<2x448xf32>
    %362 = tpu.matmul %360, %361, %cst_100 {dimension_numbers = #tpu.dot_dimension_numbers<[1], [0], [0], [1], [0, 0, 1, 1], [], []>} : vector<2x32xf32>, vector<32x448xf32>, vector<2x448xf32> -> vector<2x448xf32>
    %c0_101 = arith.constant 0 : index
    %c512_102 = arith.constant 512 : index
    %363 = vector.load %arg5[%c0_101, %c512_102] : memref<1x1536xf32, #tpu.memory_space<vmem>>, vector<1x448xf32>
    %364 = vector.broadcast %363 : vector<1x448xf32> to vector<2x448xf32>
    %365 = arith.addf %362, %364 : vector<2x448xf32>
    %366 = vector.extract_strided_slice %365 {offsets = [0, 0], sizes = [2, 128], strides = [1, 1]} : vector<2x448xf32> to vector<2x128xf32>
    %367 = vector.extract_strided_slice %365 {offsets = [0, 128], sizes = [2, 32], strides = [1, 1]} : vector<2x448xf32> to vector<2x32xf32>
    %368 = vector.extract_strided_slice %365 {offsets = [0, 160], sizes = [2, 32], strides = [1, 1]} : vector<2x448xf32> to vector<2x32xf32>
    %cst_103 = arith.constant 0.000000e+00 : f32
    %369 = vector.broadcast %cst_103 : f32 to vector<2x32xf32>
    %370 = arith.maximumf %368, %369 : vector<2x32xf32>
    %371 = vector.extract_strided_slice %365 {offsets = [0, 192], sizes = [2, 128], strides = [1, 1]} : vector<2x448xf32> to vector<2x128xf32>
    %372 = vector.extract_strided_slice %365 {offsets = [0, 320], sizes = [2, 128], strides = [1, 1]} : vector<2x448xf32> to vector<2x128xf32>
    %373 = vector.shape_cast %367 : vector<2x32xf32> to vector<2x1x32xf32>
    %374 = vector.broadcast %373 : vector<2x1x32xf32> to vector<2x8x32xf32>
    %375 = arith.addf %317, %374 : vector<2x8x32xf32>
    %cst_104 = arith.constant 0.000000e+00 : f32
    %376 = vector.broadcast %cst_104 : f32 to vector<2x8x32xf32>
    %377 = arith.maximumf %375, %376 : vector<2x8x32xf32>
    %378 = vector.shape_cast %377 : vector<2x8x32xf32> to vector<16x32xf32>
    %c0_105 = arith.constant 0 : index
    %c1408_106 = arith.constant 1408 : index
    %379 = vector.load %arg4[%c0_105, %c1408_106] : memref<32x1536xf32, #tpu.memory_space<vmem>>, vector<32x64xf32>
    %cst_107 = arith.constant dense<0.000000e+00> : vector<16x64xf32>
    %380 = tpu.matmul %378, %379, %cst_107 {dimension_numbers = #tpu.dot_dimension_numbers<[1], [0], [0], [1], [0, 0, 1, 1], [], []>} : vector<16x32xf32>, vector<32x64xf32>, vector<16x64xf32> -> vector<16x64xf32>
    %c0_108 = arith.constant 0 : index
    %c1024_109 = arith.constant 1024 : index
    %381 = vector.load %arg5[%c0_108, %c1024_109] : memref<1x1536xf32, #tpu.memory_space<vmem>>, vector<1x64xf32>
    %382 = vector.broadcast %381 : vector<1x64xf32> to vector<16x64xf32>
    %383 = arith.addf %380, %382 : vector<16x64xf32>
    %384 = vector.shape_cast %383 : vector<16x64xf32> to vector<2x8x64xf32>
    %385 = vector.extract_strided_slice %384 {offsets = [0, 0, 0], sizes = [2, 8, 32], strides = [1, 1, 1]} : vector<2x8x64xf32> to vector<2x8x32xf32>
    %386 = arith.negf %385 : vector<2x8x32xf32>
    %387 = math.exp %386 : vector<2x8x32xf32>
    %cst_110 = arith.constant 1.000000e+00 : f32
    %388 = vector.broadcast %cst_110 : f32 to vector<2x8x32xf32>
    %389 = arith.addf %388, %387 : vector<2x8x32xf32>
    %390 = arith.divf %388, %389 : vector<2x8x32xf32>
    %391 = vector.extract_strided_slice %384 {offsets = [0, 0, 32], sizes = [2, 8, 32], strides = [1, 1, 1]} : vector<2x8x64xf32> to vector<2x8x32xf32>
    %392 = vector.broadcast %2 : vector<1x32xf32> to vector<2x32xf32>
    %393 = arith.mulf %370, %392 : vector<2x32xf32>
    %cst_111 = arith.constant dense<0.000000e+00> : vector<2xf32>
    %394 = vector.multi_reduction <add>, %393, %cst_111 [1] : vector<2x32xf32> to vector<2xf32>
    %395 = vector.shape_cast %394 : vector<2xf32> to vector<2x1xf32>
    %396 = vector.broadcast %3 : vector<1x1xf32> to vector<2x1xf32>
    %397 = arith.addf %395, %396 : vector<2x1xf32>
    %398 = arith.negf %397 : vector<2x1xf32>
    %399 = math.exp %398 : vector<2x1xf32>
    %cst_112 = arith.constant 1.000000e+00 : f32
    %400 = vector.broadcast %cst_112 : f32 to vector<2x1xf32>
    %401 = arith.addf %400, %399 : vector<2x1xf32>
    %402 = arith.divf %400, %401 : vector<2x1xf32>
    %403 = vector.shape_cast %402 : vector<2x1xf32> to vector<2x1x1xf32>
    %404 = vector.broadcast %403 : vector<2x1x1xf32> to vector<2x8x1xf32>
    %405 = arith.mulf %337, %404 : vector<2x8x1xf32>
    %406 = vector.broadcast %405 : vector<2x8x1xf32> to vector<2x8x32xf32>
    %407 = arith.mulf %406, %390 : vector<2x8x32xf32>
    %cst_113 = arith.constant 1.000000e+00 : f32
    %408 = vector.broadcast %cst_113 : f32 to vector<2x8x32xf32>
    %409 = arith.subf %408, %407 : vector<2x8x32xf32>
    %410 = arith.mulf %282, %409 : vector<2x8x32xf32>
    %411 = vector.broadcast %405 : vector<2x8x1xf32> to vector<2x8x32xf32>
    %412 = arith.mulf %411, %391 : vector<2x8x32xf32>
    %413 = arith.addf %410, %412 : vector<2x8x32xf32>
    %414 = vector.extract_strided_slice %17 {offsets = [3, 0, 0], sizes = [1, 2, 128], strides = [1, 1, 1]} : vector<5x2x128xf32> to vector<1x2x128xf32>
    %415 = vector.shape_cast %414 : vector<1x2x128xf32> to vector<2x128xf32>
    %416 = arith.addf %415, %371 : vector<2x128xf32>
    %417 = arith.addf %416, %310 : vector<2x128xf32>
    %418 = vector.extract_strided_slice %417 {offsets = [0, 0], sizes = [2, 96], strides = [1, 1]} : vector<2x128xf32> to vector<2x96xf32>
    %419 = arith.negf %418 : vector<2x96xf32>
    %420 = math.exp %419 : vector<2x96xf32>
    %cst_114 = arith.constant 1.000000e+00 : f32
    %421 = vector.broadcast %cst_114 : f32 to vector<2x96xf32>
    %422 = arith.addf %421, %420 : vector<2x96xf32>
    %423 = arith.divf %421, %422 : vector<2x96xf32>
    %424 = vector.extract_strided_slice %417 {offsets = [0, 96], sizes = [2, 32], strides = [1, 1]} : vector<2x128xf32> to vector<2x32xf32>
    %425 = math.tanh %424 : vector<2x32xf32>
    %426 = vector.extract_strided_slice %423 {offsets = [0, 0], sizes = [2, 32], strides = [1, 1]} : vector<2x96xf32> to vector<2x32xf32>
    %427 = vector.extract_strided_slice %423 {offsets = [0, 32], sizes = [2, 32], strides = [1, 1]} : vector<2x96xf32> to vector<2x32xf32>
    %428 = vector.extract_strided_slice %423 {offsets = [0, 64], sizes = [2, 32], strides = [1, 1]} : vector<2x96xf32> to vector<2x32xf32>
    %429 = arith.mulf %427, %300 : vector<2x32xf32>
    %430 = arith.mulf %426, %425 : vector<2x32xf32>
    %431 = arith.addf %429, %430 : vector<2x32xf32>
    %432 = math.tanh %431 : vector<2x32xf32>
    %433 = arith.mulf %428, %432 : vector<2x32xf32>
    %c0_115 = arith.constant 0 : index
    %c256_116 = arith.constant 256 : index
    %434 = vector.load %arg4[%c0_115, %c256_116] : memref<32x1536xf32, #tpu.memory_space<vmem>>, vector<32x288xf32>
    %cst_117 = arith.constant dense<0.000000e+00> : vector<2x288xf32>
    %435 = tpu.matmul %433, %434, %cst_117 {dimension_numbers = #tpu.dot_dimension_numbers<[1], [0], [0], [1], [0, 0, 1, 1], [], []>} : vector<2x32xf32>, vector<32x288xf32>, vector<2x288xf32> -> vector<2x288xf32>
    %c0_118 = arith.constant 0 : index
    %c128_119 = arith.constant 128 : index
    %436 = vector.load %arg5[%c0_118, %c128_119] : memref<1x1536xf32, #tpu.memory_space<vmem>>, vector<1x288xf32>
    %437 = vector.broadcast %436 : vector<1x288xf32> to vector<2x288xf32>
    %438 = arith.addf %435, %437 : vector<2x288xf32>
    %439 = vector.extract_strided_slice %438 {offsets = [0, 0], sizes = [2, 128], strides = [1, 1]} : vector<2x288xf32> to vector<2x128xf32>
    %440 = vector.extract_strided_slice %438 {offsets = [0, 128], sizes = [2, 32], strides = [1, 1]} : vector<2x288xf32> to vector<2x32xf32>
    %441 = vector.extract_strided_slice %438 {offsets = [0, 160], sizes = [2, 128], strides = [1, 1]} : vector<2x288xf32> to vector<2x128xf32>
    %442 = vector.shape_cast %413 : vector<2x8x32xf32> to vector<16x32xf32>
    %c0_120 = arith.constant 0 : index
    %c768_121 = arith.constant 768 : index
    %443 = vector.load %arg4[%c0_120, %c768_121] : memref<32x1536xf32, #tpu.memory_space<vmem>>, vector<32x64xf32>
    %cst_122 = arith.constant dense<0.000000e+00> : vector<16x64xf32>
    %444 = tpu.matmul %442, %443, %cst_122 {dimension_numbers = #tpu.dot_dimension_numbers<[1], [0], [0], [1], [0, 0, 1, 1], [], []>} : vector<16x32xf32>, vector<32x64xf32>, vector<16x64xf32> -> vector<16x64xf32>
    %445 = vector.extract_strided_slice %444 {offsets = [0, 0], sizes = [16, 32], strides = [1, 1]} : vector<16x64xf32> to vector<16x32xf32>
    %446 = vector.shape_cast %445 : vector<16x32xf32> to vector<2x8x32xf32>
    %447 = vector.extract_strided_slice %444 {offsets = [0, 32], sizes = [16, 32], strides = [1, 1]} : vector<16x64xf32> to vector<16x32xf32>
    %448 = vector.shape_cast %447 : vector<16x32xf32> to vector<2x8x32xf32>
    %449 = vector.shape_cast %440 : vector<2x32xf32> to vector<2x1x32xf32>
    %450 = vector.broadcast %449 : vector<2x1x32xf32> to vector<2x8x32xf32>
    %451 = arith.addf %446, %450 : vector<2x8x32xf32>
    %452 = math.tanh %451 : vector<2x8x32xf32>
    %453 = vector.shape_cast %1 : vector<1x32xf32> to vector<1x1x32xf32>
    %454 = vector.broadcast %453 : vector<1x1x32xf32> to vector<2x8x32xf32>
    %455 = arith.mulf %452, %454 : vector<2x8x32xf32>
    %cst_123 = arith.constant dense<0.000000e+00> : vector<2x8xf32>
    %456 = vector.multi_reduction <add>, %455, %cst_123 [2] : vector<2x8x32xf32> to vector<2x8xf32>
    %457 = vector.shape_cast %456 : vector<2x8xf32> to vector<2x8x1xf32>
    %458 = arith.addf %457, %0 : vector<2x8x1xf32>
    %cst_124 = arith.constant dense<0xFF800000> : vector<2x1xf32>
    %459 = vector.multi_reduction <maximumf>, %458, %cst_124 [1] : vector<2x8x1xf32> to vector<2x1xf32>
    %460 = vector.shape_cast %459 : vector<2x1xf32> to vector<2x1x1xf32>
    %461 = vector.broadcast %460 : vector<2x1x1xf32> to vector<2x8x1xf32>
    %462 = arith.subf %458, %461 : vector<2x8x1xf32>
    %463 = math.exp %462 : vector<2x8x1xf32>
    %cst_125 = arith.constant dense<0.000000e+00> : vector<2x1xf32>
    %464 = vector.multi_reduction <add>, %463, %cst_125 [1] : vector<2x8x1xf32> to vector<2x1xf32>
    %465 = vector.shape_cast %464 : vector<2x1xf32> to vector<2x1x1xf32>
    %466 = tpu.reciprocal %465 : vector<2x1x1xf32> -> vector<2x1x1xf32>
    %467 = vector.broadcast %466 : vector<2x1x1xf32> to vector<2x8x1xf32>
    %468 = arith.mulf %463, %467 : vector<2x8x1xf32>
    %469 = vector.broadcast %468 : vector<2x8x1xf32> to vector<2x8x32xf32>
    %470 = arith.mulf %469, %413 : vector<2x8x32xf32>
    %cst_126 = arith.constant dense<0.000000e+00> : vector<2x32xf32>
    %471 = vector.multi_reduction <add>, %470, %cst_126 [1] : vector<2x8x32xf32> to vector<2x32xf32>
    %472 = arith.addf %439, %372 : vector<2x128xf32>
    %c0_127 = arith.constant 0 : index
    %c640_128 = arith.constant 640 : index
    %473 = vector.load %arg4[%c0_127, %c640_128] : memref<32x1536xf32, #tpu.memory_space<vmem>>, vector<32x128xf32>
    %cst_129 = arith.constant dense<0.000000e+00> : vector<2x128xf32>
    %474 = tpu.matmul %471, %473, %cst_129 {dimension_numbers = #tpu.dot_dimension_numbers<[1], [0], [0], [1], [0, 0, 1, 1], [], []>} : vector<2x32xf32>, vector<32x128xf32>, vector<2x128xf32> -> vector<2x128xf32>
    %475 = arith.addf %472, %474 : vector<2x128xf32>
    %476 = vector.extract_strided_slice %475 {offsets = [0, 0], sizes = [2, 96], strides = [1, 1]} : vector<2x128xf32> to vector<2x96xf32>
    %477 = arith.negf %476 : vector<2x96xf32>
    %478 = math.exp %477 : vector<2x96xf32>
    %cst_130 = arith.constant 1.000000e+00 : f32
    %479 = vector.broadcast %cst_130 : f32 to vector<2x96xf32>
    %480 = arith.addf %479, %478 : vector<2x96xf32>
    %481 = arith.divf %479, %480 : vector<2x96xf32>
    %482 = vector.extract_strided_slice %475 {offsets = [0, 96], sizes = [2, 32], strides = [1, 1]} : vector<2x128xf32> to vector<2x32xf32>
    %483 = math.tanh %482 : vector<2x32xf32>
    %484 = vector.extract_strided_slice %481 {offsets = [0, 0], sizes = [2, 32], strides = [1, 1]} : vector<2x96xf32> to vector<2x32xf32>
    %485 = vector.extract_strided_slice %481 {offsets = [0, 32], sizes = [2, 32], strides = [1, 1]} : vector<2x96xf32> to vector<2x32xf32>
    %486 = vector.extract_strided_slice %481 {offsets = [0, 64], sizes = [2, 32], strides = [1, 1]} : vector<2x96xf32> to vector<2x32xf32>
    %487 = arith.mulf %485, %358 : vector<2x32xf32>
    %488 = arith.mulf %484, %483 : vector<2x32xf32>
    %489 = arith.addf %487, %488 : vector<2x32xf32>
    %490 = math.tanh %489 : vector<2x32xf32>
    %491 = arith.mulf %486, %490 : vector<2x32xf32>
    %c0_131 = arith.constant 0 : index
    %c896_132 = arith.constant 896 : index
    %492 = vector.load %arg4[%c0_131, %c896_132] : memref<32x1536xf32, #tpu.memory_space<vmem>>, vector<32x448xf32>
    %cst_133 = arith.constant dense<0.000000e+00> : vector<2x448xf32>
    %493 = tpu.matmul %491, %492, %cst_133 {dimension_numbers = #tpu.dot_dimension_numbers<[1], [0], [0], [1], [0, 0, 1, 1], [], []>} : vector<2x32xf32>, vector<32x448xf32>, vector<2x448xf32> -> vector<2x448xf32>
    %c0_134 = arith.constant 0 : index
    %c512_135 = arith.constant 512 : index
    %494 = vector.load %arg5[%c0_134, %c512_135] : memref<1x1536xf32, #tpu.memory_space<vmem>>, vector<1x448xf32>
    %495 = vector.broadcast %494 : vector<1x448xf32> to vector<2x448xf32>
    %496 = arith.addf %493, %495 : vector<2x448xf32>
    %497 = vector.extract_strided_slice %496 {offsets = [0, 0], sizes = [2, 128], strides = [1, 1]} : vector<2x448xf32> to vector<2x128xf32>
    %498 = vector.extract_strided_slice %496 {offsets = [0, 128], sizes = [2, 32], strides = [1, 1]} : vector<2x448xf32> to vector<2x32xf32>
    %499 = vector.extract_strided_slice %496 {offsets = [0, 160], sizes = [2, 32], strides = [1, 1]} : vector<2x448xf32> to vector<2x32xf32>
    %cst_136 = arith.constant 0.000000e+00 : f32
    %500 = vector.broadcast %cst_136 : f32 to vector<2x32xf32>
    %501 = arith.maximumf %499, %500 : vector<2x32xf32>
    %502 = vector.extract_strided_slice %496 {offsets = [0, 192], sizes = [2, 128], strides = [1, 1]} : vector<2x448xf32> to vector<2x128xf32>
    %503 = vector.extract_strided_slice %496 {offsets = [0, 320], sizes = [2, 128], strides = [1, 1]} : vector<2x448xf32> to vector<2x128xf32>
    %504 = vector.shape_cast %498 : vector<2x32xf32> to vector<2x1x32xf32>
    %505 = vector.broadcast %504 : vector<2x1x32xf32> to vector<2x8x32xf32>
    %506 = arith.addf %448, %505 : vector<2x8x32xf32>
    %cst_137 = arith.constant 0.000000e+00 : f32
    %507 = vector.broadcast %cst_137 : f32 to vector<2x8x32xf32>
    %508 = arith.maximumf %506, %507 : vector<2x8x32xf32>
    %509 = vector.shape_cast %508 : vector<2x8x32xf32> to vector<16x32xf32>
    %c0_138 = arith.constant 0 : index
    %c1408_139 = arith.constant 1408 : index
    %510 = vector.load %arg4[%c0_138, %c1408_139] : memref<32x1536xf32, #tpu.memory_space<vmem>>, vector<32x64xf32>
    %cst_140 = arith.constant dense<0.000000e+00> : vector<16x64xf32>
    %511 = tpu.matmul %509, %510, %cst_140 {dimension_numbers = #tpu.dot_dimension_numbers<[1], [0], [0], [1], [0, 0, 1, 1], [], []>} : vector<16x32xf32>, vector<32x64xf32>, vector<16x64xf32> -> vector<16x64xf32>
    %c0_141 = arith.constant 0 : index
    %c1024_142 = arith.constant 1024 : index
    %512 = vector.load %arg5[%c0_141, %c1024_142] : memref<1x1536xf32, #tpu.memory_space<vmem>>, vector<1x64xf32>
    %513 = vector.broadcast %512 : vector<1x64xf32> to vector<16x64xf32>
    %514 = arith.addf %511, %513 : vector<16x64xf32>
    %515 = vector.shape_cast %514 : vector<16x64xf32> to vector<2x8x64xf32>
    %516 = vector.extract_strided_slice %515 {offsets = [0, 0, 0], sizes = [2, 8, 32], strides = [1, 1, 1]} : vector<2x8x64xf32> to vector<2x8x32xf32>
    %517 = arith.negf %516 : vector<2x8x32xf32>
    %518 = math.exp %517 : vector<2x8x32xf32>
    %cst_143 = arith.constant 1.000000e+00 : f32
    %519 = vector.broadcast %cst_143 : f32 to vector<2x8x32xf32>
    %520 = arith.addf %519, %518 : vector<2x8x32xf32>
    %521 = arith.divf %519, %520 : vector<2x8x32xf32>
    %522 = vector.extract_strided_slice %515 {offsets = [0, 0, 32], sizes = [2, 8, 32], strides = [1, 1, 1]} : vector<2x8x64xf32> to vector<2x8x32xf32>
    %523 = vector.broadcast %2 : vector<1x32xf32> to vector<2x32xf32>
    %524 = arith.mulf %501, %523 : vector<2x32xf32>
    %cst_144 = arith.constant dense<0.000000e+00> : vector<2xf32>
    %525 = vector.multi_reduction <add>, %524, %cst_144 [1] : vector<2x32xf32> to vector<2xf32>
    %526 = vector.shape_cast %525 : vector<2xf32> to vector<2x1xf32>
    %527 = vector.broadcast %3 : vector<1x1xf32> to vector<2x1xf32>
    %528 = arith.addf %526, %527 : vector<2x1xf32>
    %529 = arith.negf %528 : vector<2x1xf32>
    %530 = math.exp %529 : vector<2x1xf32>
    %cst_145 = arith.constant 1.000000e+00 : f32
    %531 = vector.broadcast %cst_145 : f32 to vector<2x1xf32>
    %532 = arith.addf %531, %530 : vector<2x1xf32>
    %533 = arith.divf %531, %532 : vector<2x1xf32>
    %534 = vector.shape_cast %533 : vector<2x1xf32> to vector<2x1x1xf32>
    %535 = vector.broadcast %534 : vector<2x1x1xf32> to vector<2x8x1xf32>
    %536 = arith.mulf %468, %535 : vector<2x8x1xf32>
    %537 = vector.broadcast %536 : vector<2x8x1xf32> to vector<2x8x32xf32>
    %538 = arith.mulf %537, %521 : vector<2x8x32xf32>
    %cst_146 = arith.constant 1.000000e+00 : f32
    %539 = vector.broadcast %cst_146 : f32 to vector<2x8x32xf32>
    %540 = arith.subf %539, %538 : vector<2x8x32xf32>
    %541 = arith.mulf %413, %540 : vector<2x8x32xf32>
    %542 = vector.broadcast %536 : vector<2x8x1xf32> to vector<2x8x32xf32>
    %543 = arith.mulf %542, %522 : vector<2x8x32xf32>
    %544 = arith.addf %541, %543 : vector<2x8x32xf32>
    %545 = vector.extract_strided_slice %17 {offsets = [4, 0, 0], sizes = [1, 2, 128], strides = [1, 1, 1]} : vector<5x2x128xf32> to vector<1x2x128xf32>
    %546 = vector.shape_cast %545 : vector<1x2x128xf32> to vector<2x128xf32>
    %547 = arith.addf %546, %502 : vector<2x128xf32>
    %548 = arith.addf %547, %441 : vector<2x128xf32>
    %549 = vector.extract_strided_slice %548 {offsets = [0, 0], sizes = [2, 96], strides = [1, 1]} : vector<2x128xf32> to vector<2x96xf32>
    %550 = arith.negf %549 : vector<2x96xf32>
    %551 = math.exp %550 : vector<2x96xf32>
    %cst_147 = arith.constant 1.000000e+00 : f32
    %552 = vector.broadcast %cst_147 : f32 to vector<2x96xf32>
    %553 = arith.addf %552, %551 : vector<2x96xf32>
    %554 = arith.divf %552, %553 : vector<2x96xf32>
    %555 = vector.extract_strided_slice %548 {offsets = [0, 96], sizes = [2, 32], strides = [1, 1]} : vector<2x128xf32> to vector<2x32xf32>
    %556 = math.tanh %555 : vector<2x32xf32>
    %557 = vector.extract_strided_slice %554 {offsets = [0, 0], sizes = [2, 32], strides = [1, 1]} : vector<2x96xf32> to vector<2x32xf32>
    %558 = vector.extract_strided_slice %554 {offsets = [0, 32], sizes = [2, 32], strides = [1, 1]} : vector<2x96xf32> to vector<2x32xf32>
    %559 = vector.extract_strided_slice %554 {offsets = [0, 64], sizes = [2, 32], strides = [1, 1]} : vector<2x96xf32> to vector<2x32xf32>
    %560 = arith.mulf %558, %431 : vector<2x32xf32>
    %561 = arith.mulf %557, %556 : vector<2x32xf32>
    %562 = arith.addf %560, %561 : vector<2x32xf32>
    %563 = math.tanh %562 : vector<2x32xf32>
    %564 = arith.mulf %559, %563 : vector<2x32xf32>
    %c0_148 = arith.constant 0 : index
    %c256_149 = arith.constant 256 : index
    %565 = vector.load %arg4[%c0_148, %c256_149] : memref<32x1536xf32, #tpu.memory_space<vmem>>, vector<32x288xf32>
    %cst_150 = arith.constant dense<0.000000e+00> : vector<2x288xf32>
    %566 = tpu.matmul %564, %565, %cst_150 {dimension_numbers = #tpu.dot_dimension_numbers<[1], [0], [0], [1], [0, 0, 1, 1], [], []>} : vector<2x32xf32>, vector<32x288xf32>, vector<2x288xf32> -> vector<2x288xf32>
    %c0_151 = arith.constant 0 : index
    %c128_152 = arith.constant 128 : index
    %567 = vector.load %arg5[%c0_151, %c128_152] : memref<1x1536xf32, #tpu.memory_space<vmem>>, vector<1x288xf32>
    %568 = vector.broadcast %567 : vector<1x288xf32> to vector<2x288xf32>
    %569 = arith.addf %566, %568 : vector<2x288xf32>
    %570 = vector.extract_strided_slice %569 {offsets = [0, 0], sizes = [2, 128], strides = [1, 1]} : vector<2x288xf32> to vector<2x128xf32>
    %571 = vector.extract_strided_slice %569 {offsets = [0, 128], sizes = [2, 32], strides = [1, 1]} : vector<2x288xf32> to vector<2x32xf32>
    %572 = vector.shape_cast %544 : vector<2x8x32xf32> to vector<16x32xf32>
    %c0_153 = arith.constant 0 : index
    %c768_154 = arith.constant 768 : index
    %573 = vector.load %arg4[%c0_153, %c768_154] : memref<32x1536xf32, #tpu.memory_space<vmem>>, vector<32x64xf32>
    %cst_155 = arith.constant dense<0.000000e+00> : vector<16x64xf32>
    %574 = tpu.matmul %572, %573, %cst_155 {dimension_numbers = #tpu.dot_dimension_numbers<[1], [0], [0], [1], [0, 0, 1, 1], [], []>} : vector<16x32xf32>, vector<32x64xf32>, vector<16x64xf32> -> vector<16x64xf32>
    %575 = vector.extract_strided_slice %574 {offsets = [0, 0], sizes = [16, 32], strides = [1, 1]} : vector<16x64xf32> to vector<16x32xf32>
    %576 = vector.shape_cast %575 : vector<16x32xf32> to vector<2x8x32xf32>
    %577 = vector.shape_cast %571 : vector<2x32xf32> to vector<2x1x32xf32>
    %578 = vector.broadcast %577 : vector<2x1x32xf32> to vector<2x8x32xf32>
    %579 = arith.addf %576, %578 : vector<2x8x32xf32>
    %580 = math.tanh %579 : vector<2x8x32xf32>
    %581 = vector.shape_cast %1 : vector<1x32xf32> to vector<1x1x32xf32>
    %582 = vector.broadcast %581 : vector<1x1x32xf32> to vector<2x8x32xf32>
    %583 = arith.mulf %580, %582 : vector<2x8x32xf32>
    %cst_156 = arith.constant dense<0.000000e+00> : vector<2x8xf32>
    %584 = vector.multi_reduction <add>, %583, %cst_156 [2] : vector<2x8x32xf32> to vector<2x8xf32>
    %585 = vector.shape_cast %584 : vector<2x8xf32> to vector<2x8x1xf32>
    %586 = arith.addf %585, %0 : vector<2x8x1xf32>
    %cst_157 = arith.constant dense<0xFF800000> : vector<2x1xf32>
    %587 = vector.multi_reduction <maximumf>, %586, %cst_157 [1] : vector<2x8x1xf32> to vector<2x1xf32>
    %588 = vector.shape_cast %587 : vector<2x1xf32> to vector<2x1x1xf32>
    %589 = vector.broadcast %588 : vector<2x1x1xf32> to vector<2x8x1xf32>
    %590 = arith.subf %586, %589 : vector<2x8x1xf32>
    %591 = math.exp %590 : vector<2x8x1xf32>
    %cst_158 = arith.constant dense<0.000000e+00> : vector<2x1xf32>
    %592 = vector.multi_reduction <add>, %591, %cst_158 [1] : vector<2x8x1xf32> to vector<2x1xf32>
    %593 = vector.shape_cast %592 : vector<2x1xf32> to vector<2x1x1xf32>
    %594 = tpu.reciprocal %593 : vector<2x1x1xf32> -> vector<2x1x1xf32>
    %595 = vector.broadcast %594 : vector<2x1x1xf32> to vector<2x8x1xf32>
    %596 = arith.mulf %591, %595 : vector<2x8x1xf32>
    %597 = vector.broadcast %596 : vector<2x8x1xf32> to vector<2x8x32xf32>
    %598 = arith.mulf %597, %544 : vector<2x8x32xf32>
    %cst_159 = arith.constant dense<0.000000e+00> : vector<2x32xf32>
    %599 = vector.multi_reduction <add>, %598, %cst_159 [1] : vector<2x8x32xf32> to vector<2x32xf32>
    %600 = arith.addf %570, %503 : vector<2x128xf32>
    %c0_160 = arith.constant 0 : index
    %c640_161 = arith.constant 640 : index
    %601 = vector.load %arg4[%c0_160, %c640_161] : memref<32x1536xf32, #tpu.memory_space<vmem>>, vector<32x128xf32>
    %cst_162 = arith.constant dense<0.000000e+00> : vector<2x128xf32>
    %602 = tpu.matmul %599, %601, %cst_162 {dimension_numbers = #tpu.dot_dimension_numbers<[1], [0], [0], [1], [0, 0, 1, 1], [], []>} : vector<2x32xf32>, vector<32x128xf32>, vector<2x128xf32> -> vector<2x128xf32>
    %603 = arith.addf %600, %602 : vector<2x128xf32>
    %604 = vector.extract_strided_slice %603 {offsets = [0, 0], sizes = [2, 96], strides = [1, 1]} : vector<2x128xf32> to vector<2x96xf32>
    %605 = arith.negf %604 : vector<2x96xf32>
    %606 = math.exp %605 : vector<2x96xf32>
    %cst_163 = arith.constant 1.000000e+00 : f32
    %607 = vector.broadcast %cst_163 : f32 to vector<2x96xf32>
    %608 = arith.addf %607, %606 : vector<2x96xf32>
    %609 = arith.divf %607, %608 : vector<2x96xf32>
    %610 = vector.extract_strided_slice %603 {offsets = [0, 96], sizes = [2, 32], strides = [1, 1]} : vector<2x128xf32> to vector<2x32xf32>
    %611 = math.tanh %610 : vector<2x32xf32>
    %612 = vector.extract_strided_slice %609 {offsets = [0, 0], sizes = [2, 32], strides = [1, 1]} : vector<2x96xf32> to vector<2x32xf32>
    %613 = vector.extract_strided_slice %609 {offsets = [0, 32], sizes = [2, 32], strides = [1, 1]} : vector<2x96xf32> to vector<2x32xf32>
    %614 = vector.extract_strided_slice %609 {offsets = [0, 64], sizes = [2, 32], strides = [1, 1]} : vector<2x96xf32> to vector<2x32xf32>
    %615 = arith.mulf %613, %489 : vector<2x32xf32>
    %616 = arith.mulf %612, %611 : vector<2x32xf32>
    %617 = arith.addf %615, %616 : vector<2x32xf32>
    %618 = math.tanh %617 : vector<2x32xf32>
    %619 = arith.mulf %614, %618 : vector<2x32xf32>
    %c0_164 = arith.constant 0 : index
    %c896_165 = arith.constant 896 : index
    %620 = vector.load %arg4[%c0_164, %c896_165] : memref<32x1536xf32, #tpu.memory_space<vmem>>, vector<32x448xf32>
    %cst_166 = arith.constant dense<0.000000e+00> : vector<2x448xf32>
    %621 = tpu.matmul %619, %620, %cst_166 {dimension_numbers = #tpu.dot_dimension_numbers<[1], [0], [0], [1], [0, 0, 1, 1], [], []>} : vector<2x32xf32>, vector<32x448xf32>, vector<2x448xf32> -> vector<2x448xf32>
    %c0_167 = arith.constant 0 : index
    %c512_168 = arith.constant 512 : index
    %622 = vector.load %arg5[%c0_167, %c512_168] : memref<1x1536xf32, #tpu.memory_space<vmem>>, vector<1x448xf32>
    %623 = vector.broadcast %622 : vector<1x448xf32> to vector<2x448xf32>
    %624 = arith.addf %621, %623 : vector<2x448xf32>
    %625 = vector.extract_strided_slice %624 {offsets = [0, 0], sizes = [2, 128], strides = [1, 1]} : vector<2x448xf32> to vector<2x128xf32>
    %626 = vector.shape_cast %104 : vector<2x128xf32> to vector<2x1x128xf32>
    %627 = vector.shape_cast %235 : vector<2x128xf32> to vector<2x1x128xf32>
    %628 = vector.shape_cast %366 : vector<2x128xf32> to vector<2x1x128xf32>
    %629 = vector.shape_cast %497 : vector<2x128xf32> to vector<2x1x128xf32>
    %630 = vector.shape_cast %625 : vector<2x128xf32> to vector<2x1x128xf32>
    %631 = tpu.concatenate %626, %627, %628, %629, %630 in 1 : vector<2x1x128xf32>, vector<2x1x128xf32>, vector<2x1x128xf32>, vector<2x1x128xf32>, vector<2x1x128xf32> -> vector<2x5x128xf32>
    %c0_169 = arith.constant 0 : index
    %c0_170 = arith.constant 0 : index
    %c0_171 = arith.constant 0 : index
    %632 = vector.load %arg6[%c0_169, %c0_170, %c0_171] : memref<2x5x128xf32, #tpu.memory_space<vmem>>, vector<2x5x128xf32>
    tpu.vector_store %arg6[%c0_169, %c0_170, %c0_171], %631 {strides = array<i32>} : memref<2x5x128xf32, #tpu.memory_space<vmem>>, vector<2x5x128xf32>,
    return
  }
}

</mosaic_0001>

<llo_original>
// kernel: memory_decoder.1
$region0: #{memory_decoder.1}
  #allocation0 [shape = 'u32[]', space=smem, size = 0x4, offset = 0x4, fixed_abs, tag = 'smem constant byte address 0x4 - core index']
  #allocation1 [shape = 'u32[144,128]{1,0:T(1,128)}', space=vmem, size = 0x12000, scoped, tag = 'internal scratch']
  %s0 = inlined_call_operand.hbm [shape: f32[5,2,32], index: 0, kind: input, shape index: {}]
  %s1 = inlined_call_operand.hbm [shape: f32[2,32], index: 1, kind: input, shape index: {}]
  %s2 = inlined_call_operand.vmem [shape: f32[2,8,32], index: 2, kind: input, shape index: {}]
  %s3 = inlined_call_operand.vmem [shape: f32[2,8,1], index: 3, kind: input, shape index: {}]
  %s4 = inlined_call_operand.hbm [shape: f32[32,1536], index: 4, kind: input, shape index: {}]
  %s5 = inlined_call_operand.vmem [shape: f32[1,1536], index: 5, kind: input, shape index: {}]
  %s6 = inlined_call_operand.vmem [shape: f32[2,5,128], index: 6, kind: output, shape index: {}]
  %s7 = sld [smem:[#allocation0]]
  $region46: #{memory_decoder.1} parent=0
    _
  %s9 = ssub.s32 1, %s7
  %s10 = scalar_select 0, %s9, %s7
  $region1: #{memory_decoder.1} parent=0
    #allocation2 [shape = 'u8[5120]{0}', space=vmem, size = 0x1400, scoped, tag = 'input window, operand 0, single buffered']
    #allocation3 [shape = 's32[1]{0}', space=sflag, size = 0x4, scoped, tag = 'scoped memory for memory_decoder.1']
    #allocation4 [shape = 'u8[1024]{0}', space=vmem, size = 0x400, scoped, tag = 'input window, operand 1, single buffered']
    #allocation5 [shape = 's32[1]{0}', space=sflag, size = 0x4, scoped, tag = 'scoped memory for memory_decoder.1']
    #allocation6 [shape = 'u8[196608]{0}', space=vmem, size = 0x30000, scoped, tag = 'input window, operand 4, single buffered']
    %11 = vsyncpa [#allocation3], 0
    %12 = vsyncpa [#allocation5], 0
    // Predicated region
    $region2: #{memory_decoder.1} parent=1 // pred_check
      _
    $region3: #{memory_decoder.1} parent=1 // pred_check_branch
      %14 = sbr.rel (0) target = $region5
    $region4: #{memory_decoder.1} parent=1 // pred_region
      %s16 = ssub.s32 160, 160
      %17 = vsyncadd [#allocation3], %s16
      %s18 = sshll.u32 [#allocation2], 4
      %s19 = int_to_ptr.vmem [resolvable:$true] %s18
      %24 = dma.hbm_to_vmem [thread:$0]  %s0, 160, %s19, [#allocation3], 32, 32, 2
    $region5: #{memory_decoder.1} parent=1 // pred_fallthru
      _
    // Predicated region
    $region6: #{memory_decoder.1} parent=1 // pred_check
      _
    $region7: #{memory_decoder.1} parent=1 // pred_check_branch
      %26 = sbr.rel (0) target = $region9
    $region8: #{memory_decoder.1} parent=1 // pred_region
      %s28 = ssub.s32 32, 32
      %29 = vsyncadd [#allocation5], %s28
      %s31 = sshll.u32 [#allocation4], 4
      %s32 = int_to_ptr.vmem [resolvable:$true] %s31
      %34 = dma.hbm_to_vmem [thread:$0]  %s1, 32, %s32, [#allocation5]
    $region9: #{memory_decoder.1} parent=1 // pred_fallthru
      _
    // Predicated region
    $region10: #{memory_decoder.1} parent=1 // pred_check
      _
    $region11: #{memory_decoder.1} parent=1 // pred_check_branch
      %36 = sbr.rel (0) target = $region13
    $region12: #{memory_decoder.1} parent=1 // pred_region
      _
    $region13: #{memory_decoder.1} parent=1 // pred_fallthru
      _
    // Predicated region
    $region14: #{memory_decoder.1} parent=1 // pred_check
      _
    $region15: #{memory_decoder.1} parent=1 // pred_check_branch
      %38 = sbr.rel (0) target = $region17
    $region16: #{memory_decoder.1} parent=1 // pred_region
      _
    $region17: #{memory_decoder.1} parent=1 // pred_fallthru
      _
    // Predicated region
    $region18: #{memory_decoder.1} parent=1 // pred_check
      _
    $region19: #{memory_decoder.1} parent=1 // pred_check_branch
      %40 = sbr.rel (0) target = $region21
    $region20: #{memory_decoder.1} parent=1 // pred_region
      %s42 = ssub.s32 6144, 6144
      %43 = vsyncadd [#allocation5], %s42
      %s44 = sshll.u32 [#allocation6], 4
      %s45 = int_to_ptr.vmem [resolvable:$true] %s44
      %50 = dma.hbm_to_vmem [thread:$0]  %s4, 6144, %s45, [#allocation5], 1536, 1536, 96
    $region21: #{memory_decoder.1} parent=1 // pred_fallthru
      _
    // Predicated region
    $region22: #{memory_decoder.1} parent=1 // pred_check
      _
    $region23: #{memory_decoder.1} parent=1 // pred_check_branch
      %52 = sbr.rel (0) target = $region25
    $region24: #{memory_decoder.1} parent=1 // pred_region
      _
    $region25: #{memory_decoder.1} parent=1 // pred_fallthru
      _
    // Predicated region
    $region26: #{memory_decoder.1} parent=1 // pred_check
      _
    $region27: #{memory_decoder.1} parent=1 // pred_check_branch
      %54 = sbr.rel (0) target = $region29
    $region28: #{memory_decoder.1} parent=1 // pred_region
      %55 = dma.done [#allocation3], 160
    $region29: #{memory_decoder.1} parent=1 // pred_fallthru
      _
    // Predicated region
    $region30: #{memory_decoder.1} parent=1 // pred_check
      _
    $region31: #{memory_decoder.1} parent=1 // pred_check_branch
      %57 = sbr.rel (0) target = $region33
    $region32: #{memory_decoder.1} parent=1 // pred_region
      %58 = dma.done [#allocation5], 32
    $region33: #{memory_decoder.1} parent=1 // pred_fallthru
      _
    // Predicated region
    $region34: #{memory_decoder.1} parent=1 // pred_check
      _
    $region35: #{memory_decoder.1} parent=1 // pred_check_branch
      %60 = sbr.rel (0) target = $region37
    $region36: #{memory_decoder.1} parent=1 // pred_region
      %61 = dma.done [#allocation5], 6144
    $region37: #{memory_decoder.1} parent=1 // pred_fallthru
      _
    %v62 = vld [vmem:[%s3] sm:$0xff]
    %v63 = vld [vmem:[%s3 + $0x8] sm:$0xff]
    %v64 = vld [vmem:[%s5 + $0x9] sm:$0x1]
    %v65 = vld [vmem:[%s5 + $0xa] sm:$0x1]
    %v66 = vld [vmem:[%s5 + $0xb] sm:$0x1]
    %v67 = vld [vmem:[#allocation4] sm:$0x3]
    %v68 = vld [vmem:[#allocation6] sm:$0xff]
    %v69 = vld [vmem:[#allocation6 + $0x60] sm:$0xff]
    %v70 = vld [vmem:[#allocation6 + $0xc0] sm:$0xff]
    %v71 = vld [vmem:[#allocation6 + $0x120] sm:$0xff]
    %v72 = vld [vmem:[%s5] sm:$0x1]
    %v74 = vlaneseq
    %v75 = vshrl.u32 %v74, 7
    %v76 = vsub.s32 0, %v75
    %v77 = vrot.slane %v72, %v76
    %vm79 = vcmask 261120
    %v81 = vsel %vm79, %v67, 0
    %83 = vmatprep.subr.mxu0 0.0
    %84 = vmatpush1.msra.mxu0 %v68
    %85 = vmatprep.subr.mxu0 0.0
    %86 = vmatpush1.msra.mxu0 %v69
    %87 = vmatprep.subr.mxu0 0.0
    %88 = vmatpush1.msra.mxu0 %v70
    %89 = vmatprep.subr.mxu0 0.0
    %90 = vmatpush1.msra.mxu0 %v71
    %91 = vmatprep.subr.mxu0 0.0
    %92 = vmatpush1.msra.mxu0 0.0
    %93 = vmatprep.subr.mxu0 0.0
    %94 = vmatpush1.msra.mxu0 0.0
    %95 = vmatprep.subr.mxu0 0.0
    %96 = vmatpush1.msra.mxu0 0.0
    %97 = vmatprep.subr.mxu0 0.0
    %98 = vmatpush1.msra.mxu0 0.0
    %99 = vmatprep.subr.mxu0 0.0
    %100 = vmatpush1.msra.mxu0 0.0
    %101 = vmatprep.subr.mxu0 0.0
    %102 = vmatpush1.msra.mxu0 0.0
    %103 = vmatprep.subr.mxu0 0.0
    %104 = vmatpush1.msra.mxu0 0.0
    %105 = vmatprep.subr.mxu0 0.0
    %106 = vmatpush1.msra.mxu0 0.0
    %107 = vmatprep.subr.mxu0 0.0
    %108 = vmatpush1.msra.mxu0 0.0
    %109 = vmatprep.subr.mxu0 0.0
    %110 = vmatpush1.msra.mxu0 0.0
    %111 = vmatprep.subr.mxu0 0.0
    %112 = vmatpush1.msra.mxu0 0.0
    %113 = vmatprep.subr.mxu0 0.0
    %114 = vmatpush1.msra.mxu0 0.0
    %115 = vmatprep.subr.mxu0 0.0
    %116 = vmatpush1.msra.mxu0 0.0
    %117 = vmatprep.subr.mxu0 0.0
    %118 = vmatpush1.msra.mxu0 0.0
    %119 = vmatprep.subr.mxu0 0.0
    %120 = vmatpush1.msra.mxu0 0.0
    %121 = vmatprep.subr.mxu0 0.0
    %122 = vmatpush1.msra.mxu0 0.0
    %123 = vmatprep.subr.mxu0 0.0
    %124 = vmatpush1.msra.mxu0 0.0
    %125 = vmatprep.subr.mxu0 0.0
    %126 = vmatpush1.msra.mxu0 0.0
    %127 = vmatprep.subr.mxu0 0.0
    %128 = vmatpush1.msra.mxu0 0.0
    %129 = vmatprep.subr.mxu0 0.0
    %130 = vmatpush1.msra.mxu0 0.0
    %131 = vmatprep.subr.mxu0 0.0
    %132 = vmatpush1.msra.mxu0 0.0
    %133 = vmatprep.subr.mxu0 0.0
    %134 = vmatpush1.msra.mxu0 0.0
    %135 = vmatprep.subr.mxu0 0.0
    %136 = vmatpush1.msra.mxu0 0.0
    %137 = vmatprep.subr.mxu0 0.0
    %138 = vmatpush1.msra.mxu0 0.0
    %139 = vmatprep.subr.mxu0 0.0
    %140 = vmatpush1.msra.mxu0 0.0
    %141 = vmatprep.subr.mxu0 0.0
    %142 = vmatpush1.msra.mxu0 0.0
    %143 = vmatprep.subr.mxu0 0.0
    %144 = vmatpush1.msra.mxu0 0.0
    %145 = vmatprep.subr.mxu0 0.0
    %146 = vmatpush1.msra.mxu0 0.0
    %147 = vmatprep.mubr.f32.mxu0 0.0
    %148 = vmatmul.mubr.f32.gmra.mrb[0].mxu0 %v81
    %v149 = vpop.f32.mrb[0].mxu0
    %v150 = vadd.f32 %v77, %v149
    %v151 = vpop.f32.mrb[0].mxu0
    %152 = vdwg.mxu0
    %v153 = vld [vmem:[#allocation2] sm:$0x3]
    %v154 = vld [vmem:[#allocation2 + $0x2] sm:$0x3]
    %v155 = vld [vmem:[#allocation2 + $0x4] sm:$0x3]
    %v156 = vld [vmem:[#allocation2 + $0x6] sm:$0x3]
    %v157 = vld [vmem:[#allocation2 + $0x8] sm:$0x3]
    %v158 = vld [vmem:[#allocation6 + $0x8] sm:$0xff]
    %v159 = vld [vmem:[#allocation6 + $0x68] sm:$0xff]
    %v160 = vld [vmem:[#allocation6 + $0xc8] sm:$0xff]
    %v161 = vld [vmem:[#allocation6 + $0x128] sm:$0xff]
    %v167 = vcombine.low %v153, %v154
    %v168 = vcombine.low %v155, %v156
    %v170 = vunpack.c.l.s4 1983009808
    %v171 = vunpack.c.0.s8 %v170
    %v172 = vlaneseq
    %v173 = vshrl.u32 %v172, 7
    %v174 = vsub.s32 %v171, %v173
    %v175 = vrot.slane %v167, %v174
    %v177 = vunpack.c.l.s4 1983009808
    %v178 = vunpack.c.0.s8 %v177
    %v179 = vlaneseq
    %v180 = vshrl.u32 %v179, 7
    %v181 = vsub.s32 %v178, %v180
    %v182 = vrot.slane %v168, %v181
    %v183 = vcombine.low %v175, %v182
    %v185 = vunpack.c.l.s4 1983009808
    %v186 = vunpack.c.0.s8 %v185
    %v187 = vlaneseq
    %v188 = vshrl.u32 %v187, 7
    %v189 = vsub.s32 %v186, %v188
    %v190 = vrot.slane %v157, %v189
    %v191 = vsel %vm79, %v183, 0
    %v193 = vsel %vm79, %v190, 0
    %195 = vmatprep.subr.mxu0 0.0
    %196 = vmatpush1.msra.mxu0 %v158
    %197 = vmatprep.subr.mxu0 0.0
    %198 = vmatpush1.msra.mxu0 %v159
    %199 = vmatprep.subr.mxu0 0.0
    %200 = vmatpush1.msra.mxu0 %v160
    %201 = vmatprep.subr.mxu0 0.0
    %202 = vmatpush1.msra.mxu0 %v161
    %203 = vmatprep.subr.mxu0 0.0
    %204 = vmatpush1.msra.mxu0 0.0
    %205 = vmatprep.subr.mxu0 0.0
    %206 = vmatpush1.msra.mxu0 0.0
    %207 = vmatprep.subr.mxu0 0.0
    %208 = vmatpush1.msra.mxu0 0.0
    %209 = vmatprep.subr.mxu0 0.0
    %210 = vmatpush1.msra.mxu0 0.0
    %211 = vmatprep.subr.mxu0 0.0
    %212 = vmatpush1.msra.mxu0 0.0
    %213 = vmatprep.subr.mxu0 0.0
    %214 = vmatpush1.msra.mxu0 0.0
    %215 = vmatprep.subr.mxu0 0.0
    %216 = vmatpush1.msra.mxu0 0.0
    %217 = vmatprep.subr.mxu0 0.0
    %218 = vmatpush1.msra.mxu0 0.0
    %219 = vmatprep.subr.mxu0 0.0
    %220 = vmatpush1.msra.mxu0 0.0
    %221 = vmatprep.subr.mxu0 0.0
    %222 = vmatpush1.msra.mxu0 0.0
    %223 = vmatprep.subr.mxu0 0.0
    %224 = vmatpush1.msra.mxu0 0.0
    %225 = vmatprep.subr.mxu0 0.0
    %226 = vmatpush1.msra.mxu0 0.0
    %227 = vmatprep.subr.mxu0 0.0
    %228 = vmatpush1.msra.mxu0 0.0
    %229 = vmatprep.subr.mxu0 0.0
    %230 = vmatpush1.msra.mxu0 0.0
    %231 = vmatprep.subr.mxu0 0.0
    %232 = vmatpush1.msra.mxu0 0.0
    %233 = vmatprep.subr.mxu0 0.0
    %234 = vmatpush1.msra.mxu0 0.0
    %235 = vmatprep.subr.mxu0 0.0
    %236 = vmatpush1.msra.mxu0 0.0
    %237 = vmatprep.subr.mxu0 0.0
    %238 = vmatpush1.msra.mxu0 0.0
    %239 = vmatprep.subr.mxu0 0.0
    %240 = vmatpush1.msra.mxu0 0.0
    %241 = vmatprep.subr.mxu0 0.0
    %242 = vmatpush1.msra.mxu0 0.0
    %243 = vmatprep.subr.mxu0 0.0
    %244 = vmatpush1.msra.mxu0 0.0
    %245 = vmatprep.subr.mxu0 0.0
    %246 = vmatpush1.msra.mxu0 0.0
    %247 = vmatprep.subr.mxu0 0.0
    %248 = vmatpush1.msra.mxu0 0.0
    %249 = vmatprep.subr.mxu0 0.0
    %250 = vmatpush1.msra.mxu0 0.0
    %251 = vmatprep.subr.mxu0 0.0
    %252 = vmatpush1.msra.mxu0 0.0
    %253 = vmatprep.subr.mxu0 0.0
    %254 = vmatpush1.msra.mxu0 0.0
    %255 = vmatprep.subr.mxu0 0.0
    %256 = vmatpush1.msra.mxu0 0.0
    %257 = vmatprep.subr.mxu0 0.0
    %258 = vmatpush1.msra.mxu0 0.0
    %259 = vmatprep.mubr.f32.mxu0 0.0
    %260 = vmatmul.mubr.f32.gmra.mrb[0].mxu0 %v191
    %v261 = vpop.f32.mrb[0].mxu0
    %v262 = vadd.f32 0.0, %v261
    %v263 = vpop.f32.mrb[0].mxu0
    %264 = vmatprep.mubr.f32.mxu0 0.0
    %265 = vmatmul.mubr.f32.gmra.mrb[0].mxu0 %v193
    %v266 = vpop.f32.mrb[0].mxu0
    %v267 = vadd.f32 0.0, %v266
    %v268 = vpop.f32.mrb[0].mxu0
    %269 = vdwg.mxu0
    %v272 = vcombine.high %v262, %v262
    %v274 = vunpack.c.l.s4 1983009808
    %v275 = vunpack.c.0.s8 %v274
    %v276 = vlaneseq
    %v277 = vshrl.u32 %v276, 7
    %v278 = vsub.s32 %v275, %v277
    %v279 = vrot.slane %v262, %v278
    %v281 = vunpack.c.l.s4 1983009808
    %v282 = vunpack.c.0.s8 %v281
    %v283 = vlaneseq
    %v284 = vshrl.u32 %v283, 7
    %v285 = vsub.s32 %v282, %v284
    %v286 = vrot.slane %v272, %v285
    %v287 = vcombine.high %v279, %v279
    %v288 = vcombine.high %v286, %v286
    %v290 = vunpack.c.l.s4 1983009808
    %v291 = vunpack.c.0.s8 %v290
    %v292 = vlaneseq
    %v293 = vshrl.u32 %v292, 7
    %v294 = vsub.s32 %v291, %v293
    %v295 = vrot.slane %v267, %v294
    %v301 = vadd.f32 %v279, %v150
    %v302 = vadd.f32 %v287, %v150
    %v303 = vadd.f32 %v286, %v150
    %v304 = vadd.f32 %v288, %v150
    %v305 = vadd.f32 %v295, %v150
    %v306 = vld [vmem:[%s2] sm:$0xff]
    %v307 = vld [vmem:[%s2 + $0x8] sm:$0xff]
    %v308 = vadd.f32 %v301, 0.0
    %v309 = vadd.f32 %v308, 0.0
    %v310 = vxor.u32 %v309, 2147483648
    %v311 = vmul.f32 %v310, 1.442695
    %v312 = vpow.pop %v311
    %v313 = vadd.f32 %v312, 1.0
    %v314 = vrcp.pop %v313
    %v315 = vmul.f32 1.0, %v314
    %v316 = vtanh.pop %v309
    %v317 = vmul.f32 %v315, 0.0
    %319 = vrot.lane.b32.xlu0 %v316, 32
    %v320 = vpop.permute.xlu0 %319
    %v322 = vmul.f32 %v315, %v320
    %324 = vrot.lane.b32.xlu0 %v322, 32
    %v325 = vpop.permute.xlu0 %324
    %v327 = vadd.f32 %v317, %v325
    %v328 = vtanh.pop %v327
    %330 = vrot.lane.b32.xlu0 %v328, 32
    %v331 = vpop.permute.xlu0 %330
    %v333 = vmul.f32 %v315, %v331
    %v334 = vld [vmem:[#allocation6 + $0x10] sm:$0xff]
    %v335 = vld [vmem:[#allocation6 + $0x18] sm:$0xff]
    %v336 = vld [vmem:[#allocation6 + $0x20] sm:$0xff]
    %v337 = vld [vmem:[#allocation6 + $0x70] sm:$0xff]
    %v338 = vld [vmem:[#allocation6 + $0x78] sm:$0xff]
    %v339 = vld [vmem:[#allocation6 + $0x80] sm:$0xff]
    %v340 = vld [vmem:[#allocation6 + $0xd0] sm:$0xff]
    %v341 = vld [vmem:[#allocation6 + $0xd8] sm:$0xff]
    %v342 = vld [vmem:[#allocation6 + $0xe0] sm:$0xff]
    %v343 = vld [vmem:[#allocation6 + $0x130] sm:$0xff]
    %v344 = vld [vmem:[#allocation6 + $0x138] sm:$0xff]
    %v345 = vld [vmem:[#allocation6 + $0x140] sm:$0xff]
    %v346 = vld [vmem:[%s5 + $0x1] sm:$0x7]
    %v348 = vlaneseq
    %v349 = vshrl.u32 %v348, 7
    %v350 = vsub.s32 0, %v349
    %v351 = vrot.slane %v346, %v350
    %v352 = vlaneseq
    %v353 = vshrl.u32 %v352, 7
    %v354 = vsub.s32 1, %v353
    %v355 = vrot.slane %v346, %v354
    %v356 = vlaneseq
    %v357 = vshrl.u32 %v356, 7
    %v358 = vsub.s32 2, %v357
    %v359 = vrot.slane %v346, %v358
    %v365 = vunpack.c.l.s4 1983009808
    %v366 = vunpack.c.0.s8 %v365
    %v367 = vlaneseq
    %v368 = vshrl.u32 %v367, 7
    %v369 = vsub.s32 %v366, %v368
    %v370 = vrot.slane %v333, %v369
    %371 = vrot.lane.b32.xlu0 %v370, 64
    %v372 = vpop.permute.xlu0 %371
    %v373 = vsel %vm79, %v372, 0
    %375 = vmatprep.subr.mxu0 %v335
    %376 = vmatpush1.msra.mxu0 %v334
    %377 = vmatprep.subr.mxu0 %v338
    %378 = vmatpush1.msra.mxu0 %v337
    %379 = vmatprep.subr.mxu0 %v341
    %380 = vmatpush1.msra.mxu0 %v340
    %381 = vmatprep.subr.mxu0 %v344
    %382 = vmatpush1.msra.mxu0 %v343
    %383 = vmatprep.subr.mxu0 0.0
    %384 = vmatpush1.msra.mxu0 0.0
    %385 = vmatprep.subr.mxu0 0.0
    %386 = vmatpush1.msra.mxu0 0.0
    %387 = vmatprep.subr.mxu0 0.0
    %388 = vmatpush1.msra.mxu0 0.0
    %389 = vmatprep.subr.mxu0 0.0
    %390 = vmatpush1.msra.mxu0 0.0
    %391 = vmatprep.subr.mxu0 0.0
    %392 = vmatpush1.msra.mxu0 0.0
    %393 = vmatprep.subr.mxu0 0.0
    %394 = vmatpush1.msra.mxu0 0.0
    %395 = vmatprep.subr.mxu0 0.0
    %396 = vmatpush1.msra.mxu0 0.0
    %397 = vmatprep.subr.mxu0 0.0
    %398 = vmatpush1.msra.mxu0 0.0
    %399 = vmatprep.subr.mxu0 0.0
    %400 = vmatpush1.msra.mxu0 0.0
    %401 = vmatprep.subr.mxu0 0.0
    %402 = vmatpush1.msra.mxu0 0.0
    %403 = vmatprep.subr.mxu0 0.0
    %404 = vmatpush1.msra.mxu0 0.0
    %405 = vmatprep.subr.mxu0 0.0
    %406 = vmatpush1.msra.mxu0 0.0
    %407 = vmatprep.subr.mxu0 0.0
    %408 = vmatpush1.msra.mxu0 0.0
    %409 = vmatprep.subr.mxu0 0.0
    %410 = vmatpush1.msra.mxu0 0.0
    %411 = vmatprep.subr.mxu0 0.0
    %412 = vmatpush1.msra.mxu0 0.0
    %413 = vmatprep.subr.mxu0 0.0
    %414 = vmatpush1.msra.mxu0 0.0
    %415 = vmatprep.subr.mxu0 0.0
    %416 = vmatpush1.msra.mxu0 0.0
    %417 = vmatprep.subr.mxu0 0.0
    %418 = vmatpush1.msra.mxu0 0.0
    %419 = vmatprep.subr.mxu0 0.0
    %420 = vmatpush1.msra.mxu0 0.0
    %421 = vmatprep.subr.mxu0 0.0
    %422 = vmatpush1.msra.mxu0 0.0
    %423 = vmatprep.subr.mxu0 0.0
    %424 = vmatpush1.msra.mxu0 0.0
    %425 = vmatprep.subr.mxu0 0.0
    %426 = vmatpush1.msra.mxu0 0.0
    %427 = vmatprep.subr.mxu0 0.0
    %428 = vmatpush1.msra.mxu0 0.0
    %429 = vmatprep.subr.mxu0 0.0
    %430 = vmatpush1.msra.mxu0 0.0
    %431 = vmatprep.subr.mxu0 0.0
    %432 = vmatpush1.msra.mxu0 0.0
    %433 = vmatprep.subr.mxu0 0.0
    %434 = vmatpush1.msra.mxu0 0.0
    %435 = vmatprep.subr.mxu0 0.0
    %436 = vmatpush1.msra.mxu0 0.0
    %437 = vmatprep.subr.mxu0 0.0
    %438 = vmatpush1.msra.mxu0 0.0
    %439 = vmatprep.mubr.f32.mxu0 0.0
    %440 = vmatmul.mubr.f32.gmra.mrb[0].mxu0 %v373
    %v441 = vpop.f32.mrb[0].mxu0
    %v442 = vadd.f32 %v351, %v441
    %v443 = vpop.f32.mrb[0].mxu0
    %v444 = vadd.f32 %v355, %v443
    %445 = vdwg.mxu0
    %446 = vmatprep.subr.mxu0 0.0
    %447 = vmatpush1.msra.mxu0 %v336
    %448 = vmatprep.subr.mxu0 0.0
    %449 = vmatpush1.msra.mxu0 %v339
    %450 = vmatprep.subr.mxu0 0.0
    %451 = vmatpush1.msra.mxu0 %v342
    %452 = vmatprep.subr.mxu0 0.0
    %453 = vmatpush1.msra.mxu0 %v345
    %454 = vmatprep.subr.mxu0 0.0
    %455 = vmatpush1.msra.mxu0 0.0
    %456 = vmatprep.subr.mxu0 0.0
    %457 = vmatpush1.msra.mxu0 0.0
    %458 = vmatprep.subr.mxu0 0.0
    %459 = vmatpush1.msra.mxu0 0.0
    %460 = vmatprep.subr.mxu0 0.0
    %461 = vmatpush1.msra.mxu0 0.0
    %462 = vmatprep.subr.mxu0 0.0
    %463 = vmatpush1.msra.mxu0 0.0
    %464 = vmatprep.subr.mxu0 0.0
    %465 = vmatpush1.msra.mxu0 0.0
    %466 = vmatprep.subr.mxu0 0.0
    %467 = vmatpush1.msra.mxu0 0.0
    %468 = vmatprep.subr.mxu0 0.0
    %469 = vmatpush1.msra.mxu0 0.0
    %470 = vmatprep.subr.mxu0 0.0
    %471 = vmatpush1.msra.mxu0 0.0
    %472 = vmatprep.subr.mxu0 0.0
    %473 = vmatpush1.msra.mxu0 0.0
    %474 = vmatprep.subr.mxu0 0.0
    %475 = vmatpush1.msra.mxu0 0.0
    %476 = vmatprep.subr.mxu0 0.0
    %477 = vmatpush1.msra.mxu0 0.0
    %478 = vmatprep.subr.mxu0 0.0
    %479 = vmatpush1.msra.mxu0 0.0
    %480 = vmatprep.subr.mxu0 0.0
    %481 = vmatpush1.msra.mxu0 0.0
    %482 = vmatprep.subr.mxu0 0.0
    %483 = vmatpush1.msra.mxu0 0.0
    %484 = vmatprep.subr.mxu0 0.0
    %485 = vmatpush1.msra.mxu0 0.0
    %486 = vmatprep.subr.mxu0 0.0
    %487 = vmatpush1.msra.mxu0 0.0
    %488 = vmatprep.subr.mxu0 0.0
    %489 = vmatpush1.msra.mxu0 0.0
    %490 = vmatprep.subr.mxu0 0.0
    %491 = vmatpush1.msra.mxu0 0.0
    %492 = vmatprep.subr.mxu0 0.0
    %493 = vmatpush1.msra.mxu0 0.0
    %494 = vmatprep.subr.mxu0 0.0
    %495 = vmatpush1.msra.mxu0 0.0
    %496 = vmatprep.subr.mxu0 0.0
    %497 = vmatpush1.msra.mxu0 0.0
    %498 = vmatprep.subr.mxu0 0.0
    %499 = vmatpush1.msra.mxu0 0.0
    %500 = vmatprep.subr.mxu0 0.0
    %501 = vmatpush1.msra.mxu0 0.0
    %502 = vmatprep.subr.mxu0 0.0
    %503 = vmatpush1.msra.mxu0 0.0
    %504 = vmatprep.subr.mxu0 0.0
    %505 = vmatpush1.msra.mxu0 0.0
    %506 = vmatprep.subr.mxu0 0.0
    %507 = vmatpush1.msra.mxu0 0.0
    %508 = vmatprep.subr.mxu0 0.0
    %509 = vmatpush1.msra.mxu0 0.0
    %510 = vmatprep.mubr.f32.mxu0 0.0
    %511 = vmatmul.mubr.f32.gmra.mrb[0].mxu0 %v373
    %v512 = vpop.f32.mrb[0].mxu0
    %v513 = vadd.f32 %v359, %v512
    %v514 = vpop.f32.mrb[0].mxu0
    %515 = vdwg.mxu0
    %v516 = vld [vmem:[#allocation6 + $0x30] sm:$0xff]
    %v517 = vld [vmem:[#allocation6 + $0x90] sm:$0xff]
    %v518 = vld [vmem:[#allocation6 + $0xf0] sm:$0xff]
    %v519 = vld [vmem:[#allocation6 + $0x150] sm:$0xff]
    %v521 = vsel %vm79, %v306, 0
    %v524 = vsel %vm79, %v307, 0
    %526 = vmatprep.subr.mxu0 0.0
    %527 = vmatpush1.msra.mxu0 %v516
    %528 = vmatprep.subr.mxu0 0.0
    %529 = vmatpush1.msra.mxu0 %v517
    %530 = vmatprep.subr.mxu0 0.0
    %531 = vmatpush1.msra.mxu0 %v518
    %532 = vmatprep.subr.mxu0 0.0
    %533 = vmatpush1.msra.mxu0 %v519
    %534 = vmatprep.subr.mxu0 0.0
    %535 = vmatpush1.msra.mxu0 0.0
    %536 = vmatprep.subr.mxu0 0.0
    %537 = vmatpush1.msra.mxu0 0.0
    %538 = vmatprep.subr.mxu0 0.0
    %539 = vmatpush1.msra.mxu0 0.0
    %540 = vmatprep.subr.mxu0 0.0
    %541 = vmatpush1.msra.mxu0 0.0
    %542 = vmatprep.subr.mxu0 0.0
    %543 = vmatpush1.msra.mxu0 0.0
    %544 = vmatprep.subr.mxu0 0.0
    %545 = vmatpush1.msra.mxu0 0.0
    %546 = vmatprep.subr.mxu0 0.0
    %547 = vmatpush1.msra.mxu0 0.0
    %548 = vmatprep.subr.mxu0 0.0
    %549 = vmatpush1.msra.mxu0 0.0
    %550 = vmatprep.subr.mxu0 0.0
    %551 = vmatpush1.msra.mxu0 0.0
    %552 = vmatprep.subr.mxu0 0.0
    %553 = vmatpush1.msra.mxu0 0.0
    %554 = vmatprep.subr.mxu0 0.0
    %555 = vmatpush1.msra.mxu0 0.0
    %556 = vmatprep.subr.mxu0 0.0
    %557 = vmatpush1.msra.mxu0 0.0
    %558 = vmatprep.subr.mxu0 0.0
    %559 = vmatpush1.msra.mxu0 0.0
    %560 = vmatprep.subr.mxu0 0.0
    %561 = vmatpush1.msra.mxu0 0.0
    %562 = vmatprep.subr.mxu0 0.0
    %563 = vmatpush1.msra.mxu0 0.0
    %564 = vmatprep.subr.mxu0 0.0
    %565 = vmatpush1.msra.mxu0 0.0
    %566 = vmatprep.subr.mxu0 0.0
    %567 = vmatpush1.msra.mxu0 0.0
    %568 = vmatprep.subr.mxu0 0.0
    %569 = vmatpush1.msra.mxu0 0.0
    %570 = vmatprep.subr.mxu0 0.0
    %571 = vmatpush1.msra.mxu0 0.0
    %572 = vmatprep.subr.mxu0 0.0
    %573 = vmatpush1.msra.mxu0 0.0
    %574 = vmatprep.subr.mxu0 0.0
    %575 = vmatpush1.msra.mxu0 0.0
    %576 = vmatprep.subr.mxu0 0.0
    %577 = vmatpush1.msra.mxu0 0.0
    %578 = vmatprep.subr.mxu0 0.0
    %579 = vmatpush1.msra.mxu0 0.0
    %580 = vmatprep.subr.mxu0 0.0
    %581 = vmatpush1.msra.mxu0 0.0
    %582 = vmatprep.subr.mxu0 0.0
    %583 = vmatpush1.msra.mxu0 0.0
    %584 = vmatprep.subr.mxu0 0.0
    %585 = vmatpush1.msra.mxu0 0.0
    %586 = vmatprep.subr.mxu0 0.0
    %587 = vmatpush1.msra.mxu0 0.0
    %588 = vmatprep.subr.mxu0 0.0
    %589 = vmatpush1.msra.mxu0 0.0
    %590 = vmatprep.mubr.f32.mxu0 0.0
    %591 = vmatmul.mubr.f32.gmra.mrb[0].mxu0 %v521
    %v592 = vpop.f32.mrb[0].mxu0
    %v593 = vadd.f32 0.0, %v592
    %v594 = vpop.f32.mrb[0].mxu0
    %595 = vmatprep.mubr.f32.mxu0 0.0
    %596 = vmatmul.mubr.f32.gmra.mrb[0].mxu0 %v524
    %v597 = vpop.f32.mrb[0].mxu0
    %v598 = vadd.f32 0.0, %v597
    %v599 = vpop.f32.mrb[0].mxu0
    %600 = vdwg.mxu0
    %v603 = vunpack.c.l.s4 1966171168
    %v604 = vunpack.c.0.s8 %v603
    %v605 = vlaneseq
    %v606 = vshrl.u32 %v605, 7
    %v607 = vsub.s32 %v604, %v606
    %v608 = vrot.slane %v444, %v607
    %v609 = vcombine.high %v608, %v608
    %v611 = vunpack.c.l.s4 1966171168
    %v612 = vunpack.c.0.s8 %v611
    %v613 = vlaneseq
    %v614 = vshrl.u32 %v613, 7
    %v615 = vsub.s32 %v612, %v614
    %v616 = vrot.slane %v608, %v615
    %v618 = vunpack.c.l.s4 1966171168
    %v619 = vunpack.c.0.s8 %v618
    %v620 = vlaneseq
    %v621 = vshrl.u32 %v620, 7
    %v622 = vsub.s32 %v619, %v621
    %v623 = vrot.slane %v609, %v622
    %v624 = vlaneseq
    %v625 = vshrl.u32 %v624, 7
    %v626 = vsub.s32 0, %v625
    %v627 = vrot.slane %v616, %v626
    %v628 = vlaneseq
    %v629 = vshrl.u32 %v628, 7
    %v630 = vsub.s32 0, %v629
    %v631 = vrot.slane %v623, %v630
    %v634 = vadd.f32 %v593, %v627
    %v635 = vadd.f32 %v598, %v631
    %v636 = vtanh.pop %v634
    %v637 = vtanh.pop %v635
    %v639 = vlaneseq
    %v640 = vshrl.u32 %v639, 7
    %v641 = vsub.s32 0, %v640
    %v642 = vrot.slane %v64, %v641
    %v644 = vmul.f32 %v636, %v642
    %v645 = vmul.f32 %v637, %v642
    %v646 = vsel %vm79, %v644, 0.0
    %647 = vadd.xlane.f32.xlu0 %v646
    %v648 = vpop.xlane.xlu0 %647
    %v649 = vsel %vm79, %v645, 0.0
    %650 = vadd.xlane.f32.xlu0 %v649
    %v651 = vpop.xlane.xlu0 %650
    %v652 = vadd.f32 %v648, %v62
    %v653 = vadd.f32 %v651, %v63
    %vm654 = vcmask 7168
    %v655 = vsel %vm654, %v652, -inf
    %v656 = vrot.slane %v655, 4
    %v657 = vmax.f32 %v655, %v656
    %v658 = vrot.slane %v657, 2
    %v659 = vmax.f32 %v657, %v658
    %v660 = vrot.slane %v659, 1
    %v661 = vmax.f32 %v659, %v660
    %v662 = vsel %vm654, %v653, -inf
    %v663 = vrot.slane %v662, 4
    %v664 = vmax.f32 %v662, %v663
    %v665 = vrot.slane %v664, 2
    %v666 = vmax.f32 %v664, %v665
    %v667 = vrot.slane %v666, 1
    %v668 = vmax.f32 %v666, %v667
    %v669 = vsub.f32 %v652, %v661
    %v670 = vsub.f32 %v653, %v668
    %v671 = vmul.f32 %v669, 1.442695
    %v672 = vpow.pop %v671
    %v673 = vmul.f32 %v670, 1.442695
    %v674 = vpow.pop %v673
    %v675 = vsel %vm654, %v672, 0.0
    %v676 = vrot.slane %v675, 4
    %v677 = vadd.f32 %v675, %v676
    %v678 = vrot.slane %v677, 2
    %v679 = vadd.f32 %v677, %v678
    %v680 = vrot.slane %v679, 1
    %v681 = vadd.f32 %v679, %v680
    %v682 = vsel %vm654, %v674, 0.0
    %v683 = vrot.slane %v682, 4
    %v684 = vadd.f32 %v682, %v683
    %v685 = vrot.slane %v684, 2
    %v686 = vadd.f32 %v684, %v685
    %v687 = vrot.slane %v686, 1
    %v688 = vadd.f32 %v686, %v687
    %v689 = vrcp.pop %v681
    %v690 = vrcp.pop %v688
    %v691 = vmul.f32 %v672, %v689
    %v692 = vmul.f32 %v674, %v690
    %694 = vset.pattern.permute.xlu0 0
    %695 = vperm.xlu0 %694, %v691
    %v696 = vpop.permute.xlu0 %695
    %699 = vset.pattern.permute.xlu0 0
    %700 = vperm.xlu0 %699, %v692
    %v701 = vpop.permute.xlu0 %700
    %v703 = vmul.f32 %v696, %v306
    %v704 = vmul.f32 %v701, %v307
    %v705 = vsel %vm79, %v703, 0.0
    %v706 = vrot.slane %v705, 4
    %v707 = vadd.f32 %v705, %v706
    %v708 = vrot.slane %v707, 2
    %v709 = vadd.f32 %v707, %v708
    %v710 = vrot.slane %v709, 1
    %v711 = vadd.f32 %v709, %v710
    %v712 = vsel %vm79, %v704, 0.0
    %v713 = vrot.slane %v712, 4
    %v714 = vadd.f32 %v712, %v713
    %v715 = vrot.slane %v714, 2
    %v716 = vadd.f32 %v714, %v715
    %v717 = vrot.slane %v716, 1
    %v718 = vadd.f32 %v716, %v717
    %v719 = vadd.f32 %v442, 0.0
    %v720 = vld [vmem:[#allocation6 + $0x28] sm:$0xff]
    %v721 = vld [vmem:[#allocation6 + $0x88] sm:$0xff]
    %v722 = vld [vmem:[#allocation6 + $0xe8] sm:$0xff]
    %v723 = vld [vmem:[#allocation6 + $0x148] sm:$0xff]
    %vm726 = vcmask 1041409
    %v727 = vsel %vm726, %v718, %v711
    %v728 = vsel %vm79, %v727, 0
    %730 = vmatprep.subr.mxu0 0.0
    %731 = vmatpush1.msra.mxu0 %v720
    %732 = vmatprep.subr.mxu0 0.0
    %733 = vmatpush1.msra.mxu0 %v721
    %734 = vmatprep.subr.mxu0 0.0
    %735 = vmatpush1.msra.mxu0 %v722
    %736 = vmatprep.subr.mxu0 0.0
    %737 = vmatpush1.msra.mxu0 %v723
    %738 = vmatprep.subr.mxu0 0.0
    %739 = vmatpush1.msra.mxu0 0.0
    %740 = vmatprep.subr.mxu0 0.0
    %741 = vmatpush1.msra.mxu0 0.0
    %742 = vmatprep.subr.mxu0 0.0
    %743 = vmatpush1.msra.mxu0 0.0
    %744 = vmatprep.subr.mxu0 0.0
    %745 = vmatpush1.msra.mxu0 0.0
    %746 = vmatprep.subr.mxu0 0.0
    %747 = vmatpush1.msra.mxu0 0.0
    %748 = vmatprep.subr.mxu0 0.0
    %749 = vmatpush1.msra.mxu0 0.0
    %750 = vmatprep.subr.mxu0 0.0
    %751 = vmatpush1.msra.mxu0 0.0
    %752 = vmatprep.subr.mxu0 0.0
    %753 = vmatpush1.msra.mxu0 0.0
    %754 = vmatprep.subr.mxu0 0.0
    %755 = vmatpush1.msra.mxu0 0.0
    %756 = vmatprep.subr.mxu0 0.0
    %757 = vmatpush1.msra.mxu0 0.0
    %758 = vmatprep.subr.mxu0 0.0
    %759 = vmatpush1.msra.mxu0 0.0
    %760 = vmatprep.subr.mxu0 0.0
    %761 = vmatpush1.msra.mxu0 0.0
    %762 = vmatprep.subr.mxu0 0.0
    %763 = vmatpush1.msra.mxu0 0.0
    %764 = vmatprep.subr.mxu0 0.0
    %765 = vmatpush1.msra.mxu0 0.0
    %766 = vmatprep.subr.mxu0 0.0
    %767 = vmatpush1.msra.mxu0 0.0
    %768 = vmatprep.subr.mxu0 0.0
    %769 = vmatpush1.msra.mxu0 0.0
    %770 = vmatprep.subr.mxu0 0.0
    %771 = vmatpush1.msra.mxu0 0.0
    %772 = vmatprep.subr.mxu0 0.0
    %773 = vmatpush1.msra.mxu0 0.0
    %774 = vmatprep.subr.mxu0 0.0
    %775 = vmatpush1.msra.mxu0 0.0
    %776 = vmatprep.subr.mxu0 0.0
    %777 = vmatpush1.msra.mxu0 0.0
    %778 = vmatprep.subr.mxu0 0.0
    %779 = vmatpush1.msra.mxu0 0.0
    %780 = vmatprep.subr.mxu0 0.0
    %781 = vmatpush1.msra.mxu0 0.0
    %782 = vmatprep.subr.mxu0 0.0
    %783 = vmatpush1.msra.mxu0 0.0
    %784 = vmatprep.subr.mxu0 0.0
    %785 = vmatpush1.msra.mxu0 0.0
    %786 = vmatprep.subr.mxu0 0.0
    %787 = vmatpush1.msra.mxu0 0.0
    %788 = vmatprep.subr.mxu0 0.0
    %789 = vmatpush1.msra.mxu0 0.0
    %790 = vmatprep.subr.mxu0 0.0
    %791 = vmatpush1.msra.mxu0 0.0
    %792 = vmatprep.subr.mxu0 0.0
    %793 = vmatpush1.msra.mxu0 0.0
    %794 = vmatprep.mubr.f32.mxu0 0.0
    %795 = vmatmul.mubr.f32.gmra.mrb[0].mxu0 %v728
    %v796 = vpop.f32.mrb[0].mxu0
    %v797 = vadd.f32 0.0, %v796
    %v798 = vpop.f32.mrb[0].mxu0
    %799 = vdwg.mxu0
    %v800 = vadd.f32 %v719, %v797
    %v801 = vxor.u32 %v800, 2147483648
    %v802 = vmul.f32 %v801, 1.442695
    %v803 = vpow.pop %v802
    %v804 = vadd.f32 %v803, 1.0
    %v805 = vrcp.pop %v804
    %v806 = vmul.f32 1.0, %v805
    %v807 = vtanh.pop %v800
    %v808 = vmul.f32 %v806, 0.0
    %810 = vrot.lane.b32.xlu0 %v807, 32
    %v811 = vpop.permute.xlu0 %810
    %v813 = vmul.f32 %v806, %v811
    %815 = vrot.lane.b32.xlu0 %v813, 32
    %v816 = vpop.permute.xlu0 %815
    %v818 = vadd.f32 %v808, %v816
    %v819 = vtanh.pop %v818
    %821 = vrot.lane.b32.xlu0 %v819, 32
    %v822 = vpop.permute.xlu0 %821
    %v824 = vmul.f32 %v806, %v822
    %v825 = vld [vmem:[#allocation6 + $0x38] sm:$0xff]
    %v826 = vld [vmem:[#allocation6 + $0x40] sm:$0xff]
    %v827 = vld [vmem:[#allocation6 + $0x48] sm:$0xff]
    %v828 = vld [vmem:[#allocation6 + $0x50] sm:$0xff]
    %v829 = vld [vmem:[#allocation6 + $0x98] sm:$0xff]
    %v830 = vld [vmem:[#allocation6 + $0xa0] sm:$0xff]
    %v831 = vld [vmem:[#allocation6 + $0xa8] sm:$0xff]
    %v832 = vld [vmem:[#allocation6 + $0xb0] sm:$0xff]
    %v833 = vld [vmem:[#allocation6 + $0xf8] sm:$0xff]
    %v834 = vld [vmem:[#allocation6 + $0x100] sm:$0xff]
    %v835 = vld [vmem:[#allocation6 + $0x108] sm:$0xff]
    %v836 = vld [vmem:[#allocation6 + $0x110] sm:$0xff]
    %v837 = vld [vmem:[#allocation6 + $0x158] sm:$0xff]
    %v838 = vld [vmem:[#allocation6 + $0x160] sm:$0xff]
    %v839 = vld [vmem:[#allocation6 + $0x168] sm:$0xff]
    %v840 = vld [vmem:[#allocation6 + $0x170] sm:$0xff]
    %v841 = vld [vmem:[%s5 + $0x4] sm:$0xf]
    %v843 = vlaneseq
    %v844 = vshrl.u32 %v843, 7
    %v845 = vsub.s32 0, %v844
    %v846 = vrot.slane %v841, %v845
    %v847 = vlaneseq
    %v848 = vshrl.u32 %v847, 7
    %v849 = vsub.s32 1, %v848
    %v850 = vrot.slane %v841, %v849
    %v851 = vlaneseq
    %v852 = vshrl.u32 %v851, 7
    %v853 = vsub.s32 2, %v852
    %v854 = vrot.slane %v841, %v853
    %v855 = vlaneseq
    %v856 = vshrl.u32 %v855, 7
    %v857 = vsub.s32 3, %v856
    %v858 = vrot.slane %v841, %v857
    %864 = vrot.lane.b32.xlu0 %v824, 64
    %v865 = vpop.permute.xlu0 %864
    %v866 = vsel %vm79, %v865, 0
    %868 = vmatprep.subr.mxu0 %v826
    %869 = vmatpush1.msra.mxu0 %v825
    %870 = vmatprep.subr.mxu0 %v830
    %871 = vmatpush1.msra.mxu0 %v829
    %872 = vmatprep.subr.mxu0 %v834
    %873 = vmatpush1.msra.mxu0 %v833
    %874 = vmatprep.subr.mxu0 %v838
    %875 = vmatpush1.msra.mxu0 %v837
    %876 = vmatprep.subr.mxu0 0.0
    %877 = vmatpush1.msra.mxu0 0.0
    %878 = vmatprep.subr.mxu0 0.0
    %879 = vmatpush1.msra.mxu0 0.0
    %880 = vmatprep.subr.mxu0 0.0
    %881 = vmatpush1.msra.mxu0 0.0
    %882 = vmatprep.subr.mxu0 0.0
    %883 = vmatpush1.msra.mxu0 0.0
    %884 = vmatprep.subr.mxu0 0.0
    %885 = vmatpush1.msra.mxu0 0.0
    %886 = vmatprep.subr.mxu0 0.0
    %887 = vmatpush1.msra.mxu0 0.0
    %888 = vmatprep.subr.mxu0 0.0
    %889 = vmatpush1.msra.mxu0 0.0
    %890 = vmatprep.subr.mxu0 0.0
    %891 = vmatpush1.msra.mxu0 0.0
    %892 = vmatprep.subr.mxu0 0.0
    %893 = vmatpush1.msra.mxu0 0.0
    %894 = vmatprep.subr.mxu0 0.0
    %895 = vmatpush1.msra.mxu0 0.0
    %896 = vmatprep.subr.mxu0 0.0
    %897 = vmatpush1.msra.mxu0 0.0
    %898 = vmatprep.subr.mxu0 0.0
    %899 = vmatpush1.msra.mxu0 0.0
    %900 = vmatprep.subr.mxu0 0.0
    %901 = vmatpush1.msra.mxu0 0.0
    %902 = vmatprep.subr.mxu0 0.0
    %903 = vmatpush1.msra.mxu0 0.0
    %904 = vmatprep.subr.mxu0 0.0
    %905 = vmatpush1.msra.mxu0 0.0
    %906 = vmatprep.subr.mxu0 0.0
    %907 = vmatpush1.msra.mxu0 0.0
    %908 = vmatprep.subr.mxu0 0.0
    %909 = vmatpush1.msra.mxu0 0.0
    %910 = vmatprep.subr.mxu0 0.0
    %911 = vmatpush1.msra.mxu0 0.0
    %912 = vmatprep.subr.mxu0 0.0
    %913 = vmatpush1.msra.mxu0 0.0
    %914 = vmatprep.subr.mxu0 0.0
    %915 = vmatpush1.msra.mxu0 0.0
    %916 = vmatprep.subr.mxu0 0.0
    %917 = vmatpush1.msra.mxu0 0.0
    %918 = vmatprep.subr.mxu0 0.0
    %919 = vmatpush1.msra.mxu0 0.0
    %920 = vmatprep.subr.mxu0 0.0
    %921 = vmatpush1.msra.mxu0 0.0
    %922 = vmatprep.subr.mxu0 0.0
    %923 = vmatpush1.msra.mxu0 0.0
    %924 = vmatprep.subr.mxu0 0.0
    %925 = vmatpush1.msra.mxu0 0.0
    %926 = vmatprep.subr.mxu0 0.0
    %927 = vmatpush1.msra.mxu0 0.0
    %928 = vmatprep.subr.mxu0 0.0
    %929 = vmatpush1.msra.mxu0 0.0
    %930 = vmatprep.subr.mxu0 0.0
    %931 = vmatpush1.msra.mxu0 0.0
    %932 = vmatprep.mubr.f32.mxu0 0.0
    %933 = vmatmul.mubr.f32.gmra.mrb[0].mxu0 %v866
    %v934 = vpop.f32.mrb[0].mxu0
    %v935 = vadd.f32 %v846, %v934
    %v936 = vpop.f32.mrb[0].mxu0
    %v937 = vadd.f32 %v850, %v936
    %938 = vdwg.mxu0
    %939 = vmatprep.subr.mxu0 %v828
    %940 = vmatpush1.msra.mxu0 %v827
    %941 = vmatprep.subr.mxu0 %v832
    %942 = vmatpush1.msra.mxu0 %v831
    %943 = vmatprep.subr.mxu0 %v836
    %944 = vmatpush1.msra.mxu0 %v835
    %945 = vmatprep.subr.mxu0 %v840
    %946 = vmatpush1.msra.mxu0 %v839
    %947 = vmatprep.subr.mxu0 0.0
    %948 = vmatpush1.msra.mxu0 0.0
    %949 = vmatprep.subr.mxu0 0.0
    %950 = vmatpush1.msra.mxu0 0.0
    %951 = vmatprep.subr.mxu0 0.0
    %952 = vmatpush1.msra.mxu0 0.0
    %953 = vmatprep.subr.mxu0 0.0
    %954 = vmatpush1.msra.mxu0 0.0
    %955 = vmatprep.subr.mxu0 0.0
    %956 = vmatpush1.msra.mxu0 0.0
    %957 = vmatprep.subr.mxu0 0.0
    %958 = vmatpush1.msra.mxu0 0.0
    %959 = vmatprep.subr.mxu0 0.0
    %960 = vmatpush1.msra.mxu0 0.0
    %961 = vmatprep.subr.mxu0 0.0
    %962 = vmatpush1.msra.mxu0 0.0
    %963 = vmatprep.subr.mxu0 0.0
    %964 = vmatpush1.msra.mxu0 0.0
    %965 = vmatprep.subr.mxu0 0.0
    %966 = vmatpush1.msra.mxu0 0.0
    %967 = vmatprep.subr.mxu0 0.0
    %968 = vmatpush1.msra.mxu0 0.0
    %969 = vmatprep.subr.mxu0 0.0
    %970 = vmatpush1.msra.mxu0 0.0
    %971 = vmatprep.subr.mxu0 0.0
    %972 = vmatpush1.msra.mxu0 0.0
    %973 = vmatprep.subr.mxu0 0.0
    %974 = vmatpush1.msra.mxu0 0.0
    %975 = vmatprep.subr.mxu0 0.0
    %976 = vmatpush1.msra.mxu0 0.0
    %977 = vmatprep.subr.mxu0 0.0
    %978 = vmatpush1.msra.mxu0 0.0
    %979 = vmatprep.subr.mxu0 0.0
    %980 = vmatpush1.msra.mxu0 0.0
    %981 = vmatprep.subr.mxu0 0.0
    %982 = vmatpush1.msra.mxu0 0.0
    %983 = vmatprep.subr.mxu0 0.0
    %984 = vmatpush1.msra.mxu0 0.0
    %985 = vmatprep.subr.mxu0 0.0
    %986 = vmatpush1.msra.mxu0 0.0
    %987 = vmatprep.subr.mxu0 0.0
    %988 = vmatpush1.msra.mxu0 0.0
    %989 = vmatprep.subr.mxu0 0.0
    %990 = vmatpush1.msra.mxu0 0.0
    %991 = vmatprep.subr.mxu0 0.0
    %992 = vmatpush1.msra.mxu0 0.0
    %993 = vmatprep.subr.mxu0 0.0
    %994 = vmatpush1.msra.mxu0 0.0
    %995 = vmatprep.subr.mxu0 0.0
    %996 = vmatpush1.msra.mxu0 0.0
    %997 = vmatprep.subr.mxu0 0.0
    %998 = vmatpush1.msra.mxu0 0.0
    %999 = vmatprep.subr.mxu0 0.0
    %1000 = vmatpush1.msra.mxu0 0.0
    %1001 = vmatprep.subr.mxu0 0.0
    %1002 = vmatpush1.msra.mxu0 0.0
    %1003 = vmatprep.mubr.f32.mxu0 0.0
    %1004 = vmatmul.mubr.f32.gmra.mrb[0].mxu0 %v866
    %v1005 = vpop.f32.mrb[0].mxu0
    %v1006 = vadd.f32 %v854, %v1005
    %v1007 = vpop.f32.mrb[0].mxu0
    %v1008 = vadd.f32 %v858, %v1007
    %1009 = vdwg.mxu0
    %v1010 = vmax.f32 %v937, 0.0
    %v1013 = vunpack.c.l.s4 1966171168
    %v1014 = vunpack.c.0.s8 %v1013
    %v1015 = vlaneseq
    %v1016 = vshrl.u32 %v1015, 7
    %v1017 = vsub.s32 %v1014, %v1016
    %v1018 = vrot.slane %v937, %v1017
    %v1019 = vcombine.high %v1018, %v1018
    %v1021 = vunpack.c.l.s4 1966171168
    %v1022 = vunpack.c.0.s8 %v1021
    %v1023 = vlaneseq
    %v1024 = vshrl.u32 %v1023, 7
    %v1025 = vsub.s32 %v1022, %v1024
    %v1026 = vrot.slane %v1018, %v1025
    %v1028 = vunpack.c.l.s4 1966171168
    %v1029 = vunpack.c.0.s8 %v1028
    %v1030 = vlaneseq
    %v1031 = vshrl.u32 %v1030, 7
    %v1032 = vsub.s32 %v1029, %v1031
    %v1033 = vrot.slane %v1019, %v1032
    %v1034 = vlaneseq
    %v1035 = vshrl.u32 %v1034, 7
    %v1036 = vsub.s32 0, %v1035
    %v1037 = vrot.slane %v1026, %v1036
    %v1038 = vlaneseq
    %v1039 = vshrl.u32 %v1038, 7
    %v1040 = vsub.s32 0, %v1039
    %v1041 = vrot.slane %v1033, %v1040
    %1042 = vrot.lane.b32.xlu0 %v1037, 32
    %v1043 = vpop.permute.xlu0 %1042
    %1044 = vrot.lane.b32.xlu0 %v1041, 32
    %v1045 = vpop.permute.xlu0 %1044
    %v1048 = vadd.f32 %v593, %v1043
    %v1049 = vadd.f32 %v598, %v1045
    %v1050 = vmax.f32 %v1048, 0.0
    %v1051 = vmax.f32 %v1049, 0.0
    %v1052 = vld [vmem:[#allocation6 + $0x58] sm:$0xff]
    %v1053 = vld [vmem:[#allocation6 + $0xb8] sm:$0xff]
    %v1054 = vld [vmem:[#allocation6 + $0x118] sm:$0xff]
    %v1055 = vld [vmem:[#allocation6 + $0x178] sm:$0xff]
    %v1056 = vld [vmem:[%s5 + $0x8] sm:$0x1]
    %v1058 = vlaneseq
    %v1059 = vshrl.u32 %v1058, 7
    %v1060 = vsub.s32 0, %v1059
    %v1061 = vrot.slane %v1056, %v1060
    %1065 = vrot.lane.b32.xlu0 %v1050, 96
    %v1066 = vpop.permute.xlu0 %1065
    %1067 = vrot.lane.b32.xlu0 %v1051, 96
    %v1068 = vpop.permute.xlu0 %1067
    %v1069 = vsel %vm79, %v1066, 0
    %v1071 = vsel %vm79, %v1068, 0
    %1073 = vmatprep.subr.mxu0 0.0
    %1074 = vmatpush1.msra.mxu0 %v1052
    %1075 = vmatprep.subr.mxu0 0.0
    %1076 = vmatpush1.msra.mxu0 %v1053
    %1077 = vmatprep.subr.mxu0 0.0
    %1078 = vmatpush1.msra.mxu0 %v1054
    %1079 = vmatprep.subr.mxu0 0.0
    %1080 = vmatpush1.msra.mxu0 %v1055
    %1081 = vmatprep.subr.mxu0 0.0
    %1082 = vmatpush1.msra.mxu0 0.0
    %1083 = vmatprep.subr.mxu0 0.0
    %1084 = vmatpush1.msra.mxu0 0.0
    %1085 = vmatprep.subr.mxu0 0.0
    %1086 = vmatpush1.msra.mxu0 0.0
    %1087 = vmatprep.subr.mxu0 0.0
    %1088 = vmatpush1.msra.mxu0 0.0
    %1089 = vmatprep.subr.mxu0 0.0
    %1090 = vmatpush1.msra.mxu0 0.0
    %1091 = vmatprep.subr.mxu0 0.0
    %1092 = vmatpush1.msra.mxu0 0.0
    %1093 = vmatprep.subr.mxu0 0.0
    %1094 = vmatpush1.msra.mxu0 0.0
    %1095 = vmatprep.subr.mxu0 0.0
    %1096 = vmatpush1.msra.mxu0 0.0
    %1097 = vmatprep.subr.mxu0 0.0
    %1098 = vmatpush1.msra.mxu0 0.0
    %1099 = vmatprep.subr.mxu0 0.0
    %1100 = vmatpush1.msra.mxu0 0.0
    %1101 = vmatprep.subr.mxu0 0.0
    %1102 = vmatpush1.msra.mxu0 0.0
    %1103 = vmatprep.subr.mxu0 0.0
    %1104 = vmatpush1.msra.mxu0 0.0
    %1105 = vmatprep.subr.mxu0 0.0
    %1106 = vmatpush1.msra.mxu0 0.0
    %1107 = vmatprep.subr.mxu0 0.0
    %1108 = vmatpush1.msra.mxu0 0.0
    %1109 = vmatprep.subr.mxu0 0.0
    %1110 = vmatpush1.msra.mxu0 0.0
    %1111 = vmatprep.subr.mxu0 0.0
    %1112 = vmatpush1.msra.mxu0 0.0
    %1113 = vmatprep.subr.mxu0 0.0
    %1114 = vmatpush1.msra.mxu0 0.0
    %1115 = vmatprep.subr.mxu0 0.0
    %1116 = vmatpush1.msra.mxu0 0.0
    %1117 = vmatprep.subr.mxu0 0.0
    %1118 = vmatpush1.msra.mxu0 0.0
    %1119 = vmatprep.subr.mxu0 0.0
    %1120 = vmatpush1.msra.mxu0 0.0
    %1121 = vmatprep.subr.mxu0 0.0
    %1122 = vmatpush1.msra.mxu0 0.0
    %1123 = vmatprep.subr.mxu0 0.0
    %1124 = vmatpush1.msra.mxu0 0.0
    %1125 = vmatprep.subr.mxu0 0.0
    %1126 = vmatpush1.msra.mxu0 0.0
    %1127 = vmatprep.subr.mxu0 0.0
    %1128 = vmatpush1.msra.mxu0 0.0
    %1129 = vmatprep.subr.mxu0 0.0
    %1130 = vmatpush1.msra.mxu0 0.0
    %1131 = vmatprep.subr.mxu0 0.0
    %1132 = vmatpush1.msra.mxu0 0.0
    %1133 = vmatprep.subr.mxu0 0.0
    %1134 = vmatpush1.msra.mxu0 0.0
    %1135 = vmatprep.subr.mxu0 0.0
    %1136 = vmatpush1.msra.mxu0 0.0
    %1137 = vmatprep.mubr.f32.mxu0 0.0
    %1138 = vmatmul.mubr.f32.gmra.mrb[0].mxu0 %v1069
    %v1139 = vpop.f32.mrb[0].mxu0
    %v1140 = vadd.f32 %v1061, %v1139
    %v1141 = vpop.f32.mrb[0].mxu0
    %1142 = vmatprep.mubr.f32.mxu0 0.0
    %1143 = vmatmul.mubr.f32.gmra.mrb[0].mxu0 %v1071
    %v1144 = vpop.f32.mrb[0].mxu0
    %v1145 = vadd.f32 %v1061, %v1144
    %v1146 = vpop.f32.mrb[0].mxu0
    %1147 = vdwg.mxu0
    %v1148 = vxor.u32 %v1140, 2147483648
    %v1149 = vxor.u32 %v1145, 2147483648
    %v1150 = vmul.f32 %v1148, 1.442695
    %v1151 = vpow.pop %v1150
    %v1152 = vmul.f32 %v1149, 1.442695
    %v1153 = vpow.pop %v1152
    %v1154 = vadd.f32 %v1151, 1.0
    %v1155 = vadd.f32 %v1153, 1.0
    %v1156 = vrcp.pop %v1154
    %v1157 = vmul.f32 1.0, %v1156
    %v1158 = vrcp.pop %v1155
    %v1159 = vmul.f32 1.0, %v1158
    %v1161 = vlaneseq
    %v1162 = vshrl.u32 %v1161, 7
    %v1163 = vsub.s32 0, %v1162
    %v1164 = vrot.slane %v65, %v1163
    %1165 = vrot.lane.b32.xlu0 %v1164, 32
    %v1166 = vpop.permute.xlu0 %1165
    %v1168 = vmul.f32 %v1010, %v1166
    %1170 = vrot.lane.b32.xlu0 %v1168, 96
    %v1171 = vpop.permute.xlu0 %1170
    %vm1173 = vcmask 254976
    %v1174 = vsel %vm1173, %v1171, 0.0
    %1175 = vadd.xlane.f32.xlu0 %v1174
    %v1176 = vpop.xlane.xlu0 %1175
    %v1178 = vlaneseq
    %v1179 = vshrl.u32 %v1178, 7
    %v1180 = vsub.s32 0, %v1179
    %v1181 = vrot.slane %v66, %v1180
    %v1183 = vadd.f32 %v1176, %v1181
    %v1184 = vxor.u32 %v1183, 2147483648
    %v1185 = vmul.f32 %v1184, 1.442695
    %v1186 = vpow.pop %v1185
    %v1187 = vadd.f32 %v1186, 1.0
    %v1188 = vrcp.pop %v1187
    %v1189 = vmul.f32 1.0, %v1188
    %v1192 = vunpack.c.l.s4 1966171168
    %v1193 = vunpack.c.0.s8 %v1192
    %v1194 = vlaneseq
    %v1195 = vshrl.u32 %v1194, 7
    %v1196 = vsub.s32 %v1193, %v1195
    %v1197 = vrot.slane %v1189, %v1196
    %v1198 = vcombine.high %v1197, %v1197
    %v1200 = vunpack.c.l.s4 1966171168
    %v1201 = vunpack.c.0.s8 %v1200
    %v1202 = vlaneseq
    %v1203 = vshrl.u32 %v1202, 7
    %v1204 = vsub.s32 %v1201, %v1203
    %v1205 = vrot.slane %v1197, %v1204
    %v1207 = vunpack.c.l.s4 1966171168
    %v1208 = vunpack.c.0.s8 %v1207
    %v1209 = vlaneseq
    %v1210 = vshrl.u32 %v1209, 7
    %v1211 = vsub.s32 %v1208, %v1210
    %v1212 = vrot.slane %v1198, %v1211
    %v1213 = vlaneseq
    %v1214 = vshrl.u32 %v1213, 7
    %v1215 = vsub.s32 0, %v1214
    %v1216 = vrot.slane %v1205, %v1215
    %v1217 = vlaneseq
    %v1218 = vshrl.u32 %v1217, 7
    %v1219 = vsub.s32 0, %v1218
    %v1220 = vrot.slane %v1212, %v1219
    %v1223 = vmul.f32 %v691, %v1216
    %v1224 = vmul.f32 %v692, %v1220
    %1226 = vset.pattern.permute.xlu0 0
    %1227 = vperm.xlu0 %1226, %v1223
    %v1228 = vpop.permute.xlu0 %1227
    %1231 = vset.pattern.permute.xlu0 0
    %1232 = vperm.xlu0 %1231, %v1224
    %v1233 = vpop.permute.xlu0 %1232
    %v1235 = vmul.f32 %v1228, %v1157
    %v1236 = vmul.f32 %v1233, %v1159
    %v1237 = vsub.f32 1.0, %v1235
    %v1238 = vsub.f32 1.0, %v1236
    %v1239 = vmul.f32 %v306, %v1237
    %v1240 = vmul.f32 %v307, %v1238
    %v1241 = vmul.f32 %v1228, %v1140
    %v1242 = vmul.f32 %v1233, %v1145
    %1245 = vrot.lane.b32.xlu0 %v1241, 96
    %v1246 = vpop.permute.xlu0 %1245
    %1247 = vrot.lane.b32.xlu0 %v1242, 96
    %v1248 = vpop.permute.xlu0 %1247
    %v1251 = vadd.f32 %v1239, %v1246
    %v1252 = vadd.f32 %v1240, %v1248
    %v1254 = vcombine.low %v937, %v1006
    %v1256 = vunpack.c.l.s4 1983009808
    %v1257 = vunpack.c.0.s8 %v1256
    %v1258 = vlaneseq
    %v1259 = vshrl.u32 %v1258, 7
    %v1260 = vsub.s32 %v1257, %v1259
    %v1261 = vrot.slane %v1254, %v1260
    %1262 = vrot.lane.b32.xlu0 %v1261, 64
    %v1263 = vpop.permute.xlu0 %1262
    %v1264 = vrot.slane %v1263, 2
    %vm1265 = vcmask 523264
    %v1266 = vsel %vm1265, %v1263, %v1264
    %v1268 = vadd.f32 %v302, %v1266
    %v1270 = vcombine.low %v444, %v513
    %v1272 = vunpack.c.l.s4 1983009808
    %v1273 = vunpack.c.0.s8 %v1272
    %v1274 = vlaneseq
    %v1275 = vshrl.u32 %v1274, 7
    %v1276 = vsub.s32 %v1273, %v1275
    %v1277 = vrot.slane %v1270, %v1276
    %1278 = vrot.lane.b32.xlu0 %v1277, 96
    %v1279 = vpop.permute.xlu0 %1278
    %v1280 = vrot.slane %v1279, 2
    %vm1281 = vcmask 785408
    %v1282 = vsel %vm1281, %v1279, %v1280
    %v1284 = vadd.f32 %v1268, %v1282
    %v1285 = vxor.u32 %v1284, 2147483648
    %v1286 = vmul.f32 %v1285, 1.442695
    %v1287 = vpow.pop %v1286
    %v1288 = vadd.f32 %v1287, 1.0
    %v1289 = vrcp.pop %v1288
    %v1290 = vmul.f32 1.0, %v1289
    %v1291 = vtanh.pop %v1284
    %v1292 = vmul.f32 %v1290, %v327
    %1294 = vrot.lane.b32.xlu0 %v1291, 32
    %v1295 = vpop.permute.xlu0 %1294
    %v1297 = vmul.f32 %v1290, %v1295
    %1299 = vrot.lane.b32.xlu0 %v1297, 32
    %v1300 = vpop.permute.xlu0 %1299
    %v1302 = vadd.f32 %v1292, %v1300
    %v1303 = vtanh.pop %v1302
    %1305 = vrot.lane.b32.xlu0 %v1303, 32
    %v1306 = vpop.permute.xlu0 %1305
    %v1308 = vmul.f32 %v1290, %v1306
    %v1311 = vunpack.c.l.s4 1983009808
    %v1312 = vunpack.c.0.s8 %v1311
    %v1313 = vlaneseq
    %v1314 = vshrl.u32 %v1313, 7
    %v1315 = vsub.s32 %v1312, %v1314
    %v1316 = vrot.slane %v1308, %v1315
    %1317 = vrot.lane.b32.xlu0 %v1316, 64
    %v1318 = vpop.permute.xlu0 %1317
    %v1319 = vsel %vm79, %v1318, 0
    %1321 = vmatprep.subr.mxu0 %v335
    %1322 = vmatpush1.msra.mxu0 %v334
    %1323 = vmatprep.subr.mxu0 %v338
    %1324 = vmatpush1.msra.mxu0 %v337
    %1325 = vmatprep.subr.mxu0 %v341
    %1326 = vmatpush1.msra.mxu0 %v340
    %1327 = vmatprep.subr.mxu0 %v344
    %1328 = vmatpush1.msra.mxu0 %v343
    %1329 = vmatprep.subr.mxu0 0.0
    %1330 = vmatpush1.msra.mxu0 0.0
    %1331 = vmatprep.subr.mxu0 0.0
    %1332 = vmatpush1.msra.mxu0 0.0
    %1333 = vmatprep.subr.mxu0 0.0
    %1334 = vmatpush1.msra.mxu0 0.0
    %1335 = vmatprep.subr.mxu0 0.0
    %1336 = vmatpush1.msra.mxu0 0.0
    %1337 = vmatprep.subr.mxu0 0.0
    %1338 = vmatpush1.msra.mxu0 0.0
    %1339 = vmatprep.subr.mxu0 0.0
    %1340 = vmatpush1.msra.mxu0 0.0
    %1341 = vmatprep.subr.mxu0 0.0
    %1342 = vmatpush1.msra.mxu0 0.0
    %1343 = vmatprep.subr.mxu0 0.0
    %1344 = vmatpush1.msra.mxu0 0.0
    %1345 = vmatprep.subr.mxu0 0.0
    %1346 = vmatpush1.msra.mxu0 0.0
    %1347 = vmatprep.subr.mxu0 0.0
    %1348 = vmatpush1.msra.mxu0 0.0
    %1349 = vmatprep.subr.mxu0 0.0
    %1350 = vmatpush1.msra.mxu0 0.0
    %1351 = vmatprep.subr.mxu0 0.0
    %1352 = vmatpush1.msra.mxu0 0.0
    %1353 = vmatprep.subr.mxu0 0.0
    %1354 = vmatpush1.msra.mxu0 0.0
    %1355 = vmatprep.subr.mxu0 0.0
    %1356 = vmatpush1.msra.mxu0 0.0
    %1357 = vmatprep.subr.mxu0 0.0
    %1358 = vmatpush1.msra.mxu0 0.0
    %1359 = vmatprep.subr.mxu0 0.0
    %1360 = vmatpush1.msra.mxu0 0.0
    %1361 = vmatprep.subr.mxu0 0.0
    %1362 = vmatpush1.msra.mxu0 0.0
    %1363 = vmatprep.subr.mxu0 0.0
    %1364 = vmatpush1.msra.mxu0 0.0
    %1365 = vmatprep.subr.mxu0 0.0
    %1366 = vmatpush1.msra.mxu0 0.0
    %1367 = vmatprep.subr.mxu0 0.0
    %1368 = vmatpush1.msra.mxu0 0.0
    %1369 = vmatprep.subr.mxu0 0.0
    %1370 = vmatpush1.msra.mxu0 0.0
    %1371 = vmatprep.subr.mxu0 0.0
    %1372 = vmatpush1.msra.mxu0 0.0
    %1373 = vmatprep.subr.mxu0 0.0
    %1374 = vmatpush1.msra.mxu0 0.0
    %1375 = vmatprep.subr.mxu0 0.0
    %1376 = vmatpush1.msra.mxu0 0.0
    %1377 = vmatprep.subr.mxu0 0.0
    %1378 = vmatpush1.msra.mxu0 0.0
    %1379 = vmatprep.subr.mxu0 0.0
    %1380 = vmatpush1.msra.mxu0 0.0
    %1381 = vmatprep.subr.mxu0 0.0
    %1382 = vmatpush1.msra.mxu0 0.0
    %1383 = vmatprep.subr.mxu0 0.0
    %1384 = vmatpush1.msra.mxu0 0.0
    %1385 = vmatprep.mubr.f32.mxu0 0.0
    %1386 = vmatmul.mubr.f32.gmra.mrb[0].mxu0 %v1319
    %v1387 = vpop.f32.mrb[0].mxu0
    %v1388 = vadd.f32 %v351, %v1387
    %v1389 = vpop.f32.mrb[0].mxu0
    %v1390 = vadd.f32 %v355, %v1389
    %1391 = vdwg.mxu0
    %1392 = vmatprep.subr.mxu0 0.0
    %1393 = vmatpush1.msra.mxu0 %v336
    %1394 = vmatprep.subr.mxu0 0.0
    %1395 = vmatpush1.msra.mxu0 %v339
    %1396 = vmatprep.subr.mxu0 0.0
    %1397 = vmatpush1.msra.mxu0 %v342
    %1398 = vmatprep.subr.mxu0 0.0
    %1399 = vmatpush1.msra.mxu0 %v345
    %1400 = vmatprep.subr.mxu0 0.0
    %1401 = vmatpush1.msra.mxu0 0.0
    %1402 = vmatprep.subr.mxu0 0.0
    %1403 = vmatpush1.msra.mxu0 0.0
    %1404 = vmatprep.subr.mxu0 0.0
    %1405 = vmatpush1.msra.mxu0 0.0
    %1406 = vmatprep.subr.mxu0 0.0
    %1407 = vmatpush1.msra.mxu0 0.0
    %1408 = vmatprep.subr.mxu0 0.0
    %1409 = vmatpush1.msra.mxu0 0.0
    %1410 = vmatprep.subr.mxu0 0.0
    %1411 = vmatpush1.msra.mxu0 0.0
    %1412 = vmatprep.subr.mxu0 0.0
    %1413 = vmatpush1.msra.mxu0 0.0
    %1414 = vmatprep.subr.mxu0 0.0
    %1415 = vmatpush1.msra.mxu0 0.0
    %1416 = vmatprep.subr.mxu0 0.0
    %1417 = vmatpush1.msra.mxu0 0.0
    %1418 = vmatprep.subr.mxu0 0.0
    %1419 = vmatpush1.msra.mxu0 0.0
    %1420 = vmatprep.subr.mxu0 0.0
    %1421 = vmatpush1.msra.mxu0 0.0
    %1422 = vmatprep.subr.mxu0 0.0
    %1423 = vmatpush1.msra.mxu0 0.0
    %1424 = vmatprep.subr.mxu0 0.0
    %1425 = vmatpush1.msra.mxu0 0.0
    %1426 = vmatprep.subr.mxu0 0.0
    %1427 = vmatpush1.msra.mxu0 0.0
    %1428 = vmatprep.subr.mxu0 0.0
    %1429 = vmatpush1.msra.mxu0 0.0
    %1430 = vmatprep.subr.mxu0 0.0
    %1431 = vmatpush1.msra.mxu0 0.0
    %1432 = vmatprep.subr.mxu0 0.0
    %1433 = vmatpush1.msra.mxu0 0.0
    %1434 = vmatprep.subr.mxu0 0.0
    %1435 = vmatpush1.msra.mxu0 0.0
    %1436 = vmatprep.subr.mxu0 0.0
    %1437 = vmatpush1.msra.mxu0 0.0
    %1438 = vmatprep.subr.mxu0 0.0
    %1439 = vmatpush1.msra.mxu0 0.0
    %1440 = vmatprep.subr.mxu0 0.0
    %1441 = vmatpush1.msra.mxu0 0.0
    %1442 = vmatprep.subr.mxu0 0.0
    %1443 = vmatpush1.msra.mxu0 0.0
    %1444 = vmatprep.subr.mxu0 0.0
    %1445 = vmatpush1.msra.mxu0 0.0
    %1446 = vmatprep.subr.mxu0 0.0
    %1447 = vmatpush1.msra.mxu0 0.0
    %1448 = vmatprep.subr.mxu0 0.0
    %1449 = vmatpush1.msra.mxu0 0.0
    %1450 = vmatprep.subr.mxu0 0.0
    %1451 = vmatpush1.msra.mxu0 0.0
    %1452 = vmatprep.subr.mxu0 0.0
    %1453 = vmatpush1.msra.mxu0 0.0
    %1454 = vmatprep.subr.mxu0 0.0
    %1455 = vmatpush1.msra.mxu0 0.0
    %1456 = vmatprep.mubr.f32.mxu0 0.0
    %1457 = vmatmul.mubr.f32.gmra.mrb[0].mxu0 %v1319
    %v1458 = vpop.f32.mrb[0].mxu0
    %v1459 = vadd.f32 %v359, %v1458
    %v1460 = vpop.f32.mrb[0].mxu0
    %1461 = vdwg.mxu0
    %v1463 = vsel %vm79, %v1251, 0
    %v1466 = vsel %vm79, %v1252, 0
    %1468 = vmatprep.subr.mxu0 0.0
    %1469 = vmatpush1.msra.mxu0 %v516
    %1470 = vmatprep.subr.mxu0 0.0
    %1471 = vmatpush1.msra.mxu0 %v517
    %1472 = vmatprep.subr.mxu0 0.0
    %1473 = vmatpush1.msra.mxu0 %v518
    %1474 = vmatprep.subr.mxu0 0.0
    %1475 = vmatpush1.msra.mxu0 %v519
    %1476 = vmatprep.subr.mxu0 0.0
    %1477 = vmatpush1.msra.mxu0 0.0
    %1478 = vmatprep.subr.mxu0 0.0
    %1479 = vmatpush1.msra.mxu0 0.0
    %1480 = vmatprep.subr.mxu0 0.0
    %1481 = vmatpush1.msra.mxu0 0.0
    %1482 = vmatprep.subr.mxu0 0.0
    %1483 = vmatpush1.msra.mxu0 0.0
    %1484 = vmatprep.subr.mxu0 0.0
    %1485 = vmatpush1.msra.mxu0 0.0
    %1486 = vmatprep.subr.mxu0 0.0
    %1487 = vmatpush1.msra.mxu0 0.0
    %1488 = vmatprep.subr.mxu0 0.0
    %1489 = vmatpush1.msra.mxu0 0.0
    %1490 = vmatprep.subr.mxu0 0.0
    %1491 = vmatpush1.msra.mxu0 0.0
    %1492 = vmatprep.subr.mxu0 0.0
    %1493 = vmatpush1.msra.mxu0 0.0
    %1494 = vmatprep.subr.mxu0 0.0
    %1495 = vmatpush1.msra.mxu0 0.0
    %1496 = vmatprep.subr.mxu0 0.0
    %1497 = vmatpush1.msra.mxu0 0.0
    %1498 = vmatprep.subr.mxu0 0.0
    %1499 = vmatpush1.msra.mxu0 0.0
    %1500 = vmatprep.subr.mxu0 0.0
    %1501 = vmatpush1.msra.mxu0 0.0
    %1502 = vmatprep.subr.mxu0 0.0
    %1503 = vmatpush1.msra.mxu0 0.0
    %1504 = vmatprep.subr.mxu0 0.0
    %1505 = vmatpush1.msra.mxu0 0.0
    %1506 = vmatprep.subr.mxu0 0.0
    %1507 = vmatpush1.msra.mxu0 0.0
    %1508 = vmatprep.subr.mxu0 0.0
    %1509 = vmatpush1.msra.mxu0 0.0
    %1510 = vmatprep.subr.mxu0 0.0
    %1511 = vmatpush1.msra.mxu0 0.0
    %1512 = vmatprep.subr.mxu0 0.0
    %1513 = vmatpush1.msra.mxu0 0.0
    %1514 = vmatprep.subr.mxu0 0.0
    %1515 = vmatpush1.msra.mxu0 0.0
    %1516 = vmatprep.subr.mxu0 0.0
    %1517 = vmatpush1.msra.mxu0 0.0
    %1518 = vmatprep.subr.mxu0 0.0
    %1519 = vmatpush1.msra.mxu0 0.0
    %1520 = vmatprep.subr.mxu0 0.0
    %1521 = vmatpush1.msra.mxu0 0.0
    %1522 = vmatprep.subr.mxu0 0.0
    %1523 = vmatpush1.msra.mxu0 0.0
    %1524 = vmatprep.subr.mxu0 0.0
    %1525 = vmatpush1.msra.mxu0 0.0
    %1526 = vmatprep.subr.mxu0 0.0
    %1527 = vmatpush1.msra.mxu0 0.0
    %1528 = vmatprep.subr.mxu0 0.0
    %1529 = vmatpush1.msra.mxu0 0.0
    %1530 = vmatprep.subr.mxu0 0.0
    %1531 = vmatpush1.msra.mxu0 0.0
    %1532 = vmatprep.mubr.f32.mxu0 0.0
    %1533 = vmatmul.mubr.f32.gmra.mrb[0].mxu0 %v1463
    %v1534 = vpop.f32.mrb[0].mxu0
    %v1535 = vadd.f32 0.0, %v1534
    %v1536 = vpop.f32.mrb[0].mxu0
    %1537 = vmatprep.mubr.f32.mxu0 0.0
    %1538 = vmatmul.mubr.f32.gmra.mrb[0].mxu0 %v1466
    %v1539 = vpop.f32.mrb[0].mxu0
    %v1540 = vadd.f32 0.0, %v1539
    %v1541 = vpop.f32.mrb[0].mxu0
    %1542 = vdwg.mxu0
    %v1545 = vunpack.c.l.s4 1966171168
    %v1546 = vunpack.c.0.s8 %v1545
    %v1547 = vlaneseq
    %v1548 = vshrl.u32 %v1547, 7
    %v1549 = vsub.s32 %v1546, %v1548
    %v1550 = vrot.slane %v1390, %v1549
    %v1551 = vcombine.high %v1550, %v1550
    %v1553 = vunpack.c.l.s4 1966171168
    %v1554 = vunpack.c.0.s8 %v1553
    %v1555 = vlaneseq
    %v1556 = vshrl.u32 %v1555, 7
    %v1557 = vsub.s32 %v1554, %v1556
    %v1558 = vrot.slane %v1550, %v1557
    %v1560 = vunpack.c.l.s4 1966171168
    %v1561 = vunpack.c.0.s8 %v1560
    %v1562 = vlaneseq
    %v1563 = vshrl.u32 %v1562, 7
    %v1564 = vsub.s32 %v1561, %v1563
    %v1565 = vrot.slane %v1551, %v1564
    %v1566 = vlaneseq
    %v1567 = vshrl.u32 %v1566, 7
    %v1568 = vsub.s32 0, %v1567
    %v1569 = vrot.slane %v1558, %v1568
    %v1570 = vlaneseq
    %v1571 = vshrl.u32 %v1570, 7
    %v1572 = vsub.s32 0, %v1571
    %v1573 = vrot.slane %v1565, %v1572
    %v1576 = vadd.f32 %v1535, %v1569
    %v1577 = vadd.f32 %v1540, %v1573
    %v1578 = vtanh.pop %v1576
    %v1579 = vtanh.pop %v1577
    %v1580 = vmul.f32 %v1578, %v642
    %v1581 = vmul.f32 %v1579, %v642
    %v1582 = vsel %vm79, %v1580, 0.0
    %1583 = vadd.xlane.f32.xlu0 %v1582
    %v1584 = vpop.xlane.xlu0 %1583
    %v1585 = vsel %vm79, %v1581, 0.0
    %1586 = vadd.xlane.f32.xlu0 %v1585
    %v1587 = vpop.xlane.xlu0 %1586
    %v1588 = vadd.f32 %v1584, %v62
    %v1589 = vadd.f32 %v1587, %v63
    %v1590 = vsel %vm654, %v1588, -inf
    %v1591 = vrot.slane %v1590, 4
    %v1592 = vmax.f32 %v1590, %v1591
    %v1593 = vrot.slane %v1592, 2
    %v1594 = vmax.f32 %v1592, %v1593
    %v1595 = vrot.slane %v1594, 1
    %v1596 = vmax.f32 %v1594, %v1595
    %v1597 = vsel %vm654, %v1589, -inf
    %v1598 = vrot.slane %v1597, 4
    %v1599 = vmax.f32 %v1597, %v1598
    %v1600 = vrot.slane %v1599, 2
    %v1601 = vmax.f32 %v1599, %v1600
    %v1602 = vrot.slane %v1601, 1
    %v1603 = vmax.f32 %v1601, %v1602
    %v1604 = vsub.f32 %v1588, %v1596
    %v1605 = vsub.f32 %v1589, %v1603
    %v1606 = vmul.f32 %v1604, 1.442695
    %v1607 = vpow.pop %v1606
    %v1608 = vmul.f32 %v1605, 1.442695
    %v1609 = vpow.pop %v1608
    %v1610 = vsel %vm654, %v1607, 0.0
    %v1611 = vrot.slane %v1610, 4
    %v1612 = vadd.f32 %v1610, %v1611
    %v1613 = vrot.slane %v1612, 2
    %v1614 = vadd.f32 %v1612, %v1613
    %v1615 = vrot.slane %v1614, 1
    %v1616 = vadd.f32 %v1614, %v1615
    %v1617 = vsel %vm654, %v1609, 0.0
    %v1618 = vrot.slane %v1617, 4
    %v1619 = vadd.f32 %v1617, %v1618
    %v1620 = vrot.slane %v1619, 2
    %v1621 = vadd.f32 %v1619, %v1620
    %v1622 = vrot.slane %v1621, 1
    %v1623 = vadd.f32 %v1621, %v1622
    %v1624 = vrcp.pop %v1616
    %v1625 = vrcp.pop %v1623
    %v1626 = vmul.f32 %v1607, %v1624
    %v1627 = vmul.f32 %v1609, %v1625
    %1629 = vset.pattern.permute.xlu0 0
    %1630 = vperm.xlu0 %1629, %v1626
    %v1631 = vpop.permute.xlu0 %1630
    %1634 = vset.pattern.permute.xlu0 0
    %1635 = vperm.xlu0 %1634, %v1627
    %v1636 = vpop.permute.xlu0 %1635
    %v1638 = vmul.f32 %v1631, %v1251
    %v1639 = vmul.f32 %v1636, %v1252
    %v1640 = vsel %vm79, %v1638, 0.0
    %v1641 = vrot.slane %v1640, 4
    %v1642 = vadd.f32 %v1640, %v1641
    %v1643 = vrot.slane %v1642, 2
    %v1644 = vadd.f32 %v1642, %v1643
    %v1645 = vrot.slane %v1644, 1
    %v1646 = vadd.f32 %v1644, %v1645
    %v1647 = vsel %vm79, %v1639, 0.0
    %v1648 = vrot.slane %v1647, 4
    %v1649 = vadd.f32 %v1647, %v1648
    %v1650 = vrot.slane %v1649, 2
    %v1651 = vadd.f32 %v1649, %v1650
    %v1652 = vrot.slane %v1651, 1
    %v1653 = vadd.f32 %v1651, %v1652
    %1655 = vrot.lane.b32.xlu0 %v1006, 64
    %v1656 = vpop.permute.xlu0 %1655
    %1657 = vrot.lane.b32.xlu0 %v1008, 64
    %v1658 = vpop.permute.xlu0 %1657
    %v1659 = vsel %vm1265, %v1656, %v1658
    %v1661 = vadd.f32 %v1388, %v1659
    %v1664 = vsel %vm726, %v1653, %v1646
    %v1665 = vsel %vm79, %v1664, 0
    %1667 = vmatprep.subr.mxu0 0.0
    %1668 = vmatpush1.msra.mxu0 %v720
    %1669 = vmatprep.subr.mxu0 0.0
    %1670 = vmatpush1.msra.mxu0 %v721
    %1671 = vmatprep.subr.mxu0 0.0
    %1672 = vmatpush1.msra.mxu0 %v722
    %1673 = vmatprep.subr.mxu0 0.0
    %1674 = vmatpush1.msra.mxu0 %v723
    %1675 = vmatprep.subr.mxu0 0.0
    %1676 = vmatpush1.msra.mxu0 0.0
    %1677 = vmatprep.subr.mxu0 0.0
    %1678 = vmatpush1.msra.mxu0 0.0
    %1679 = vmatprep.subr.mxu0 0.0
    %1680 = vmatpush1.msra.mxu0 0.0
    %1681 = vmatprep.subr.mxu0 0.0
    %1682 = vmatpush1.msra.mxu0 0.0
    %1683 = vmatprep.subr.mxu0 0.0
    %1684 = vmatpush1.msra.mxu0 0.0
    %1685 = vmatprep.subr.mxu0 0.0
    %1686 = vmatpush1.msra.mxu0 0.0
    %1687 = vmatprep.subr.mxu0 0.0
    %1688 = vmatpush1.msra.mxu0 0.0
    %1689 = vmatprep.subr.mxu0 0.0
    %1690 = vmatpush1.msra.mxu0 0.0
    %1691 = vmatprep.subr.mxu0 0.0
    %1692 = vmatpush1.msra.mxu0 0.0
    %1693 = vmatprep.subr.mxu0 0.0
    %1694 = vmatpush1.msra.mxu0 0.0
    %1695 = vmatprep.subr.mxu0 0.0
    %1696 = vmatpush1.msra.mxu0 0.0
    %1697 = vmatprep.subr.mxu0 0.0
    %1698 = vmatpush1.msra.mxu0 0.0
    %1699 = vmatprep.subr.mxu0 0.0
    %1700 = vmatpush1.msra.mxu0 0.0
    %1701 = vmatprep.subr.mxu0 0.0
    %1702 = vmatpush1.msra.mxu0 0.0
    %1703 = vmatprep.subr.mxu0 0.0
    %1704 = vmatpush1.msra.mxu0 0.0
    %1705 = vmatprep.subr.mxu0 0.0
    %1706 = vmatpush1.msra.mxu0 0.0
    %1707 = vmatprep.subr.mxu0 0.0
    %1708 = vmatpush1.msra.mxu0 0.0
    %1709 = vmatprep.subr.mxu0 0.0
    %1710 = vmatpush1.msra.mxu0 0.0
    %1711 = vmatprep.subr.mxu0 0.0
    %1712 = vmatpush1.msra.mxu0 0.0
    %1713 = vmatprep.subr.mxu0 0.0
    %1714 = vmatpush1.msra.mxu0 0.0
    %1715 = vmatprep.subr.mxu0 0.0
    %1716 = vmatpush1.msra.mxu0 0.0
    %1717 = vmatprep.subr.mxu0 0.0
    %1718 = vmatpush1.msra.mxu0 0.0
    %1719 = vmatprep.subr.mxu0 0.0
    %1720 = vmatpush1.msra.mxu0 0.0
    %1721 = vmatprep.subr.mxu0 0.0
    %1722 = vmatpush1.msra.mxu0 0.0
    %1723 = vmatprep.subr.mxu0 0.0
    %1724 = vmatpush1.msra.mxu0 0.0
    %1725 = vmatprep.subr.mxu0 0.0
    %1726 = vmatpush1.msra.mxu0 0.0
    %1727 = vmatprep.subr.mxu0 0.0
    %1728 = vmatpush1.msra.mxu0 0.0
    %1729 = vmatprep.subr.mxu0 0.0
    %1730 = vmatpush1.msra.mxu0 0.0
    %1731 = vmatprep.mubr.f32.mxu0 0.0
    %1732 = vmatmul.mubr.f32.gmra.mrb[0].mxu0 %v1665
    %v1733 = vpop.f32.mrb[0].mxu0
    %v1734 = vadd.f32 0.0, %v1733
    %v1735 = vpop.f32.mrb[0].mxu0
    %1736 = vdwg.mxu0
    %v1737 = vadd.f32 %v1661, %v1734
    %v1738 = vxor.u32 %v1737, 2147483648
    %v1739 = vmul.f32 %v1738, 1.442695
    %v1740 = vpow.pop %v1739
    %v1741 = vadd.f32 %v1740, 1.0
    %v1742 = vrcp.pop %v1741
    %v1743 = vmul.f32 1.0, %v1742
    %v1744 = vtanh.pop %v1737
    %v1745 = vmul.f32 %v1743, %v818
    %1747 = vrot.lane.b32.xlu0 %v1744, 32
    %v1748 = vpop.permute.xlu0 %1747
    %v1750 = vmul.f32 %v1743, %v1748
    %1752 = vrot.lane.b32.xlu0 %v1750, 32
    %v1753 = vpop.permute.xlu0 %1752
    %v1755 = vadd.f32 %v1745, %v1753
    %v1756 = vtanh.pop %v1755
    %1758 = vrot.lane.b32.xlu0 %v1756, 32
    %v1759 = vpop.permute.xlu0 %1758
    %v1761 = vmul.f32 %v1743, %v1759
    %1763 = vrot.lane.b32.xlu0 %v1761, 64
    %v1764 = vpop.permute.xlu0 %1763
    %v1765 = vsel %vm79, %v1764, 0
    %1767 = vmatprep.subr.mxu0 %v826
    %1768 = vmatpush1.msra.mxu0 %v825
    %1769 = vmatprep.subr.mxu0 %v830
    %1770 = vmatpush1.msra.mxu0 %v829
    %1771 = vmatprep.subr.mxu0 %v834
    %1772 = vmatpush1.msra.mxu0 %v833
    %1773 = vmatprep.subr.mxu0 %v838
    %1774 = vmatpush1.msra.mxu0 %v837
    %1775 = vmatprep.subr.mxu0 0.0
    %1776 = vmatpush1.msra.mxu0 0.0
    %1777 = vmatprep.subr.mxu0 0.0
    %1778 = vmatpush1.msra.mxu0 0.0
    %1779 = vmatprep.subr.mxu0 0.0
    %1780 = vmatpush1.msra.mxu0 0.0
    %1781 = vmatprep.subr.mxu0 0.0
    %1782 = vmatpush1.msra.mxu0 0.0
    %1783 = vmatprep.subr.mxu0 0.0
    %1784 = vmatpush1.msra.mxu0 0.0
    %1785 = vmatprep.subr.mxu0 0.0
    %1786 = vmatpush1.msra.mxu0 0.0
    %1787 = vmatprep.subr.mxu0 0.0
    %1788 = vmatpush1.msra.mxu0 0.0
    %1789 = vmatprep.subr.mxu0 0.0
    %1790 = vmatpush1.msra.mxu0 0.0
    %1791 = vmatprep.subr.mxu0 0.0
    %1792 = vmatpush1.msra.mxu0 0.0
    %1793 = vmatprep.subr.mxu0 0.0
    %1794 = vmatpush1.msra.mxu0 0.0
    %1795 = vmatprep.subr.mxu0 0.0
    %1796 = vmatpush1.msra.mxu0 0.0
    %1797 = vmatprep.subr.mxu0 0.0
    %1798 = vmatpush1.msra.mxu0 0.0
    %1799 = vmatprep.subr.mxu0 0.0
    %1800 = vmatpush1.msra.mxu0 0.0
    %1801 = vmatprep.subr.mxu0 0.0
    %1802 = vmatpush1.msra.mxu0 0.0
    %1803 = vmatprep.subr.mxu0 0.0
    %1804 = vmatpush1.msra.mxu0 0.0
    %1805 = vmatprep.subr.mxu0 0.0
    %1806 = vmatpush1.msra.mxu0 0.0
    %1807 = vmatprep.subr.mxu0 0.0
    %1808 = vmatpush1.msra.mxu0 0.0
    %1809 = vmatprep.subr.mxu0 0.0
    %1810 = vmatpush1.msra.mxu0 0.0
    %1811 = vmatprep.subr.mxu0 0.0
    %1812 = vmatpush1.msra.mxu0 0.0
    %1813 = vmatprep.subr.mxu0 0.0
    %1814 = vmatpush1.msra.mxu0 0.0
    %1815 = vmatprep.subr.mxu0 0.0
    %1816 = vmatpush1.msra.mxu0 0.0
    %1817 = vmatprep.subr.mxu0 0.0
    %1818 = vmatpush1.msra.mxu0 0.0
    %1819 = vmatprep.subr.mxu0 0.0
    %1820 = vmatpush1.msra.mxu0 0.0
    %1821 = vmatprep.subr.mxu0 0.0
    %1822 = vmatpush1.msra.mxu0 0.0
    %1823 = vmatprep.subr.mxu0 0.0
    %1824 = vmatpush1.msra.mxu0 0.0
    %1825 = vmatprep.subr.mxu0 0.0
    %1826 = vmatpush1.msra.mxu0 0.0
    %1827 = vmatprep.subr.mxu0 0.0
    %1828 = vmatpush1.msra.mxu0 0.0
    %1829 = vmatprep.subr.mxu0 0.0
    %1830 = vmatpush1.msra.mxu0 0.0
    %1831 = vmatprep.mubr.f32.mxu0 0.0
    %1832 = vmatmul.mubr.f32.gmra.mrb[0].mxu0 %v1765
    %v1833 = vpop.f32.mrb[0].mxu0
    %v1834 = vadd.f32 %v846, %v1833
    %v1835 = vpop.f32.mrb[0].mxu0
    %v1836 = vadd.f32 %v850, %v1835
    %1837 = vdwg.mxu0
    %1838 = vmatprep.subr.mxu0 %v828
    %1839 = vmatpush1.msra.mxu0 %v827
    %1840 = vmatprep.subr.mxu0 %v832
    %1841 = vmatpush1.msra.mxu0 %v831
    %1842 = vmatprep.subr.mxu0 %v836
    %1843 = vmatpush1.msra.mxu0 %v835
    %1844 = vmatprep.subr.mxu0 %v840
    %1845 = vmatpush1.msra.mxu0 %v839
    %1846 = vmatprep.subr.mxu0 0.0
    %1847 = vmatpush1.msra.mxu0 0.0
    %1848 = vmatprep.subr.mxu0 0.0
    %1849 = vmatpush1.msra.mxu0 0.0
    %1850 = vmatprep.subr.mxu0 0.0
    %1851 = vmatpush1.msra.mxu0 0.0
    %1852 = vmatprep.subr.mxu0 0.0
    %1853 = vmatpush1.msra.mxu0 0.0
    %1854 = vmatprep.subr.mxu0 0.0
    %1855 = vmatpush1.msra.mxu0 0.0
    %1856 = vmatprep.subr.mxu0 0.0
    %1857 = vmatpush1.msra.mxu0 0.0
    %1858 = vmatprep.subr.mxu0 0.0
    %1859 = vmatpush1.msra.mxu0 0.0
    %1860 = vmatprep.subr.mxu0 0.0
    %1861 = vmatpush1.msra.mxu0 0.0
    %1862 = vmatprep.subr.mxu0 0.0
    %1863 = vmatpush1.msra.mxu0 0.0
    %1864 = vmatprep.subr.mxu0 0.0
    %1865 = vmatpush1.msra.mxu0 0.0
    %1866 = vmatprep.subr.mxu0 0.0
    %1867 = vmatpush1.msra.mxu0 0.0
    %1868 = vmatprep.subr.mxu0 0.0
    %1869 = vmatpush1.msra.mxu0 0.0
    %1870 = vmatprep.subr.mxu0 0.0
    %1871 = vmatpush1.msra.mxu0 0.0
    %1872 = vmatprep.subr.mxu0 0.0
    %1873 = vmatpush1.msra.mxu0 0.0
    %1874 = vmatprep.subr.mxu0 0.0
    %1875 = vmatpush1.msra.mxu0 0.0
    %1876 = vmatprep.subr.mxu0 0.0
    %1877 = vmatpush1.msra.mxu0 0.0
    %1878 = vmatprep.subr.mxu0 0.0
    %1879 = vmatpush1.msra.mxu0 0.0
    %1880 = vmatprep.subr.mxu0 0.0
    %1881 = vmatpush1.msra.mxu0 0.0
    %1882 = vmatprep.subr.mxu0 0.0
    %1883 = vmatpush1.msra.mxu0 0.0
    %1884 = vmatprep.subr.mxu0 0.0
    %1885 = vmatpush1.msra.mxu0 0.0
    %1886 = vmatprep.subr.mxu0 0.0
    %1887 = vmatpush1.msra.mxu0 0.0
    %1888 = vmatprep.subr.mxu0 0.0
    %1889 = vmatpush1.msra.mxu0 0.0
    %1890 = vmatprep.subr.mxu0 0.0
    %1891 = vmatpush1.msra.mxu0 0.0
    %1892 = vmatprep.subr.mxu0 0.0
    %1893 = vmatpush1.msra.mxu0 0.0
    %1894 = vmatprep.subr.mxu0 0.0
    %1895 = vmatpush1.msra.mxu0 0.0
    %1896 = vmatprep.subr.mxu0 0.0
    %1897 = vmatpush1.msra.mxu0 0.0
    %1898 = vmatprep.subr.mxu0 0.0
    %1899 = vmatpush1.msra.mxu0 0.0
    %1900 = vmatprep.subr.mxu0 0.0
    %1901 = vmatpush1.msra.mxu0 0.0
    %1902 = vmatprep.mubr.f32.mxu0 0.0
    %1903 = vmatmul.mubr.f32.gmra.mrb[0].mxu0 %v1765
    %v1904 = vpop.f32.mrb[0].mxu0
    %v1905 = vadd.f32 %v854, %v1904
    %v1906 = vpop.f32.mrb[0].mxu0
    %v1907 = vadd.f32 %v858, %v1906
    %1908 = vdwg.mxu0
    %v1909 = vmax.f32 %v1836, 0.0
    %v1912 = vunpack.c.l.s4 1966171168
    %v1913 = vunpack.c.0.s8 %v1912
    %v1914 = vlaneseq
    %v1915 = vshrl.u32 %v1914, 7
    %v1916 = vsub.s32 %v1913, %v1915
    %v1917 = vrot.slane %v1836, %v1916
    %v1918 = vcombine.high %v1917, %v1917
    %v1920 = vunpack.c.l.s4 1966171168
    %v1921 = vunpack.c.0.s8 %v1920
    %v1922 = vlaneseq
    %v1923 = vshrl.u32 %v1922, 7
    %v1924 = vsub.s32 %v1921, %v1923
    %v1925 = vrot.slane %v1917, %v1924
    %v1927 = vunpack.c.l.s4 1966171168
    %v1928 = vunpack.c.0.s8 %v1927
    %v1929 = vlaneseq
    %v1930 = vshrl.u32 %v1929, 7
    %v1931 = vsub.s32 %v1928, %v1930
    %v1932 = vrot.slane %v1918, %v1931
    %v1933 = vlaneseq
    %v1934 = vshrl.u32 %v1933, 7
    %v1935 = vsub.s32 0, %v1934
    %v1936 = vrot.slane %v1925, %v1935
    %v1937 = vlaneseq
    %v1938 = vshrl.u32 %v1937, 7
    %v1939 = vsub.s32 0, %v1938
    %v1940 = vrot.slane %v1932, %v1939
    %1941 = vrot.lane.b32.xlu0 %v1936, 32
    %v1942 = vpop.permute.xlu0 %1941
    %1943 = vrot.lane.b32.xlu0 %v1940, 32
    %v1944 = vpop.permute.xlu0 %1943
    %v1947 = vadd.f32 %v1535, %v1942
    %v1948 = vadd.f32 %v1540, %v1944
    %v1949 = vmax.f32 %v1947, 0.0
    %v1950 = vmax.f32 %v1948, 0.0
    %1953 = vrot.lane.b32.xlu0 %v1949, 96
    %v1954 = vpop.permute.xlu0 %1953
    %1955 = vrot.lane.b32.xlu0 %v1950, 96
    %v1956 = vpop.permute.xlu0 %1955
    %v1957 = vsel %vm79, %v1954, 0
    %v1959 = vsel %vm79, %v1956, 0
    %1961 = vmatprep.subr.mxu0 0.0
    %1962 = vmatpush1.msra.mxu0 %v1052
    %1963 = vmatprep.subr.mxu0 0.0
    %1964 = vmatpush1.msra.mxu0 %v1053
    %1965 = vmatprep.subr.mxu0 0.0
    %1966 = vmatpush1.msra.mxu0 %v1054
    %1967 = vmatprep.subr.mxu0 0.0
    %1968 = vmatpush1.msra.mxu0 %v1055
    %1969 = vmatprep.subr.mxu0 0.0
    %1970 = vmatpush1.msra.mxu0 0.0
    %1971 = vmatprep.subr.mxu0 0.0
    %1972 = vmatpush1.msra.mxu0 0.0
    %1973 = vmatprep.subr.mxu0 0.0
    %1974 = vmatpush1.msra.mxu0 0.0
    %1975 = vmatprep.subr.mxu0 0.0
    %1976 = vmatpush1.msra.mxu0 0.0
    %1977 = vmatprep.subr.mxu0 0.0
    %1978 = vmatpush1.msra.mxu0 0.0
    %1979 = vmatprep.subr.mxu0 0.0
    %1980 = vmatpush1.msra.mxu0 0.0
    %1981 = vmatprep.subr.mxu0 0.0
    %1982 = vmatpush1.msra.mxu0 0.0
    %1983 = vmatprep.subr.mxu0 0.0
    %1984 = vmatpush1.msra.mxu0 0.0
    %1985 = vmatprep.subr.mxu0 0.0
    %1986 = vmatpush1.msra.mxu0 0.0
    %1987 = vmatprep.subr.mxu0 0.0
    %1988 = vmatpush1.msra.mxu0 0.0
    %1989 = vmatprep.subr.mxu0 0.0
    %1990 = vmatpush1.msra.mxu0 0.0
    %1991 = vmatprep.subr.mxu0 0.0
    %1992 = vmatpush1.msra.mxu0 0.0
    %1993 = vmatprep.subr.mxu0 0.0
    %1994 = vmatpush1.msra.mxu0 0.0
    %1995 = vmatprep.subr.mxu0 0.0
    %1996 = vmatpush1.msra.mxu0 0.0
    %1997 = vmatprep.subr.mxu0 0.0
    %1998 = vmatpush1.msra.mxu0 0.0
    %1999 = vmatprep.subr.mxu0 0.0
    %2000 = vmatpush1.msra.mxu0 0.0
    %2001 = vmatprep.subr.mxu0 0.0
    %2002 = vmatpush1.msra.mxu0 0.0
    %2003 = vmatprep.subr.mxu0 0.0
    %2004 = vmatpush1.msra.mxu0 0.0
    %2005 = vmatprep.subr.mxu0 0.0
    %2006 = vmatpush1.msra.mxu0 0.0
    %2007 = vmatprep.subr.mxu0 0.0
    %2008 = vmatpush1.msra.mxu0 0.0
    %2009 = vmatprep.subr.mxu0 0.0
    %2010 = vmatpush1.msra.mxu0 0.0
    %2011 = vmatprep.subr.mxu0 0.0
    %2012 = vmatpush1.msra.mxu0 0.0
    %2013 = vmatprep.subr.mxu0 0.0
    %2014 = vmatpush1.msra.mxu0 0.0
    %2015 = vmatprep.subr.mxu0 0.0
    %2016 = vmatpush1.msra.mxu0 0.0
    %2017 = vmatprep.subr.mxu0 0.0
    %2018 = vmatpush1.msra.mxu0 0.0
    %2019 = vmatprep.subr.mxu0 0.0
    %2020 = vmatpush1.msra.mxu0 0.0
    %2021 = vmatprep.subr.mxu0 0.0
    %2022 = vmatpush1.msra.mxu0 0.0
    %2023 = vmatprep.subr.mxu0 0.0
    %2024 = vmatpush1.msra.mxu0 0.0
    %2025 = vmatprep.mubr.f32.mxu0 0.0
    %2026 = vmatmul.mubr.f32.gmra.mrb[0].mxu0 %v1957
    %v2027 = vpop.f32.mrb[0].mxu0
    %v2028 = vadd.f32 %v1061, %v2027
    %v2029 = vpop.f32.mrb[0].mxu0
    %2030 = vmatprep.mubr.f32.mxu0 0.0
    %2031 = vmatmul.mubr.f32.gmra.mrb[0].mxu0 %v1959
    %v2032 = vpop.f32.mrb[0].mxu0
    %v2033 = vadd.f32 %v1061, %v2032
    %v2034 = vpop.f32.mrb[0].mxu0
    %2035 = vdwg.mxu0
    %v2036 = vxor.u32 %v2028, 2147483648
    %v2037 = vxor.u32 %v2033, 2147483648
    %v2038 = vmul.f32 %v2036, 1.442695
    %v2039 = vpow.pop %v2038
    %v2040 = vmul.f32 %v2037, 1.442695
    %v2041 = vpow.pop %v2040
    %v2042 = vadd.f32 %v2039, 1.0
    %v2043 = vadd.f32 %v2041, 1.0
    %v2044 = vrcp.pop %v2042
    %v2045 = vmul.f32 1.0, %v2044
    %v2046 = vrcp.pop %v2043
    %v2047 = vmul.f32 1.0, %v2046
    %v2048 = vmul.f32 %v1909, %v1166
    %2050 = vrot.lane.b32.xlu0 %v2048, 96
    %v2051 = vpop.permute.xlu0 %2050
    %v2053 = vsel %vm1173, %v2051, 0.0
    %2054 = vadd.xlane.f32.xlu0 %v2053
    %v2055 = vpop.xlane.xlu0 %2054
    %v2056 = vadd.f32 %v2055, %v1181
    %v2057 = vxor.u32 %v2056, 2147483648
    %v2058 = vmul.f32 %v2057, 1.442695
    %v2059 = vpow.pop %v2058
    %v2060 = vadd.f32 %v2059, 1.0
    %v2061 = vrcp.pop %v2060
    %v2062 = vmul.f32 1.0, %v2061
    %v2065 = vunpack.c.l.s4 1966171168
    %v2066 = vunpack.c.0.s8 %v2065
    %v2067 = vlaneseq
    %v2068 = vshrl.u32 %v2067, 7
    %v2069 = vsub.s32 %v2066, %v2068
    %v2070 = vrot.slane %v2062, %v2069
    %v2071 = vcombine.high %v2070, %v2070
    %v2073 = vunpack.c.l.s4 1966171168
    %v2074 = vunpack.c.0.s8 %v2073
    %v2075 = vlaneseq
    %v2076 = vshrl.u32 %v2075, 7
    %v2077 = vsub.s32 %v2074, %v2076
    %v2078 = vrot.slane %v2070, %v2077
    %v2080 = vunpack.c.l.s4 1966171168
    %v2081 = vunpack.c.0.s8 %v2080
    %v2082 = vlaneseq
    %v2083 = vshrl.u32 %v2082, 7
    %v2084 = vsub.s32 %v2081, %v2083
    %v2085 = vrot.slane %v2071, %v2084
    %v2086 = vlaneseq
    %v2087 = vshrl.u32 %v2086, 7
    %v2088 = vsub.s32 0, %v2087
    %v2089 = vrot.slane %v2078, %v2088
    %v2090 = vlaneseq
    %v2091 = vshrl.u32 %v2090, 7
    %v2092 = vsub.s32 0, %v2091
    %v2093 = vrot.slane %v2085, %v2092
    %v2096 = vmul.f32 %v1626, %v2089
    %v2097 = vmul.f32 %v1627, %v2093
    %2099 = vset.pattern.permute.xlu0 0
    %2100 = vperm.xlu0 %2099, %v2096
    %v2101 = vpop.permute.xlu0 %2100
    %2104 = vset.pattern.permute.xlu0 0
    %2105 = vperm.xlu0 %2104, %v2097
    %v2106 = vpop.permute.xlu0 %2105
    %v2108 = vmul.f32 %v2101, %v2045
    %v2109 = vmul.f32 %v2106, %v2047
    %v2110 = vsub.f32 1.0, %v2108
    %v2111 = vsub.f32 1.0, %v2109
    %v2112 = vmul.f32 %v1251, %v2110
    %v2113 = vmul.f32 %v1252, %v2111
    %v2114 = vmul.f32 %v2101, %v2028
    %v2115 = vmul.f32 %v2106, %v2033
    %2118 = vrot.lane.b32.xlu0 %v2114, 96
    %v2119 = vpop.permute.xlu0 %2118
    %2120 = vrot.lane.b32.xlu0 %v2115, 96
    %v2121 = vpop.permute.xlu0 %2120
    %v2124 = vadd.f32 %v2112, %v2119
    %v2125 = vadd.f32 %v2113, %v2121
    %v2127 = vcombine.low %v1836, %v1905
    %v2129 = vunpack.c.l.s4 1983009808
    %v2130 = vunpack.c.0.s8 %v2129
    %v2131 = vlaneseq
    %v2132 = vshrl.u32 %v2131, 7
    %v2133 = vsub.s32 %v2130, %v2132
    %v2134 = vrot.slane %v2127, %v2133
    %2135 = vrot.lane.b32.xlu0 %v2134, 64
    %v2136 = vpop.permute.xlu0 %2135
    %v2137 = vrot.slane %v2136, 2
    %v2138 = vsel %vm1265, %v2136, %v2137
    %v2140 = vadd.f32 %v303, %v2138
    %v2142 = vcombine.low %v1390, %v1459
    %v2144 = vunpack.c.l.s4 1983009808
    %v2145 = vunpack.c.0.s8 %v2144
    %v2146 = vlaneseq
    %v2147 = vshrl.u32 %v2146, 7
    %v2148 = vsub.s32 %v2145, %v2147
    %v2149 = vrot.slane %v2142, %v2148
    %2150 = vrot.lane.b32.xlu0 %v2149, 96
    %v2151 = vpop.permute.xlu0 %2150
    %v2152 = vrot.slane %v2151, 2
    %v2153 = vsel %vm1281, %v2151, %v2152
    %v2155 = vadd.f32 %v2140, %v2153
    %v2156 = vxor.u32 %v2155, 2147483648
    %v2157 = vmul.f32 %v2156, 1.442695
    %v2158 = vpow.pop %v2157
    %v2159 = vadd.f32 %v2158, 1.0
    %v2160 = vrcp.pop %v2159
    %v2161 = vmul.f32 1.0, %v2160
    %v2162 = vtanh.pop %v2155
    %v2163 = vmul.f32 %v2161, %v1302
    %2165 = vrot.lane.b32.xlu0 %v2162, 32
    %v2166 = vpop.permute.xlu0 %2165
    %v2168 = vmul.f32 %v2161, %v2166
    %2170 = vrot.lane.b32.xlu0 %v2168, 32
    %v2171 = vpop.permute.xlu0 %2170
    %v2173 = vadd.f32 %v2163, %v2171
    %v2174 = vtanh.pop %v2173
    %2176 = vrot.lane.b32.xlu0 %v2174, 32
    %v2177 = vpop.permute.xlu0 %2176
    %v2179 = vmul.f32 %v2161, %v2177
    %v2182 = vunpack.c.l.s4 1983009808
    %v2183 = vunpack.c.0.s8 %v2182
    %v2184 = vlaneseq
    %v2185 = vshrl.u32 %v2184, 7
    %v2186 = vsub.s32 %v2183, %v2185
    %v2187 = vrot.slane %v2179, %v2186
    %2188 = vrot.lane.b32.xlu0 %v2187, 64
    %v2189 = vpop.permute.xlu0 %2188
    %v2190 = vsel %vm79, %v2189, 0
    %2192 = vmatprep.subr.mxu0 %v335
    %2193 = vmatpush1.msra.mxu0 %v334
    %2194 = vmatprep.subr.mxu0 %v338
    %2195 = vmatpush1.msra.mxu0 %v337
    %2196 = vmatprep.subr.mxu0 %v341
    %2197 = vmatpush1.msra.mxu0 %v340
    %2198 = vmatprep.subr.mxu0 %v344
    %2199 = vmatpush1.msra.mxu0 %v343
    %2200 = vmatprep.subr.mxu0 0.0
    %2201 = vmatpush1.msra.mxu0 0.0
    %2202 = vmatprep.subr.mxu0 0.0
    %2203 = vmatpush1.msra.mxu0 0.0
    %2204 = vmatprep.subr.mxu0 0.0
    %2205 = vmatpush1.msra.mxu0 0.0
    %2206 = vmatprep.subr.mxu0 0.0
    %2207 = vmatpush1.msra.mxu0 0.0
    %2208 = vmatprep.subr.mxu0 0.0
    %2209 = vmatpush1.msra.mxu0 0.0
    %2210 = vmatprep.subr.mxu0 0.0
    %2211 = vmatpush1.msra.mxu0 0.0
    %2212 = vmatprep.subr.mxu0 0.0
    %2213 = vmatpush1.msra.mxu0 0.0
    %2214 = vmatprep.subr.mxu0 0.0
    %2215 = vmatpush1.msra.mxu0 0.0
    %2216 = vmatprep.subr.mxu0 0.0
    %2217 = vmatpush1.msra.mxu0 0.0
    %2218 = vmatprep.subr.mxu0 0.0
    %2219 = vmatpush1.msra.mxu0 0.0
    %2220 = vmatprep.subr.mxu0 0.0
    %2221 = vmatpush1.msra.mxu0 0.0
    %2222 = vmatprep.subr.mxu0 0.0
    %2223 = vmatpush1.msra.mxu0 0.0
    %2224 = vmatprep.subr.mxu0 0.0
    %2225 = vmatpush1.msra.mxu0 0.0
    %2226 = vmatprep.subr.mxu0 0.0
    %2227 = vmatpush1.msra.mxu0 0.0
    %2228 = vmatprep.subr.mxu0 0.0
    %2229 = vmatpush1.msra.mxu0 0.0
    %2230 = vmatprep.subr.mxu0 0.0
    %2231 = vmatpush1.msra.mxu0 0.0
    %2232 = vmatprep.subr.mxu0 0.0
    %2233 = vmatpush1.msra.mxu0 0.0
    %2234 = vmatprep.subr.mxu0 0.0
    %2235 = vmatpush1.msra.mxu0 0.0
    %2236 = vmatprep.subr.mxu0 0.0
    %2237 = vmatpush1.msra.mxu0 0.0
    %2238 = vmatprep.subr.mxu0 0.0
    %2239 = vmatpush1.msra.mxu0 0.0
    %2240 = vmatprep.subr.mxu0 0.0
    %2241 = vmatpush1.msra.mxu0 0.0
    %2242 = vmatprep.subr.mxu0 0.0
    %2243 = vmatpush1.msra.mxu0 0.0
    %2244 = vmatprep.subr.mxu0 0.0
    %2245 = vmatpush1.msra.mxu0 0.0
    %2246 = vmatprep.subr.mxu0 0.0
    %2247 = vmatpush1.msra.mxu0 0.0
    %2248 = vmatprep.subr.mxu0 0.0
    %2249 = vmatpush1.msra.mxu0 0.0
    %2250 = vmatprep.subr.mxu0 0.0
    %2251 = vmatpush1.msra.mxu0 0.0
    %2252 = vmatprep.subr.mxu0 0.0
    %2253 = vmatpush1.msra.mxu0 0.0
    %2254 = vmatprep.subr.mxu0 0.0
    %2255 = vmatpush1.msra.mxu0 0.0
    %2256 = vmatprep.mubr.f32.mxu0 0.0
    %2257 = vmatmul.mubr.f32.gmra.mrb[0].mxu0 %v2190
    %v2258 = vpop.f32.mrb[0].mxu0
    %v2259 = vadd.f32 %v351, %v2258
    %v2260 = vpop.f32.mrb[0].mxu0
    %v2261 = vadd.f32 %v355, %v2260
    %2262 = vdwg.mxu0
    %2263 = vmatprep.subr.mxu0 0.0
    %2264 = vmatpush1.msra.mxu0 %v336
    %2265 = vmatprep.subr.mxu0 0.0
    %2266 = vmatpush1.msra.mxu0 %v339
    %2267 = vmatprep.subr.mxu0 0.0
    %2268 = vmatpush1.msra.mxu0 %v342
    %2269 = vmatprep.subr.mxu0 0.0
    %2270 = vmatpush1.msra.mxu0 %v345
    %2271 = vmatprep.subr.mxu0 0.0
    %2272 = vmatpush1.msra.mxu0 0.0
    %2273 = vmatprep.subr.mxu0 0.0
    %2274 = vmatpush1.msra.mxu0 0.0
    %2275 = vmatprep.subr.mxu0 0.0
    %2276 = vmatpush1.msra.mxu0 0.0
    %2277 = vmatprep.subr.mxu0 0.0
    %2278 = vmatpush1.msra.mxu0 0.0
    %2279 = vmatprep.subr.mxu0 0.0
    %2280 = vmatpush1.msra.mxu0 0.0
    %2281 = vmatprep.subr.mxu0 0.0
    %2282 = vmatpush1.msra.mxu0 0.0
    %2283 = vmatprep.subr.mxu0 0.0
    %2284 = vmatpush1.msra.mxu0 0.0
    %2285 = vmatprep.subr.mxu0 0.0
    %2286 = vmatpush1.msra.mxu0 0.0
    %2287 = vmatprep.subr.mxu0 0.0
    %2288 = vmatpush1.msra.mxu0 0.0
    %2289 = vmatprep.subr.mxu0 0.0
    %2290 = vmatpush1.msra.mxu0 0.0
    %2291 = vmatprep.subr.mxu0 0.0
    %2292 = vmatpush1.msra.mxu0 0.0
    %2293 = vmatprep.subr.mxu0 0.0
    %2294 = vmatpush1.msra.mxu0 0.0
    %2295 = vmatprep.subr.mxu0 0.0
    %2296 = vmatpush1.msra.mxu0 0.0
    %2297 = vmatprep.subr.mxu0 0.0
    %2298 = vmatpush1.msra.mxu0 0.0
    %2299 = vmatprep.subr.mxu0 0.0
    %2300 = vmatpush1.msra.mxu0 0.0
    %2301 = vmatprep.subr.mxu0 0.0
    %2302 = vmatpush1.msra.mxu0 0.0
    %2303 = vmatprep.subr.mxu0 0.0
    %2304 = vmatpush1.msra.mxu0 0.0
    %2305 = vmatprep.subr.mxu0 0.0
    %2306 = vmatpush1.msra.mxu0 0.0
    %2307 = vmatprep.subr.mxu0 0.0
    %2308 = vmatpush1.msra.mxu0 0.0
    %2309 = vmatprep.subr.mxu0 0.0
    %2310 = vmatpush1.msra.mxu0 0.0
    %2311 = vmatprep.subr.mxu0 0.0
    %2312 = vmatpush1.msra.mxu0 0.0
    %2313 = vmatprep.subr.mxu0 0.0
    %2314 = vmatpush1.msra.mxu0 0.0
    %2315 = vmatprep.subr.mxu0 0.0
    %2316 = vmatpush1.msra.mxu0 0.0
    %2317 = vmatprep.subr.mxu0 0.0
    %2318 = vmatpush1.msra.mxu0 0.0
    %2319 = vmatprep.subr.mxu0 0.0
    %2320 = vmatpush1.msra.mxu0 0.0
    %2321 = vmatprep.subr.mxu0 0.0
    %2322 = vmatpush1.msra.mxu0 0.0
    %2323 = vmatprep.subr.mxu0 0.0
    %2324 = vmatpush1.msra.mxu0 0.0
    %2325 = vmatprep.subr.mxu0 0.0
    %2326 = vmatpush1.msra.mxu0 0.0
    %2327 = vmatprep.mubr.f32.mxu0 0.0
    %2328 = vmatmul.mubr.f32.gmra.mrb[0].mxu0 %v2190
    %v2329 = vpop.f32.mrb[0].mxu0
    %v2330 = vadd.f32 %v359, %v2329
    %v2331 = vpop.f32.mrb[0].mxu0
    %2332 = vdwg.mxu0
    %v2334 = vsel %vm79, %v2124, 0
    %v2337 = vsel %vm79, %v2125, 0
    %2339 = vmatprep.subr.mxu0 0.0
    %2340 = vmatpush1.msra.mxu0 %v516
    %2341 = vmatprep.subr.mxu0 0.0
    %2342 = vmatpush1.msra.mxu0 %v517
    %2343 = vmatprep.subr.mxu0 0.0
    %2344 = vmatpush1.msra.mxu0 %v518
    %2345 = vmatprep.subr.mxu0 0.0
    %2346 = vmatpush1.msra.mxu0 %v519
    %2347 = vmatprep.subr.mxu0 0.0
    %2348 = vmatpush1.msra.mxu0 0.0
    %2349 = vmatprep.subr.mxu0 0.0
    %2350 = vmatpush1.msra.mxu0 0.0
    %2351 = vmatprep.subr.mxu0 0.0
    %2352 = vmatpush1.msra.mxu0 0.0
    %2353 = vmatprep.subr.mxu0 0.0
    %2354 = vmatpush1.msra.mxu0 0.0
    %2355 = vmatprep.subr.mxu0 0.0
    %2356 = vmatpush1.msra.mxu0 0.0
    %2357 = vmatprep.subr.mxu0 0.0
    %2358 = vmatpush1.msra.mxu0 0.0
    %2359 = vmatprep.subr.mxu0 0.0
    %2360 = vmatpush1.msra.mxu0 0.0
    %2361 = vmatprep.subr.mxu0 0.0
    %2362 = vmatpush1.msra.mxu0 0.0
    %2363 = vmatprep.subr.mxu0 0.0
    %2364 = vmatpush1.msra.mxu0 0.0
    %2365 = vmatprep.subr.mxu0 0.0
    %2366 = vmatpush1.msra.mxu0 0.0
    %2367 = vmatprep.subr.mxu0 0.0
    %2368 = vmatpush1.msra.mxu0 0.0
    %2369 = vmatprep.subr.mxu0 0.0
    %2370 = vmatpush1.msra.mxu0 0.0
    %2371 = vmatprep.subr.mxu0 0.0
    %2372 = vmatpush1.msra.mxu0 0.0
    %2373 = vmatprep.subr.mxu0 0.0
    %2374 = vmatpush1.msra.mxu0 0.0
    %2375 = vmatprep.subr.mxu0 0.0
    %2376 = vmatpush1.msra.mxu0 0.0
    %2377 = vmatprep.subr.mxu0 0.0
    %2378 = vmatpush1.msra.mxu0 0.0
    %2379 = vmatprep.subr.mxu0 0.0
    %2380 = vmatpush1.msra.mxu0 0.0
    %2381 = vmatprep.subr.mxu0 0.0
    %2382 = vmatpush1.msra.mxu0 0.0
    %2383 = vmatprep.subr.mxu0 0.0
    %2384 = vmatpush1.msra.mxu0 0.0
    %2385 = vmatprep.subr.mxu0 0.0
    %2386 = vmatpush1.msra.mxu0 0.0
    %2387 = vmatprep.subr.mxu0 0.0
    %2388 = vmatpush1.msra.mxu0 0.0
    %2389 = vmatprep.subr.mxu0 0.0
    %2390 = vmatpush1.msra.mxu0 0.0
    %2391 = vmatprep.subr.mxu0 0.0
    %2392 = vmatpush1.msra.mxu0 0.0
    %2393 = vmatprep.subr.mxu0 0.0
    %2394 = vmatpush1.msra.mxu0 0.0
    %2395 = vmatprep.subr.mxu0 0.0
    %2396 = vmatpush1.msra.mxu0 0.0
    %2397 = vmatprep.subr.mxu0 0.0
    %2398 = vmatpush1.msra.mxu0 0.0
    %2399 = vmatprep.subr.mxu0 0.0
    %2400 = vmatpush1.msra.mxu0 0.0
    %2401 = vmatprep.subr.mxu0 0.0
    %2402 = vmatpush1.msra.mxu0 0.0
    %2403 = vmatprep.mubr.f32.mxu0 0.0
    %2404 = vmatmul.mubr.f32.gmra.mrb[0].mxu0 %v2334
    %v2405 = vpop.f32.mrb[0].mxu0
    %v2406 = vadd.f32 0.0, %v2405
    %v2407 = vpop.f32.mrb[0].mxu0
    %2408 = vmatprep.mubr.f32.mxu0 0.0
    %2409 = vmatmul.mubr.f32.gmra.mrb[0].mxu0 %v2337
    %v2410 = vpop.f32.mrb[0].mxu0
    %v2411 = vadd.f32 0.0, %v2410
    %v2412 = vpop.f32.mrb[0].mxu0
    %2413 = vdwg.mxu0
    %v2416 = vunpack.c.l.s4 1966171168
    %v2417 = vunpack.c.0.s8 %v2416
    %v2418 = vlaneseq
    %v2419 = vshrl.u32 %v2418, 7
    %v2420 = vsub.s32 %v2417, %v2419
    %v2421 = vrot.slane %v2261, %v2420
    %v2422 = vcombine.high %v2421, %v2421
    %v2424 = vunpack.c.l.s4 1966171168
    %v2425 = vunpack.c.0.s8 %v2424
    %v2426 = vlaneseq
    %v2427 = vshrl.u32 %v2426, 7
    %v2428 = vsub.s32 %v2425, %v2427
    %v2429 = vrot.slane %v2421, %v2428
    %v2431 = vunpack.c.l.s4 1966171168
    %v2432 = vunpack.c.0.s8 %v2431
    %v2433 = vlaneseq
    %v2434 = vshrl.u32 %v2433, 7
    %v2435 = vsub.s32 %v2432, %v2434
    %v2436 = vrot.slane %v2422, %v2435
    %v2437 = vlaneseq
    %v2438 = vshrl.u32 %v2437, 7
    %v2439 = vsub.s32 0, %v2438
    %v2440 = vrot.slane %v2429, %v2439
    %v2441 = vlaneseq
    %v2442 = vshrl.u32 %v2441, 7
    %v2443 = vsub.s32 0, %v2442
    %v2444 = vrot.slane %v2436, %v2443
    %v2447 = vadd.f32 %v2406, %v2440
    %v2448 = vadd.f32 %v2411, %v2444
    %v2449 = vtanh.pop %v2447
    %v2450 = vtanh.pop %v2448
    %v2451 = vmul.f32 %v2449, %v642
    %v2452 = vmul.f32 %v2450, %v642
    %v2453 = vsel %vm79, %v2451, 0.0
    %2454 = vadd.xlane.f32.xlu0 %v2453
    %v2455 = vpop.xlane.xlu0 %2454
    %v2456 = vsel %vm79, %v2452, 0.0
    %2457 = vadd.xlane.f32.xlu0 %v2456
    %v2458 = vpop.xlane.xlu0 %2457
    %v2459 = vadd.f32 %v2455, %v62
    %v2460 = vadd.f32 %v2458, %v63
    %v2461 = vsel %vm654, %v2459, -inf
    %v2462 = vrot.slane %v2461, 4
    %v2463 = vmax.f32 %v2461, %v2462
    %v2464 = vrot.slane %v2463, 2
    %v2465 = vmax.f32 %v2463, %v2464
    %v2466 = vrot.slane %v2465, 1
    %v2467 = vmax.f32 %v2465, %v2466
    %v2468 = vsel %vm654, %v2460, -inf
    %v2469 = vrot.slane %v2468, 4
    %v2470 = vmax.f32 %v2468, %v2469
    %v2471 = vrot.slane %v2470, 2
    %v2472 = vmax.f32 %v2470, %v2471
    %v2473 = vrot.slane %v2472, 1
    %v2474 = vmax.f32 %v2472, %v2473
    %v2475 = vsub.f32 %v2459, %v2467
    %v2476 = vsub.f32 %v2460, %v2474
    %v2477 = vmul.f32 %v2475, 1.442695
    %v2478 = vpow.pop %v2477
    %v2479 = vmul.f32 %v2476, 1.442695
    %v2480 = vpow.pop %v2479
    %v2481 = vsel %vm654, %v2478, 0.0
    %v2482 = vrot.slane %v2481, 4
    %v2483 = vadd.f32 %v2481, %v2482
    %v2484 = vrot.slane %v2483, 2
    %v2485 = vadd.f32 %v2483, %v2484
    %v2486 = vrot.slane %v2485, 1
    %v2487 = vadd.f32 %v2485, %v2486
    %v2488 = vsel %vm654, %v2480, 0.0
    %v2489 = vrot.slane %v2488, 4
    %v2490 = vadd.f32 %v2488, %v2489
    %v2491 = vrot.slane %v2490, 2
    %v2492 = vadd.f32 %v2490, %v2491
    %v2493 = vrot.slane %v2492, 1
    %v2494 = vadd.f32 %v2492, %v2493
    %v2495 = vrcp.pop %v2487
    %v2496 = vrcp.pop %v2494
    %v2497 = vmul.f32 %v2478, %v2495
    %v2498 = vmul.f32 %v2480, %v2496
    %2500 = vset.pattern.permute.xlu0 0
    %2501 = vperm.xlu0 %2500, %v2497
    %v2502 = vpop.permute.xlu0 %2501
    %2505 = vset.pattern.permute.xlu0 0
    %2506 = vperm.xlu0 %2505, %v2498
    %v2507 = vpop.permute.xlu0 %2506
    %v2509 = vmul.f32 %v2502, %v2124
    %v2510 = vmul.f32 %v2507, %v2125
    %v2511 = vsel %vm79, %v2509, 0.0
    %v2512 = vrot.slane %v2511, 4
    %v2513 = vadd.f32 %v2511, %v2512
    %v2514 = vrot.slane %v2513, 2
    %v2515 = vadd.f32 %v2513, %v2514
    %v2516 = vrot.slane %v2515, 1
    %v2517 = vadd.f32 %v2515, %v2516
    %v2518 = vsel %vm79, %v2510, 0.0
    %v2519 = vrot.slane %v2518, 4
    %v2520 = vadd.f32 %v2518, %v2519
    %v2521 = vrot.slane %v2520, 2
    %v2522 = vadd.f32 %v2520, %v2521
    %v2523 = vrot.slane %v2522, 1
    %v2524 = vadd.f32 %v2522, %v2523
    %2526 = vrot.lane.b32.xlu0 %v1905, 64
    %v2527 = vpop.permute.xlu0 %2526
    %2528 = vrot.lane.b32.xlu0 %v1907, 64
    %v2529 = vpop.permute.xlu0 %2528
    %v2530 = vsel %vm1265, %v2527, %v2529
    %v2532 = vadd.f32 %v2259, %v2530
    %v2535 = vsel %vm726, %v2524, %v2517
    %v2536 = vsel %vm79, %v2535, 0
    %2538 = vmatprep.subr.mxu0 0.0
    %2539 = vmatpush1.msra.mxu0 %v720
    %2540 = vmatprep.subr.mxu0 0.0
    %2541 = vmatpush1.msra.mxu0 %v721
    %2542 = vmatprep.subr.mxu0 0.0
    %2543 = vmatpush1.msra.mxu0 %v722
    %2544 = vmatprep.subr.mxu0 0.0
    %2545 = vmatpush1.msra.mxu0 %v723
    %2546 = vmatprep.subr.mxu0 0.0
    %2547 = vmatpush1.msra.mxu0 0.0
    %2548 = vmatprep.subr.mxu0 0.0
    %2549 = vmatpush1.msra.mxu0 0.0
    %2550 = vmatprep.subr.mxu0 0.0
    %2551 = vmatpush1.msra.mxu0 0.0
    %2552 = vmatprep.subr.mxu0 0.0
    %2553 = vmatpush1.msra.mxu0 0.0
    %2554 = vmatprep.subr.mxu0 0.0
    %2555 = vmatpush1.msra.mxu0 0.0
    %2556 = vmatprep.subr.mxu0 0.0
    %2557 = vmatpush1.msra.mxu0 0.0
    %2558 = vmatprep.subr.mxu0 0.0
    %2559 = vmatpush1.msra.mxu0 0.0
    %2560 = vmatprep.subr.mxu0 0.0
    %2561 = vmatpush1.msra.mxu0 0.0
    %2562 = vmatprep.subr.mxu0 0.0
    %2563 = vmatpush1.msra.mxu0 0.0
    %2564 = vmatprep.subr.mxu0 0.0
    %2565 = vmatpush1.msra.mxu0 0.0
    %2566 = vmatprep.subr.mxu0 0.0
    %2567 = vmatpush1.msra.mxu0 0.0
    %2568 = vmatprep.subr.mxu0 0.0
    %2569 = vmatpush1.msra.mxu0 0.0
    %2570 = vmatprep.subr.mxu0 0.0
    %2571 = vmatpush1.msra.mxu0 0.0
    %2572 = vmatprep.subr.mxu0 0.0
    %2573 = vmatpush1.msra.mxu0 0.0
    %2574 = vmatprep.subr.mxu0 0.0
    %2575 = vmatpush1.msra.mxu0 0.0
    %2576 = vmatprep.subr.mxu0 0.0
    %2577 = vmatpush1.msra.mxu0 0.0
    %2578 = vmatprep.subr.mxu0 0.0
    %2579 = vmatpush1.msra.mxu0 0.0
    %2580 = vmatprep.subr.mxu0 0.0
    %2581 = vmatpush1.msra.mxu0 0.0
    %2582 = vmatprep.subr.mxu0 0.0
    %2583 = vmatpush1.msra.mxu0 0.0
    %2584 = vmatprep.subr.mxu0 0.0
    %2585 = vmatpush1.msra.mxu0 0.0
    %2586 = vmatprep.subr.mxu0 0.0
    %2587 = vmatpush1.msra.mxu0 0.0
    %2588 = vmatprep.subr.mxu0 0.0
    %2589 = vmatpush1.msra.mxu0 0.0
    %2590 = vmatprep.subr.mxu0 0.0
    %2591 = vmatpush1.msra.mxu0 0.0
    %2592 = vmatprep.subr.mxu0 0.0
    %2593 = vmatpush1.msra.mxu0 0.0
    %2594 = vmatprep.subr.mxu0 0.0
    %2595 = vmatpush1.msra.mxu0 0.0
    %2596 = vmatprep.subr.mxu0 0.0
    %2597 = vmatpush1.msra.mxu0 0.0
    %2598 = vmatprep.subr.mxu0 0.0
    %2599 = vmatpush1.msra.mxu0 0.0
    %2600 = vmatprep.subr.mxu0 0.0
    %2601 = vmatpush1.msra.mxu0 0.0
    %2602 = vmatprep.mubr.f32.mxu0 0.0
    %2603 = vmatmul.mubr.f32.gmra.mrb[0].mxu0 %v2536
    %v2604 = vpop.f32.mrb[0].mxu0
    %v2605 = vadd.f32 0.0, %v2604
    %v2606 = vpop.f32.mrb[0].mxu0
    %2607 = vdwg.mxu0
    %v2608 = vadd.f32 %v2532, %v2605
    %v2609 = vxor.u32 %v2608, 2147483648
    %v2610 = vmul.f32 %v2609, 1.442695
    %v2611 = vpow.pop %v2610
    %v2612 = vadd.f32 %v2611, 1.0
    %v2613 = vrcp.pop %v2612
    %v2614 = vmul.f32 1.0, %v2613
    %v2615 = vtanh.pop %v2608
    %v2616 = vmul.f32 %v2614, %v1755
    %2618 = vrot.lane.b32.xlu0 %v2615, 32
    %v2619 = vpop.permute.xlu0 %2618
    %v2621 = vmul.f32 %v2614, %v2619
    %2623 = vrot.lane.b32.xlu0 %v2621, 32
    %v2624 = vpop.permute.xlu0 %2623
    %v2626 = vadd.f32 %v2616, %v2624
    %v2627 = vtanh.pop %v2626
    %2629 = vrot.lane.b32.xlu0 %v2627, 32
    %v2630 = vpop.permute.xlu0 %2629
    %v2632 = vmul.f32 %v2614, %v2630
    %2634 = vrot.lane.b32.xlu0 %v2632, 64
    %v2635 = vpop.permute.xlu0 %2634
    %v2636 = vsel %vm79, %v2635, 0
    %2638 = vmatprep.subr.mxu0 %v826
    %2639 = vmatpush1.msra.mxu0 %v825
    %2640 = vmatprep.subr.mxu0 %v830
    %2641 = vmatpush1.msra.mxu0 %v829
    %2642 = vmatprep.subr.mxu0 %v834
    %2643 = vmatpush1.msra.mxu0 %v833
    %2644 = vmatprep.subr.mxu0 %v838
    %2645 = vmatpush1.msra.mxu0 %v837
    %2646 = vmatprep.subr.mxu0 0.0
    %2647 = vmatpush1.msra.mxu0 0.0
    %2648 = vmatprep.subr.mxu0 0.0
    %2649 = vmatpush1.msra.mxu0 0.0
    %2650 = vmatprep.subr.mxu0 0.0
    %2651 = vmatpush1.msra.mxu0 0.0
    %2652 = vmatprep.subr.mxu0 0.0
    %2653 = vmatpush1.msra.mxu0 0.0
    %2654 = vmatprep.subr.mxu0 0.0
    %2655 = vmatpush1.msra.mxu0 0.0
    %2656 = vmatprep.subr.mxu0 0.0
    %2657 = vmatpush1.msra.mxu0 0.0
    %2658 = vmatprep.subr.mxu0 0.0
    %2659 = vmatpush1.msra.mxu0 0.0
    %2660 = vmatprep.subr.mxu0 0.0
    %2661 = vmatpush1.msra.mxu0 0.0
    %2662 = vmatprep.subr.mxu0 0.0
    %2663 = vmatpush1.msra.mxu0 0.0
    %2664 = vmatprep.subr.mxu0 0.0
    %2665 = vmatpush1.msra.mxu0 0.0
    %2666 = vmatprep.subr.mxu0 0.0
    %2667 = vmatpush1.msra.mxu0 0.0
    %2668 = vmatprep.subr.mxu0 0.0
    %2669 = vmatpush1.msra.mxu0 0.0
    %2670 = vmatprep.subr.mxu0 0.0
    %2671 = vmatpush1.msra.mxu0 0.0
    %2672 = vmatprep.subr.mxu0 0.0
    %2673 = vmatpush1.msra.mxu0 0.0
    %2674 = vmatprep.subr.mxu0 0.0
    %2675 = vmatpush1.msra.mxu0 0.0
    %2676 = vmatprep.subr.mxu0 0.0
    %2677 = vmatpush1.msra.mxu0 0.0
    %2678 = vmatprep.subr.mxu0 0.0
    %2679 = vmatpush1.msra.mxu0 0.0
    %2680 = vmatprep.subr.mxu0 0.0
    %2681 = vmatpush1.msra.mxu0 0.0
    %2682 = vmatprep.subr.mxu0 0.0
    %2683 = vmatpush1.msra.mxu0 0.0
    %2684 = vmatprep.subr.mxu0 0.0
    %2685 = vmatpush1.msra.mxu0 0.0
    %2686 = vmatprep.subr.mxu0 0.0
    %2687 = vmatpush1.msra.mxu0 0.0
    %2688 = vmatprep.subr.mxu0 0.0
    %2689 = vmatpush1.msra.mxu0 0.0
    %2690 = vmatprep.subr.mxu0 0.0
    %2691 = vmatpush1.msra.mxu0 0.0
    %2692 = vmatprep.subr.mxu0 0.0
    %2693 = vmatpush1.msra.mxu0 0.0
    %2694 = vmatprep.subr.mxu0 0.0
    %2695 = vmatpush1.msra.mxu0 0.0
    %2696 = vmatprep.subr.mxu0 0.0
    %2697 = vmatpush1.msra.mxu0 0.0
    %2698 = vmatprep.subr.mxu0 0.0
    %2699 = vmatpush1.msra.mxu0 0.0
    %2700 = vmatprep.subr.mxu0 0.0
    %2701 = vmatpush1.msra.mxu0 0.0
    %2702 = vmatprep.mubr.f32.mxu0 0.0
    %2703 = vmatmul.mubr.f32.gmra.mrb[0].mxu0 %v2636
    %v2704 = vpop.f32.mrb[0].mxu0
    %v2705 = vadd.f32 %v846, %v2704
    %v2706 = vpop.f32.mrb[0].mxu0
    %v2707 = vadd.f32 %v850, %v2706
    %2708 = vdwg.mxu0
    %2709 = vmatprep.subr.mxu0 %v828
    %2710 = vmatpush1.msra.mxu0 %v827
    %2711 = vmatprep.subr.mxu0 %v832
    %2712 = vmatpush1.msra.mxu0 %v831
    %2713 = vmatprep.subr.mxu0 %v836
    %2714 = vmatpush1.msra.mxu0 %v835
    %2715 = vmatprep.subr.mxu0 %v840
    %2716 = vmatpush1.msra.mxu0 %v839
    %2717 = vmatprep.subr.mxu0 0.0
    %2718 = vmatpush1.msra.mxu0 0.0
    %2719 = vmatprep.subr.mxu0 0.0
    %2720 = vmatpush1.msra.mxu0 0.0
    %2721 = vmatprep.subr.mxu0 0.0
    %2722 = vmatpush1.msra.mxu0 0.0
    %2723 = vmatprep.subr.mxu0 0.0
    %2724 = vmatpush1.msra.mxu0 0.0
    %2725 = vmatprep.subr.mxu0 0.0
    %2726 = vmatpush1.msra.mxu0 0.0
    %2727 = vmatprep.subr.mxu0 0.0
    %2728 = vmatpush1.msra.mxu0 0.0
    %2729 = vmatprep.subr.mxu0 0.0
    %2730 = vmatpush1.msra.mxu0 0.0
    %2731 = vmatprep.subr.mxu0 0.0
    %2732 = vmatpush1.msra.mxu0 0.0
    %2733 = vmatprep.subr.mxu0 0.0
    %2734 = vmatpush1.msra.mxu0 0.0
    %2735 = vmatprep.subr.mxu0 0.0
    %2736 = vmatpush1.msra.mxu0 0.0
    %2737 = vmatprep.subr.mxu0 0.0
    %2738 = vmatpush1.msra.mxu0 0.0
    %2739 = vmatprep.subr.mxu0 0.0
    %2740 = vmatpush1.msra.mxu0 0.0
    %2741 = vmatprep.subr.mxu0 0.0
    %2742 = vmatpush1.msra.mxu0 0.0
    %2743 = vmatprep.subr.mxu0 0.0
    %2744 = vmatpush1.msra.mxu0 0.0
    %2745 = vmatprep.subr.mxu0 0.0
    %2746 = vmatpush1.msra.mxu0 0.0
    %2747 = vmatprep.subr.mxu0 0.0
    %2748 = vmatpush1.msra.mxu0 0.0
    %2749 = vmatprep.subr.mxu0 0.0
    %2750 = vmatpush1.msra.mxu0 0.0
    %2751 = vmatprep.subr.mxu0 0.0
    %2752 = vmatpush1.msra.mxu0 0.0
    %2753 = vmatprep.subr.mxu0 0.0
    %2754 = vmatpush1.msra.mxu0 0.0
    %2755 = vmatprep.subr.mxu0 0.0
    %2756 = vmatpush1.msra.mxu0 0.0
    %2757 = vmatprep.subr.mxu0 0.0
    %2758 = vmatpush1.msra.mxu0 0.0
    %2759 = vmatprep.subr.mxu0 0.0
    %2760 = vmatpush1.msra.mxu0 0.0
    %2761 = vmatprep.subr.mxu0 0.0
    %2762 = vmatpush1.msra.mxu0 0.0
    %2763 = vmatprep.subr.mxu0 0.0
    %2764 = vmatpush1.msra.mxu0 0.0
    %2765 = vmatprep.subr.mxu0 0.0
    %2766 = vmatpush1.msra.mxu0 0.0
    %2767 = vmatprep.subr.mxu0 0.0
    %2768 = vmatpush1.msra.mxu0 0.0
    %2769 = vmatprep.subr.mxu0 0.0
    %2770 = vmatpush1.msra.mxu0 0.0
    %2771 = vmatprep.subr.mxu0 0.0
    %2772 = vmatpush1.msra.mxu0 0.0
    %2773 = vmatprep.mubr.f32.mxu0 0.0
    %2774 = vmatmul.mubr.f32.gmra.mrb[0].mxu0 %v2636
    %v2775 = vpop.f32.mrb[0].mxu0
    %v2776 = vadd.f32 %v854, %v2775
    %v2777 = vpop.f32.mrb[0].mxu0
    %v2778 = vadd.f32 %v858, %v2777
    %2779 = vdwg.mxu0
    %v2780 = vmax.f32 %v2707, 0.0
    %v2783 = vunpack.c.l.s4 1966171168
    %v2784 = vunpack.c.0.s8 %v2783
    %v2785 = vlaneseq
    %v2786 = vshrl.u32 %v2785, 7
    %v2787 = vsub.s32 %v2784, %v2786
    %v2788 = vrot.slane %v2707, %v2787
    %v2789 = vcombine.high %v2788, %v2788
    %v2791 = vunpack.c.l.s4 1966171168
    %v2792 = vunpack.c.0.s8 %v2791
    %v2793 = vlaneseq
    %v2794 = vshrl.u32 %v2793, 7
    %v2795 = vsub.s32 %v2792, %v2794
    %v2796 = vrot.slane %v2788, %v2795
    %v2798 = vunpack.c.l.s4 1966171168
    %v2799 = vunpack.c.0.s8 %v2798
    %v2800 = vlaneseq
    %v2801 = vshrl.u32 %v2800, 7
    %v2802 = vsub.s32 %v2799, %v2801
    %v2803 = vrot.slane %v2789, %v2802
    %v2804 = vlaneseq
    %v2805 = vshrl.u32 %v2804, 7
    %v2806 = vsub.s32 0, %v2805
    %v2807 = vrot.slane %v2796, %v2806
    %v2808 = vlaneseq
    %v2809 = vshrl.u32 %v2808, 7
    %v2810 = vsub.s32 0, %v2809
    %v2811 = vrot.slane %v2803, %v2810
    %2812 = vrot.lane.b32.xlu0 %v2807, 32
    %v2813 = vpop.permute.xlu0 %2812
    %2814 = vrot.lane.b32.xlu0 %v2811, 32
    %v2815 = vpop.permute.xlu0 %2814
    %v2818 = vadd.f32 %v2406, %v2813
    %v2819 = vadd.f32 %v2411, %v2815
    %v2820 = vmax.f32 %v2818, 0.0
    %v2821 = vmax.f32 %v2819, 0.0
    %2824 = vrot.lane.b32.xlu0 %v2820, 96
    %v2825 = vpop.permute.xlu0 %2824
    %2826 = vrot.lane.b32.xlu0 %v2821, 96
    %v2827 = vpop.permute.xlu0 %2826
    %v2828 = vsel %vm79, %v2825, 0
    %v2830 = vsel %vm79, %v2827, 0
    %2832 = vmatprep.subr.mxu0 0.0
    %2833 = vmatpush1.msra.mxu0 %v1052
    %2834 = vmatprep.subr.mxu0 0.0
    %2835 = vmatpush1.msra.mxu0 %v1053
    %2836 = vmatprep.subr.mxu0 0.0
    %2837 = vmatpush1.msra.mxu0 %v1054
    %2838 = vmatprep.subr.mxu0 0.0
    %2839 = vmatpush1.msra.mxu0 %v1055
    %2840 = vmatprep.subr.mxu0 0.0
    %2841 = vmatpush1.msra.mxu0 0.0
    %2842 = vmatprep.subr.mxu0 0.0
    %2843 = vmatpush1.msra.mxu0 0.0
    %2844 = vmatprep.subr.mxu0 0.0
    %2845 = vmatpush1.msra.mxu0 0.0
    %2846 = vmatprep.subr.mxu0 0.0
    %2847 = vmatpush1.msra.mxu0 0.0
    %2848 = vmatprep.subr.mxu0 0.0
    %2849 = vmatpush1.msra.mxu0 0.0
    %2850 = vmatprep.subr.mxu0 0.0
    %2851 = vmatpush1.msra.mxu0 0.0
    %2852 = vmatprep.subr.mxu0 0.0
    %2853 = vmatpush1.msra.mxu0 0.0
    %2854 = vmatprep.subr.mxu0 0.0
    %2855 = vmatpush1.msra.mxu0 0.0
    %2856 = vmatprep.subr.mxu0 0.0
    %2857 = vmatpush1.msra.mxu0 0.0
    %2858 = vmatprep.subr.mxu0 0.0
    %2859 = vmatpush1.msra.mxu0 0.0
    %2860 = vmatprep.subr.mxu0 0.0
    %2861 = vmatpush1.msra.mxu0 0.0
    %2862 = vmatprep.subr.mxu0 0.0
    %2863 = vmatpush1.msra.mxu0 0.0
    %2864 = vmatprep.subr.mxu0 0.0
    %2865 = vmatpush1.msra.mxu0 0.0
    %2866 = vmatprep.subr.mxu0 0.0
    %2867 = vmatpush1.msra.mxu0 0.0
    %2868 = vmatprep.subr.mxu0 0.0
    %2869 = vmatpush1.msra.mxu0 0.0
    %2870 = vmatprep.subr.mxu0 0.0
    %2871 = vmatpush1.msra.mxu0 0.0
    %2872 = vmatprep.subr.mxu0 0.0
    %2873 = vmatpush1.msra.mxu0 0.0
    %2874 = vmatprep.subr.mxu0 0.0
    %2875 = vmatpush1.msra.mxu0 0.0
    %2876 = vmatprep.subr.mxu0 0.0
    %2877 = vmatpush1.msra.mxu0 0.0
    %2878 = vmatprep.subr.mxu0 0.0
    %2879 = vmatpush1.msra.mxu0 0.0
    %2880 = vmatprep.subr.mxu0 0.0
    %2881 = vmatpush1.msra.mxu0 0.0
    %2882 = vmatprep.subr.mxu0 0.0
    %2883 = vmatpush1.msra.mxu0 0.0
    %2884 = vmatprep.subr.mxu0 0.0
    %2885 = vmatpush1.msra.mxu0 0.0
    %2886 = vmatprep.subr.mxu0 0.0
    %2887 = vmatpush1.msra.mxu0 0.0
    %2888 = vmatprep.subr.mxu0 0.0
    %2889 = vmatpush1.msra.mxu0 0.0
    %2890 = vmatprep.subr.mxu0 0.0
    %2891 = vmatpush1.msra.mxu0 0.0
    %2892 = vmatprep.subr.mxu0 0.0
    %2893 = vmatpush1.msra.mxu0 0.0
    %2894 = vmatprep.subr.mxu0 0.0
    %2895 = vmatpush1.msra.mxu0 0.0
    %2896 = vmatprep.mubr.f32.mxu0 0.0
    %2897 = vmatmul.mubr.f32.gmra.mrb[0].mxu0 %v2828
    %v2898 = vpop.f32.mrb[0].mxu0
    %v2899 = vadd.f32 %v1061, %v2898
    %v2900 = vpop.f32.mrb[0].mxu0
    %2901 = vmatprep.mubr.f32.mxu0 0.0
    %2902 = vmatmul.mubr.f32.gmra.mrb[0].mxu0 %v2830
    %v2903 = vpop.f32.mrb[0].mxu0
    %v2904 = vadd.f32 %v1061, %v2903
    %v2905 = vpop.f32.mrb[0].mxu0
    %2906 = vdwg.mxu0
    %v2907 = vxor.u32 %v2899, 2147483648
    %v2908 = vxor.u32 %v2904, 2147483648
    %v2909 = vmul.f32 %v2907, 1.442695
    %v2910 = vpow.pop %v2909
    %v2911 = vmul.f32 %v2908, 1.442695
    %v2912 = vpow.pop %v2911
    %v2913 = vadd.f32 %v2910, 1.0
    %v2914 = vadd.f32 %v2912, 1.0
    %v2915 = vrcp.pop %v2913
    %v2916 = vmul.f32 1.0, %v2915
    %v2917 = vrcp.pop %v2914
    %v2918 = vmul.f32 1.0, %v2917
    %v2919 = vmul.f32 %v2780, %v1166
    %2921 = vrot.lane.b32.xlu0 %v2919, 96
    %v2922 = vpop.permute.xlu0 %2921
    %v2924 = vsel %vm1173, %v2922, 0.0
    %2925 = vadd.xlane.f32.xlu0 %v2924
    %v2926 = vpop.xlane.xlu0 %2925
    %v2927 = vadd.f32 %v2926, %v1181
    %v2928 = vxor.u32 %v2927, 2147483648
    %v2929 = vmul.f32 %v2928, 1.442695
    %v2930 = vpow.pop %v2929
    %v2931 = vadd.f32 %v2930, 1.0
    %v2932 = vrcp.pop %v2931
    %v2933 = vmul.f32 1.0, %v2932
    %v2936 = vunpack.c.l.s4 1966171168
    %v2937 = vunpack.c.0.s8 %v2936
    %v2938 = vlaneseq
    %v2939 = vshrl.u32 %v2938, 7
    %v2940 = vsub.s32 %v2937, %v2939
    %v2941 = vrot.slane %v2933, %v2940
    %v2942 = vcombine.high %v2941, %v2941
    %v2944 = vunpack.c.l.s4 1966171168
    %v2945 = vunpack.c.0.s8 %v2944
    %v2946 = vlaneseq
    %v2947 = vshrl.u32 %v2946, 7
    %v2948 = vsub.s32 %v2945, %v2947
    %v2949 = vrot.slane %v2941, %v2948
    %v2951 = vunpack.c.l.s4 1966171168
    %v2952 = vunpack.c.0.s8 %v2951
    %v2953 = vlaneseq
    %v2954 = vshrl.u32 %v2953, 7
    %v2955 = vsub.s32 %v2952, %v2954
    %v2956 = vrot.slane %v2942, %v2955
    %v2957 = vlaneseq
    %v2958 = vshrl.u32 %v2957, 7
    %v2959 = vsub.s32 0, %v2958
    %v2960 = vrot.slane %v2949, %v2959
    %v2961 = vlaneseq
    %v2962 = vshrl.u32 %v2961, 7
    %v2963 = vsub.s32 0, %v2962
    %v2964 = vrot.slane %v2956, %v2963
    %v2967 = vmul.f32 %v2497, %v2960
    %v2968 = vmul.f32 %v2498, %v2964
    %2970 = vset.pattern.permute.xlu0 0
    %2971 = vperm.xlu0 %2970, %v2967
    %v2972 = vpop.permute.xlu0 %2971
    %2975 = vset.pattern.permute.xlu0 0
    %2976 = vperm.xlu0 %2975, %v2968
    %v2977 = vpop.permute.xlu0 %2976
    %v2979 = vmul.f32 %v2972, %v2916
    %v2980 = vmul.f32 %v2977, %v2918
    %v2981 = vsub.f32 1.0, %v2979
    %v2982 = vsub.f32 1.0, %v2980
    %v2983 = vmul.f32 %v2124, %v2981
    %v2984 = vmul.f32 %v2125, %v2982
    %v2985 = vmul.f32 %v2972, %v2899
    %v2986 = vmul.f32 %v2977, %v2904
    %2989 = vrot.lane.b32.xlu0 %v2985, 96
    %v2990 = vpop.permute.xlu0 %2989
    %2991 = vrot.lane.b32.xlu0 %v2986, 96
    %v2992 = vpop.permute.xlu0 %2991
    %v2995 = vadd.f32 %v2983, %v2990
    %v2996 = vadd.f32 %v2984, %v2992
    %v2998 = vcombine.low %v2707, %v2776
    %v3000 = vunpack.c.l.s4 1983009808
    %v3001 = vunpack.c.0.s8 %v3000
    %v3002 = vlaneseq
    %v3003 = vshrl.u32 %v3002, 7
    %v3004 = vsub.s32 %v3001, %v3003
    %v3005 = vrot.slane %v2998, %v3004
    %3006 = vrot.lane.b32.xlu0 %v3005, 64
    %v3007 = vpop.permute.xlu0 %3006
    %v3008 = vrot.slane %v3007, 2
    %v3009 = vsel %vm1265, %v3007, %v3008
    %v3011 = vadd.f32 %v304, %v3009
    %v3013 = vcombine.low %v2261, %v2330
    %v3015 = vunpack.c.l.s4 1983009808
    %v3016 = vunpack.c.0.s8 %v3015
    %v3017 = vlaneseq
    %v3018 = vshrl.u32 %v3017, 7
    %v3019 = vsub.s32 %v3016, %v3018
    %v3020 = vrot.slane %v3013, %v3019
    %3021 = vrot.lane.b32.xlu0 %v3020, 96
    %v3022 = vpop.permute.xlu0 %3021
    %v3023 = vrot.slane %v3022, 2
    %v3024 = vsel %vm1281, %v3022, %v3023
    %v3026 = vadd.f32 %v3011, %v3024
    %v3027 = vxor.u32 %v3026, 2147483648
    %v3028 = vmul.f32 %v3027, 1.442695
    %v3029 = vpow.pop %v3028
    %v3030 = vadd.f32 %v3029, 1.0
    %v3031 = vrcp.pop %v3030
    %v3032 = vmul.f32 1.0, %v3031
    %v3033 = vtanh.pop %v3026
    %v3034 = vmul.f32 %v3032, %v2173
    %3036 = vrot.lane.b32.xlu0 %v3033, 32
    %v3037 = vpop.permute.xlu0 %3036
    %v3039 = vmul.f32 %v3032, %v3037
    %3041 = vrot.lane.b32.xlu0 %v3039, 32
    %v3042 = vpop.permute.xlu0 %3041
    %v3044 = vadd.f32 %v3034, %v3042
    %v3045 = vtanh.pop %v3044
    %3047 = vrot.lane.b32.xlu0 %v3045, 32
    %v3048 = vpop.permute.xlu0 %3047
    %v3050 = vmul.f32 %v3032, %v3048
    %v3053 = vunpack.c.l.s4 1983009808
    %v3054 = vunpack.c.0.s8 %v3053
    %v3055 = vlaneseq
    %v3056 = vshrl.u32 %v3055, 7
    %v3057 = vsub.s32 %v3054, %v3056
    %v3058 = vrot.slane %v3050, %v3057
    %3059 = vrot.lane.b32.xlu0 %v3058, 64
    %v3060 = vpop.permute.xlu0 %3059
    %v3061 = vsel %vm79, %v3060, 0
    %3063 = vmatprep.subr.mxu0 %v335
    %3064 = vmatpush1.msra.mxu0 %v334
    %3065 = vmatprep.subr.mxu0 %v338
    %3066 = vmatpush1.msra.mxu0 %v337
    %3067 = vmatprep.subr.mxu0 %v341
    %3068 = vmatpush1.msra.mxu0 %v340
    %3069 = vmatprep.subr.mxu0 %v344
    %3070 = vmatpush1.msra.mxu0 %v343
    %3071 = vmatprep.subr.mxu0 0.0
    %3072 = vmatpush1.msra.mxu0 0.0
    %3073 = vmatprep.subr.mxu0 0.0
    %3074 = vmatpush1.msra.mxu0 0.0
    %3075 = vmatprep.subr.mxu0 0.0
    %3076 = vmatpush1.msra.mxu0 0.0
    %3077 = vmatprep.subr.mxu0 0.0
    %3078 = vmatpush1.msra.mxu0 0.0
    %3079 = vmatprep.subr.mxu0 0.0
    %3080 = vmatpush1.msra.mxu0 0.0
    %3081 = vmatprep.subr.mxu0 0.0
    %3082 = vmatpush1.msra.mxu0 0.0
    %3083 = vmatprep.subr.mxu0 0.0
    %3084 = vmatpush1.msra.mxu0 0.0
    %3085 = vmatprep.subr.mxu0 0.0
    %3086 = vmatpush1.msra.mxu0 0.0
    %3087 = vmatprep.subr.mxu0 0.0
    %3088 = vmatpush1.msra.mxu0 0.0
    %3089 = vmatprep.subr.mxu0 0.0
    %3090 = vmatpush1.msra.mxu0 0.0
    %3091 = vmatprep.subr.mxu0 0.0
    %3092 = vmatpush1.msra.mxu0 0.0
    %3093 = vmatprep.subr.mxu0 0.0
    %3094 = vmatpush1.msra.mxu0 0.0
    %3095 = vmatprep.subr.mxu0 0.0
    %3096 = vmatpush1.msra.mxu0 0.0
    %3097 = vmatprep.subr.mxu0 0.0
    %3098 = vmatpush1.msra.mxu0 0.0
    %3099 = vmatprep.subr.mxu0 0.0
    %3100 = vmatpush1.msra.mxu0 0.0
    %3101 = vmatprep.subr.mxu0 0.0
    %3102 = vmatpush1.msra.mxu0 0.0
    %3103 = vmatprep.subr.mxu0 0.0
    %3104 = vmatpush1.msra.mxu0 0.0
    %3105 = vmatprep.subr.mxu0 0.0
    %3106 = vmatpush1.msra.mxu0 0.0
    %3107 = vmatprep.subr.mxu0 0.0
    %3108 = vmatpush1.msra.mxu0 0.0
    %3109 = vmatprep.subr.mxu0 0.0
    %3110 = vmatpush1.msra.mxu0 0.0
    %3111 = vmatprep.subr.mxu0 0.0
    %3112 = vmatpush1.msra.mxu0 0.0
    %3113 = vmatprep.subr.mxu0 0.0
    %3114 = vmatpush1.msra.mxu0 0.0
    %3115 = vmatprep.subr.mxu0 0.0
    %3116 = vmatpush1.msra.mxu0 0.0
    %3117 = vmatprep.subr.mxu0 0.0
    %3118 = vmatpush1.msra.mxu0 0.0
    %3119 = vmatprep.subr.mxu0 0.0
    %3120 = vmatpush1.msra.mxu0 0.0
    %3121 = vmatprep.subr.mxu0 0.0
    %3122 = vmatpush1.msra.mxu0 0.0
    %3123 = vmatprep.subr.mxu0 0.0
    %3124 = vmatpush1.msra.mxu0 0.0
    %3125 = vmatprep.subr.mxu0 0.0
    %3126 = vmatpush1.msra.mxu0 0.0
    %3127 = vmatprep.mubr.f32.mxu0 0.0
    %3128 = vmatmul.mubr.f32.gmra.mrb[0].mxu0 %v3061
    %v3129 = vpop.f32.mrb[0].mxu0
    %v3130 = vadd.f32 %v351, %v3129
    %v3131 = vpop.f32.mrb[0].mxu0
    %v3132 = vadd.f32 %v355, %v3131
    %3133 = vdwg.mxu0
    %3134 = vmatprep.subr.mxu0 0.0
    %3135 = vmatpush1.msra.mxu0 %v336
    %3136 = vmatprep.subr.mxu0 0.0
    %3137 = vmatpush1.msra.mxu0 %v339
    %3138 = vmatprep.subr.mxu0 0.0
    %3139 = vmatpush1.msra.mxu0 %v342
    %3140 = vmatprep.subr.mxu0 0.0
    %3141 = vmatpush1.msra.mxu0 %v345
    %3142 = vmatprep.subr.mxu0 0.0
    %3143 = vmatpush1.msra.mxu0 0.0
    %3144 = vmatprep.subr.mxu0 0.0
    %3145 = vmatpush1.msra.mxu0 0.0
    %3146 = vmatprep.subr.mxu0 0.0
    %3147 = vmatpush1.msra.mxu0 0.0
    %3148 = vmatprep.subr.mxu0 0.0
    %3149 = vmatpush1.msra.mxu0 0.0
    %3150 = vmatprep.subr.mxu0 0.0
    %3151 = vmatpush1.msra.mxu0 0.0
    %3152 = vmatprep.subr.mxu0 0.0
    %3153 = vmatpush1.msra.mxu0 0.0
    %3154 = vmatprep.subr.mxu0 0.0
    %3155 = vmatpush1.msra.mxu0 0.0
    %3156 = vmatprep.subr.mxu0 0.0
    %3157 = vmatpush1.msra.mxu0 0.0
    %3158 = vmatprep.subr.mxu0 0.0
    %3159 = vmatpush1.msra.mxu0 0.0
    %3160 = vmatprep.subr.mxu0 0.0
    %3161 = vmatpush1.msra.mxu0 0.0
    %3162 = vmatprep.subr.mxu0 0.0
    %3163 = vmatpush1.msra.mxu0 0.0
    %3164 = vmatprep.subr.mxu0 0.0
    %3165 = vmatpush1.msra.mxu0 0.0
    %3166 = vmatprep.subr.mxu0 0.0
    %3167 = vmatpush1.msra.mxu0 0.0
    %3168 = vmatprep.subr.mxu0 0.0
    %3169 = vmatpush1.msra.mxu0 0.0
    %3170 = vmatprep.subr.mxu0 0.0
    %3171 = vmatpush1.msra.mxu0 0.0
    %3172 = vmatprep.subr.mxu0 0.0
    %3173 = vmatpush1.msra.mxu0 0.0
    %3174 = vmatprep.subr.mxu0 0.0
    %3175 = vmatpush1.msra.mxu0 0.0
    %3176 = vmatprep.subr.mxu0 0.0
    %3177 = vmatpush1.msra.mxu0 0.0
    %3178 = vmatprep.subr.mxu0 0.0
    %3179 = vmatpush1.msra.mxu0 0.0
    %3180 = vmatprep.subr.mxu0 0.0
    %3181 = vmatpush1.msra.mxu0 0.0
    %3182 = vmatprep.subr.mxu0 0.0
    %3183 = vmatpush1.msra.mxu0 0.0
    %3184 = vmatprep.subr.mxu0 0.0
    %3185 = vmatpush1.msra.mxu0 0.0
    %3186 = vmatprep.subr.mxu0 0.0
    %3187 = vmatpush1.msra.mxu0 0.0
    %3188 = vmatprep.subr.mxu0 0.0
    %3189 = vmatpush1.msra.mxu0 0.0
    %3190 = vmatprep.subr.mxu0 0.0
    %3191 = vmatpush1.msra.mxu0 0.0
    %3192 = vmatprep.subr.mxu0 0.0
    %3193 = vmatpush1.msra.mxu0 0.0
    %3194 = vmatprep.subr.mxu0 0.0
    %3195 = vmatpush1.msra.mxu0 0.0
    %3196 = vmatprep.subr.mxu0 0.0
    %3197 = vmatpush1.msra.mxu0 0.0
    %3198 = vmatprep.mubr.f32.mxu0 0.0
    %3199 = vmatmul.mubr.f32.gmra.mrb[0].mxu0 %v3061
    %v3200 = vpop.f32.mrb[0].mxu0
    %v3201 = vadd.f32 %v359, %v3200
    %v3202 = vpop.f32.mrb[0].mxu0
    %3203 = vdwg.mxu0
    %v3205 = vsel %vm79, %v2995, 0
    %v3208 = vsel %vm79, %v2996, 0
    %3210 = vmatprep.subr.mxu0 0.0
    %3211 = vmatpush1.msra.mxu0 %v516
    %3212 = vmatprep.subr.mxu0 0.0
    %3213 = vmatpush1.msra.mxu0 %v517
    %3214 = vmatprep.subr.mxu0 0.0
    %3215 = vmatpush1.msra.mxu0 %v518
    %3216 = vmatprep.subr.mxu0 0.0
    %3217 = vmatpush1.msra.mxu0 %v519
    %3218 = vmatprep.subr.mxu0 0.0
    %3219 = vmatpush1.msra.mxu0 0.0
    %3220 = vmatprep.subr.mxu0 0.0
    %3221 = vmatpush1.msra.mxu0 0.0
    %3222 = vmatprep.subr.mxu0 0.0
    %3223 = vmatpush1.msra.mxu0 0.0
    %3224 = vmatprep.subr.mxu0 0.0
    %3225 = vmatpush1.msra.mxu0 0.0
    %3226 = vmatprep.subr.mxu0 0.0
    %3227 = vmatpush1.msra.mxu0 0.0
    %3228 = vmatprep.subr.mxu0 0.0
    %3229 = vmatpush1.msra.mxu0 0.0
    %3230 = vmatprep.subr.mxu0 0.0
    %3231 = vmatpush1.msra.mxu0 0.0
    %3232 = vmatprep.subr.mxu0 0.0
    %3233 = vmatpush1.msra.mxu0 0.0
    %3234 = vmatprep.subr.mxu0 0.0
    %3235 = vmatpush1.msra.mxu0 0.0
    %3236 = vmatprep.subr.mxu0 0.0
    %3237 = vmatpush1.msra.mxu0 0.0
    %3238 = vmatprep.subr.mxu0 0.0
    %3239 = vmatpush1.msra.mxu0 0.0
    %3240 = vmatprep.subr.mxu0 0.0
    %3241 = vmatpush1.msra.mxu0 0.0
    %3242 = vmatprep.subr.mxu0 0.0
    %3243 = vmatpush1.msra.mxu0 0.0
    %3244 = vmatprep.subr.mxu0 0.0
    %3245 = vmatpush1.msra.mxu0 0.0
    %3246 = vmatprep.subr.mxu0 0.0
    %3247 = vmatpush1.msra.mxu0 0.0
    %3248 = vmatprep.subr.mxu0 0.0
    %3249 = vmatpush1.msra.mxu0 0.0
    %3250 = vmatprep.subr.mxu0 0.0
    %3251 = vmatpush1.msra.mxu0 0.0
    %3252 = vmatprep.subr.mxu0 0.0
    %3253 = vmatpush1.msra.mxu0 0.0
    %3254 = vmatprep.subr.mxu0 0.0
    %3255 = vmatpush1.msra.mxu0 0.0
    %3256 = vmatprep.subr.mxu0 0.0
    %3257 = vmatpush1.msra.mxu0 0.0
    %3258 = vmatprep.subr.mxu0 0.0
    %3259 = vmatpush1.msra.mxu0 0.0
    %3260 = vmatprep.subr.mxu0 0.0
    %3261 = vmatpush1.msra.mxu0 0.0
    %3262 = vmatprep.subr.mxu0 0.0
    %3263 = vmatpush1.msra.mxu0 0.0
    %3264 = vmatprep.subr.mxu0 0.0
    %3265 = vmatpush1.msra.mxu0 0.0
    %3266 = vmatprep.subr.mxu0 0.0
    %3267 = vmatpush1.msra.mxu0 0.0
    %3268 = vmatprep.subr.mxu0 0.0
    %3269 = vmatpush1.msra.mxu0 0.0
    %3270 = vmatprep.subr.mxu0 0.0
    %3271 = vmatpush1.msra.mxu0 0.0
    %3272 = vmatprep.subr.mxu0 0.0
    %3273 = vmatpush1.msra.mxu0 0.0
    %3274 = vmatprep.mubr.f32.mxu0 0.0
    %3275 = vmatmul.mubr.f32.gmra.mrb[0].mxu0 %v3205
    %v3276 = vpop.f32.mrb[0].mxu0
    %v3277 = vadd.f32 0.0, %v3276
    %v3278 = vpop.f32.mrb[0].mxu0
    %3279 = vmatprep.mubr.f32.mxu0 0.0
    %3280 = vmatmul.mubr.f32.gmra.mrb[0].mxu0 %v3208
    %v3281 = vpop.f32.mrb[0].mxu0
    %v3282 = vadd.f32 0.0, %v3281
    %v3283 = vpop.f32.mrb[0].mxu0
    %3284 = vdwg.mxu0
    %v3287 = vunpack.c.l.s4 1966171168
    %v3288 = vunpack.c.0.s8 %v3287
    %v3289 = vlaneseq
    %v3290 = vshrl.u32 %v3289, 7
    %v3291 = vsub.s32 %v3288, %v3290
    %v3292 = vrot.slane %v3132, %v3291
    %v3293 = vcombine.high %v3292, %v3292
    %v3295 = vunpack.c.l.s4 1966171168
    %v3296 = vunpack.c.0.s8 %v3295
    %v3297 = vlaneseq
    %v3298 = vshrl.u32 %v3297, 7
    %v3299 = vsub.s32 %v3296, %v3298
    %v3300 = vrot.slane %v3292, %v3299
    %v3302 = vunpack.c.l.s4 1966171168
    %v3303 = vunpack.c.0.s8 %v3302
    %v3304 = vlaneseq
    %v3305 = vshrl.u32 %v3304, 7
    %v3306 = vsub.s32 %v3303, %v3305
    %v3307 = vrot.slane %v3293, %v3306
    %v3308 = vlaneseq
    %v3309 = vshrl.u32 %v3308, 7
    %v3310 = vsub.s32 0, %v3309
    %v3311 = vrot.slane %v3300, %v3310
    %v3312 = vlaneseq
    %v3313 = vshrl.u32 %v3312, 7
    %v3314 = vsub.s32 0, %v3313
    %v3315 = vrot.slane %v3307, %v3314
    %v3318 = vadd.f32 %v3277, %v3311
    %v3319 = vadd.f32 %v3282, %v3315
    %v3320 = vtanh.pop %v3318
    %v3321 = vtanh.pop %v3319
    %v3322 = vmul.f32 %v3320, %v642
    %v3323 = vmul.f32 %v3321, %v642
    %v3324 = vsel %vm79, %v3322, 0.0
    %3325 = vadd.xlane.f32.xlu0 %v3324
    %v3326 = vpop.xlane.xlu0 %3325
    %v3327 = vsel %vm79, %v3323, 0.0
    %3328 = vadd.xlane.f32.xlu0 %v3327
    %v3329 = vpop.xlane.xlu0 %3328
    %v3330 = vadd.f32 %v3326, %v62
    %v3331 = vadd.f32 %v3329, %v63
    %v3332 = vsel %vm654, %v3330, -inf
    %v3333 = vrot.slane %v3332, 4
    %v3334 = vmax.f32 %v3332, %v3333
    %v3335 = vrot.slane %v3334, 2
    %v3336 = vmax.f32 %v3334, %v3335
    %v3337 = vrot.slane %v3336, 1
    %v3338 = vmax.f32 %v3336, %v3337
    %v3339 = vsel %vm654, %v3331, -inf
    %v3340 = vrot.slane %v3339, 4
    %v3341 = vmax.f32 %v3339, %v3340
    %v3342 = vrot.slane %v3341, 2
    %v3343 = vmax.f32 %v3341, %v3342
    %v3344 = vrot.slane %v3343, 1
    %v3345 = vmax.f32 %v3343, %v3344
    %v3346 = vsub.f32 %v3330, %v3338
    %v3347 = vsub.f32 %v3331, %v3345
    %v3348 = vmul.f32 %v3346, 1.442695
    %v3349 = vpow.pop %v3348
    %v3350 = vmul.f32 %v3347, 1.442695
    %v3351 = vpow.pop %v3350
    %v3352 = vsel %vm654, %v3349, 0.0
    %v3353 = vrot.slane %v3352, 4
    %v3354 = vadd.f32 %v3352, %v3353
    %v3355 = vrot.slane %v3354, 2
    %v3356 = vadd.f32 %v3354, %v3355
    %v3357 = vrot.slane %v3356, 1
    %v3358 = vadd.f32 %v3356, %v3357
    %v3359 = vsel %vm654, %v3351, 0.0
    %v3360 = vrot.slane %v3359, 4
    %v3361 = vadd.f32 %v3359, %v3360
    %v3362 = vrot.slane %v3361, 2
    %v3363 = vadd.f32 %v3361, %v3362
    %v3364 = vrot.slane %v3363, 1
    %v3365 = vadd.f32 %v3363, %v3364
    %v3366 = vrcp.pop %v3358
    %v3367 = vrcp.pop %v3365
    %v3368 = vmul.f32 %v3349, %v3366
    %v3369 = vmul.f32 %v3351, %v3367
    %3371 = vset.pattern.permute.xlu0 0
    %3372 = vperm.xlu0 %3371, %v3368
    %v3373 = vpop.permute.xlu0 %3372
    %3376 = vset.pattern.permute.xlu0 0
    %3377 = vperm.xlu0 %3376, %v3369
    %v3378 = vpop.permute.xlu0 %3377
    %v3380 = vmul.f32 %v3373, %v2995
    %v3381 = vmul.f32 %v3378, %v2996
    %v3382 = vsel %vm79, %v3380, 0.0
    %v3383 = vrot.slane %v3382, 4
    %v3384 = vadd.f32 %v3382, %v3383
    %v3385 = vrot.slane %v3384, 2
    %v3386 = vadd.f32 %v3384, %v3385
    %v3387 = vrot.slane %v3386, 1
    %v3388 = vadd.f32 %v3386, %v3387
    %v3389 = vsel %vm79, %v3381, 0.0
    %v3390 = vrot.slane %v3389, 4
    %v3391 = vadd.f32 %v3389, %v3390
    %v3392 = vrot.slane %v3391, 2
    %v3393 = vadd.f32 %v3391, %v3392
    %v3394 = vrot.slane %v3393, 1
    %v3395 = vadd.f32 %v3393, %v3394
    %3397 = vrot.lane.b32.xlu0 %v2776, 64
    %v3398 = vpop.permute.xlu0 %3397
    %3399 = vrot.lane.b32.xlu0 %v2778, 64
    %v3400 = vpop.permute.xlu0 %3399
    %v3401 = vsel %vm1265, %v3398, %v3400
    %v3403 = vadd.f32 %v3130, %v3401
    %v3406 = vsel %vm726, %v3395, %v3388
    %v3407 = vsel %vm79, %v3406, 0
    %3409 = vmatprep.subr.mxu0 0.0
    %3410 = vmatpush1.msra.mxu0 %v720
    %3411 = vmatprep.subr.mxu0 0.0
    %3412 = vmatpush1.msra.mxu0 %v721
    %3413 = vmatprep.subr.mxu0 0.0
    %3414 = vmatpush1.msra.mxu0 %v722
    %3415 = vmatprep.subr.mxu0 0.0
    %3416 = vmatpush1.msra.mxu0 %v723
    %3417 = vmatprep.subr.mxu0 0.0
    %3418 = vmatpush1.msra.mxu0 0.0
    %3419 = vmatprep.subr.mxu0 0.0
    %3420 = vmatpush1.msra.mxu0 0.0
    %3421 = vmatprep.subr.mxu0 0.0
    %3422 = vmatpush1.msra.mxu0 0.0
    %3423 = vmatprep.subr.mxu0 0.0
    %3424 = vmatpush1.msra.mxu0 0.0
    %3425 = vmatprep.subr.mxu0 0.0
    %3426 = vmatpush1.msra.mxu0 0.0
    %3427 = vmatprep.subr.mxu0 0.0
    %3428 = vmatpush1.msra.mxu0 0.0
    %3429 = vmatprep.subr.mxu0 0.0
    %3430 = vmatpush1.msra.mxu0 0.0
    %3431 = vmatprep.subr.mxu0 0.0
    %3432 = vmatpush1.msra.mxu0 0.0
    %3433 = vmatprep.subr.mxu0 0.0
    %3434 = vmatpush1.msra.mxu0 0.0
    %3435 = vmatprep.subr.mxu0 0.0
    %3436 = vmatpush1.msra.mxu0 0.0
    %3437 = vmatprep.subr.mxu0 0.0
    %3438 = vmatpush1.msra.mxu0 0.0
    %3439 = vmatprep.subr.mxu0 0.0
    %3440 = vmatpush1.msra.mxu0 0.0
    %3441 = vmatprep.subr.mxu0 0.0
    %3442 = vmatpush1.msra.mxu0 0.0
    %3443 = vmatprep.subr.mxu0 0.0
    %3444 = vmatpush1.msra.mxu0 0.0
    %3445 = vmatprep.subr.mxu0 0.0
    %3446 = vmatpush1.msra.mxu0 0.0
    %3447 = vmatprep.subr.mxu0 0.0
    %3448 = vmatpush1.msra.mxu0 0.0
    %3449 = vmatprep.subr.mxu0 0.0
    %3450 = vmatpush1.msra.mxu0 0.0
    %3451 = vmatprep.subr.mxu0 0.0
    %3452 = vmatpush1.msra.mxu0 0.0
    %3453 = vmatprep.subr.mxu0 0.0
    %3454 = vmatpush1.msra.mxu0 0.0
    %3455 = vmatprep.subr.mxu0 0.0
    %3456 = vmatpush1.msra.mxu0 0.0
    %3457 = vmatprep.subr.mxu0 0.0
    %3458 = vmatpush1.msra.mxu0 0.0
    %3459 = vmatprep.subr.mxu0 0.0
    %3460 = vmatpush1.msra.mxu0 0.0
    %3461 = vmatprep.subr.mxu0 0.0
    %3462 = vmatpush1.msra.mxu0 0.0
    %3463 = vmatprep.subr.mxu0 0.0
    %3464 = vmatpush1.msra.mxu0 0.0
    %3465 = vmatprep.subr.mxu0 0.0
    %3466 = vmatpush1.msra.mxu0 0.0
    %3467 = vmatprep.subr.mxu0 0.0
    %3468 = vmatpush1.msra.mxu0 0.0
    %3469 = vmatprep.subr.mxu0 0.0
    %3470 = vmatpush1.msra.mxu0 0.0
    %3471 = vmatprep.subr.mxu0 0.0
    %3472 = vmatpush1.msra.mxu0 0.0
    %3473 = vmatprep.mubr.f32.mxu0 0.0
    %3474 = vmatmul.mubr.f32.gmra.mrb[0].mxu0 %v3407
    %v3475 = vpop.f32.mrb[0].mxu0
    %v3476 = vadd.f32 0.0, %v3475
    %v3477 = vpop.f32.mrb[0].mxu0
    %3478 = vdwg.mxu0
    %v3479 = vadd.f32 %v3403, %v3476
    %v3480 = vxor.u32 %v3479, 2147483648
    %v3481 = vmul.f32 %v3480, 1.442695
    %v3482 = vpow.pop %v3481
    %v3483 = vadd.f32 %v3482, 1.0
    %v3484 = vrcp.pop %v3483
    %v3485 = vmul.f32 1.0, %v3484
    %v3486 = vtanh.pop %v3479
    %v3487 = vmul.f32 %v3485, %v2626
    %3489 = vrot.lane.b32.xlu0 %v3486, 32
    %v3490 = vpop.permute.xlu0 %3489
    %v3492 = vmul.f32 %v3485, %v3490
    %3494 = vrot.lane.b32.xlu0 %v3492, 32
    %v3495 = vpop.permute.xlu0 %3494
    %v3497 = vadd.f32 %v3487, %v3495
    %v3498 = vtanh.pop %v3497
    %3500 = vrot.lane.b32.xlu0 %v3498, 32
    %v3501 = vpop.permute.xlu0 %3500
    %v3503 = vmul.f32 %v3485, %v3501
    %3505 = vrot.lane.b32.xlu0 %v3503, 64
    %v3506 = vpop.permute.xlu0 %3505
    %v3507 = vsel %vm79, %v3506, 0
    %3509 = vmatprep.subr.mxu0 %v826
    %3510 = vmatpush1.msra.mxu0 %v825
    %3511 = vmatprep.subr.mxu0 %v830
    %3512 = vmatpush1.msra.mxu0 %v829
    %3513 = vmatprep.subr.mxu0 %v834
    %3514 = vmatpush1.msra.mxu0 %v833
    %3515 = vmatprep.subr.mxu0 %v838
    %3516 = vmatpush1.msra.mxu0 %v837
    %3517 = vmatprep.subr.mxu0 0.0
    %3518 = vmatpush1.msra.mxu0 0.0
    %3519 = vmatprep.subr.mxu0 0.0
    %3520 = vmatpush1.msra.mxu0 0.0
    %3521 = vmatprep.subr.mxu0 0.0
    %3522 = vmatpush1.msra.mxu0 0.0
    %3523 = vmatprep.subr.mxu0 0.0
    %3524 = vmatpush1.msra.mxu0 0.0
    %3525 = vmatprep.subr.mxu0 0.0
    %3526 = vmatpush1.msra.mxu0 0.0
    %3527 = vmatprep.subr.mxu0 0.0
    %3528 = vmatpush1.msra.mxu0 0.0
    %3529 = vmatprep.subr.mxu0 0.0
    %3530 = vmatpush1.msra.mxu0 0.0
    %3531 = vmatprep.subr.mxu0 0.0
    %3532 = vmatpush1.msra.mxu0 0.0
    %3533 = vmatprep.subr.mxu0 0.0
    %3534 = vmatpush1.msra.mxu0 0.0
    %3535 = vmatprep.subr.mxu0 0.0
    %3536 = vmatpush1.msra.mxu0 0.0
    %3537 = vmatprep.subr.mxu0 0.0
    %3538 = vmatpush1.msra.mxu0 0.0
    %3539 = vmatprep.subr.mxu0 0.0
    %3540 = vmatpush1.msra.mxu0 0.0
    %3541 = vmatprep.subr.mxu0 0.0
    %3542 = vmatpush1.msra.mxu0 0.0
    %3543 = vmatprep.subr.mxu0 0.0
    %3544 = vmatpush1.msra.mxu0 0.0
    %3545 = vmatprep.subr.mxu0 0.0
    %3546 = vmatpush1.msra.mxu0 0.0
    %3547 = vmatprep.subr.mxu0 0.0
    %3548 = vmatpush1.msra.mxu0 0.0
    %3549 = vmatprep.subr.mxu0 0.0
    %3550 = vmatpush1.msra.mxu0 0.0
    %3551 = vmatprep.subr.mxu0 0.0
    %3552 = vmatpush1.msra.mxu0 0.0
    %3553 = vmatprep.subr.mxu0 0.0
    %3554 = vmatpush1.msra.mxu0 0.0
    %3555 = vmatprep.subr.mxu0 0.0
    %3556 = vmatpush1.msra.mxu0 0.0
    %3557 = vmatprep.subr.mxu0 0.0
    %3558 = vmatpush1.msra.mxu0 0.0
    %3559 = vmatprep.subr.mxu0 0.0
    %3560 = vmatpush1.msra.mxu0 0.0
    %3561 = vmatprep.subr.mxu0 0.0
    %3562 = vmatpush1.msra.mxu0 0.0
    %3563 = vmatprep.subr.mxu0 0.0
    %3564 = vmatpush1.msra.mxu0 0.0
    %3565 = vmatprep.subr.mxu0 0.0
    %3566 = vmatpush1.msra.mxu0 0.0
    %3567 = vmatprep.subr.mxu0 0.0
    %3568 = vmatpush1.msra.mxu0 0.0
    %3569 = vmatprep.subr.mxu0 0.0
    %3570 = vmatpush1.msra.mxu0 0.0
    %3571 = vmatprep.subr.mxu0 0.0
    %3572 = vmatpush1.msra.mxu0 0.0
    %3573 = vmatprep.mubr.f32.mxu0 0.0
    %3574 = vmatmul.mubr.f32.gmra.mrb[0].mxu0 %v3507
    %v3575 = vpop.f32.mrb[0].mxu0
    %v3576 = vadd.f32 %v846, %v3575
    %v3577 = vpop.f32.mrb[0].mxu0
    %v3578 = vadd.f32 %v850, %v3577
    %3579 = vdwg.mxu0
    %3580 = vmatprep.subr.mxu0 %v828
    %3581 = vmatpush1.msra.mxu0 %v827
    %3582 = vmatprep.subr.mxu0 %v832
    %3583 = vmatpush1.msra.mxu0 %v831
    %3584 = vmatprep.subr.mxu0 %v836
    %3585 = vmatpush1.msra.mxu0 %v835
    %3586 = vmatprep.subr.mxu0 %v840
    %3587 = vmatpush1.msra.mxu0 %v839
    %3588 = vmatprep.subr.mxu0 0.0
    %3589 = vmatpush1.msra.mxu0 0.0
    %3590 = vmatprep.subr.mxu0 0.0
    %3591 = vmatpush1.msra.mxu0 0.0
    %3592 = vmatprep.subr.mxu0 0.0
    %3593 = vmatpush1.msra.mxu0 0.0
    %3594 = vmatprep.subr.mxu0 0.0
    %3595 = vmatpush1.msra.mxu0 0.0
    %3596 = vmatprep.subr.mxu0 0.0
    %3597 = vmatpush1.msra.mxu0 0.0
    %3598 = vmatprep.subr.mxu0 0.0
    %3599 = vmatpush1.msra.mxu0 0.0
    %3600 = vmatprep.subr.mxu0 0.0
    %3601 = vmatpush1.msra.mxu0 0.0
    %3602 = vmatprep.subr.mxu0 0.0
    %3603 = vmatpush1.msra.mxu0 0.0
    %3604 = vmatprep.subr.mxu0 0.0
    %3605 = vmatpush1.msra.mxu0 0.0
    %3606 = vmatprep.subr.mxu0 0.0
    %3607 = vmatpush1.msra.mxu0 0.0
    %3608 = vmatprep.subr.mxu0 0.0
    %3609 = vmatpush1.msra.mxu0 0.0
    %3610 = vmatprep.subr.mxu0 0.0
    %3611 = vmatpush1.msra.mxu0 0.0
    %3612 = vmatprep.subr.mxu0 0.0
    %3613 = vmatpush1.msra.mxu0 0.0
    %3614 = vmatprep.subr.mxu0 0.0
    %3615 = vmatpush1.msra.mxu0 0.0
    %3616 = vmatprep.subr.mxu0 0.0
    %3617 = vmatpush1.msra.mxu0 0.0
    %3618 = vmatprep.subr.mxu0 0.0
    %3619 = vmatpush1.msra.mxu0 0.0
    %3620 = vmatprep.subr.mxu0 0.0
    %3621 = vmatpush1.msra.mxu0 0.0
    %3622 = vmatprep.subr.mxu0 0.0
    %3623 = vmatpush1.msra.mxu0 0.0
    %3624 = vmatprep.subr.mxu0 0.0
    %3625 = vmatpush1.msra.mxu0 0.0
    %3626 = vmatprep.subr.mxu0 0.0
    %3627 = vmatpush1.msra.mxu0 0.0
    %3628 = vmatprep.subr.mxu0 0.0
    %3629 = vmatpush1.msra.mxu0 0.0
    %3630 = vmatprep.subr.mxu0 0.0
    %3631 = vmatpush1.msra.mxu0 0.0
    %3632 = vmatprep.subr.mxu0 0.0
    %3633 = vmatpush1.msra.mxu0 0.0
    %3634 = vmatprep.subr.mxu0 0.0
    %3635 = vmatpush1.msra.mxu0 0.0
    %3636 = vmatprep.subr.mxu0 0.0
    %3637 = vmatpush1.msra.mxu0 0.0
    %3638 = vmatprep.subr.mxu0 0.0
    %3639 = vmatpush1.msra.mxu0 0.0
    %3640 = vmatprep.subr.mxu0 0.0
    %3641 = vmatpush1.msra.mxu0 0.0
    %3642 = vmatprep.subr.mxu0 0.0
    %3643 = vmatpush1.msra.mxu0 0.0
    %3644 = vmatprep.mubr.f32.mxu0 0.0
    %3645 = vmatmul.mubr.f32.gmra.mrb[0].mxu0 %v3507
    %v3646 = vpop.f32.mrb[0].mxu0
    %v3647 = vadd.f32 %v854, %v3646
    %v3648 = vpop.f32.mrb[0].mxu0
    %v3649 = vadd.f32 %v858, %v3648
    %3650 = vdwg.mxu0
    %v3651 = vmax.f32 %v3578, 0.0
    %v3654 = vunpack.c.l.s4 1966171168
    %v3655 = vunpack.c.0.s8 %v3654
    %v3656 = vlaneseq
    %v3657 = vshrl.u32 %v3656, 7
    %v3658 = vsub.s32 %v3655, %v3657
    %v3659 = vrot.slane %v3578, %v3658
    %v3660 = vcombine.high %v3659, %v3659
    %v3662 = vunpack.c.l.s4 1966171168
    %v3663 = vunpack.c.0.s8 %v3662
    %v3664 = vlaneseq
    %v3665 = vshrl.u32 %v3664, 7
    %v3666 = vsub.s32 %v3663, %v3665
    %v3667 = vrot.slane %v3659, %v3666
    %v3669 = vunpack.c.l.s4 1966171168
    %v3670 = vunpack.c.0.s8 %v3669
    %v3671 = vlaneseq
    %v3672 = vshrl.u32 %v3671, 7
    %v3673 = vsub.s32 %v3670, %v3672
    %v3674 = vrot.slane %v3660, %v3673
    %v3675 = vlaneseq
    %v3676 = vshrl.u32 %v3675, 7
    %v3677 = vsub.s32 0, %v3676
    %v3678 = vrot.slane %v3667, %v3677
    %v3679 = vlaneseq
    %v3680 = vshrl.u32 %v3679, 7
    %v3681 = vsub.s32 0, %v3680
    %v3682 = vrot.slane %v3674, %v3681
    %3683 = vrot.lane.b32.xlu0 %v3678, 32
    %v3684 = vpop.permute.xlu0 %3683
    %3685 = vrot.lane.b32.xlu0 %v3682, 32
    %v3686 = vpop.permute.xlu0 %3685
    %v3689 = vadd.f32 %v3277, %v3684
    %v3690 = vadd.f32 %v3282, %v3686
    %v3691 = vmax.f32 %v3689, 0.0
    %v3692 = vmax.f32 %v3690, 0.0
    %3695 = vrot.lane.b32.xlu0 %v3691, 96
    %v3696 = vpop.permute.xlu0 %3695
    %3697 = vrot.lane.b32.xlu0 %v3692, 96
    %v3698 = vpop.permute.xlu0 %3697
    %v3699 = vsel %vm79, %v3696, 0
    %v3701 = vsel %vm79, %v3698, 0
    %3703 = vmatprep.subr.mxu0 0.0
    %3704 = vmatpush1.msra.mxu0 %v1052
    %3705 = vmatprep.subr.mxu0 0.0
    %3706 = vmatpush1.msra.mxu0 %v1053
    %3707 = vmatprep.subr.mxu0 0.0
    %3708 = vmatpush1.msra.mxu0 %v1054
    %3709 = vmatprep.subr.mxu0 0.0
    %3710 = vmatpush1.msra.mxu0 %v1055
    %3711 = vmatprep.subr.mxu0 0.0
    %3712 = vmatpush1.msra.mxu0 0.0
    %3713 = vmatprep.subr.mxu0 0.0
    %3714 = vmatpush1.msra.mxu0 0.0
    %3715 = vmatprep.subr.mxu0 0.0
    %3716 = vmatpush1.msra.mxu0 0.0
    %3717 = vmatprep.subr.mxu0 0.0
    %3718 = vmatpush1.msra.mxu0 0.0
    %3719 = vmatprep.subr.mxu0 0.0
    %3720 = vmatpush1.msra.mxu0 0.0
    %3721 = vmatprep.subr.mxu0 0.0
    %3722 = vmatpush1.msra.mxu0 0.0
    %3723 = vmatprep.subr.mxu0 0.0
    %3724 = vmatpush1.msra.mxu0 0.0
    %3725 = vmatprep.subr.mxu0 0.0
    %3726 = vmatpush1.msra.mxu0 0.0
    %3727 = vmatprep.subr.mxu0 0.0
    %3728 = vmatpush1.msra.mxu0 0.0
    %3729 = vmatprep.subr.mxu0 0.0
    %3730 = vmatpush1.msra.mxu0 0.0
    %3731 = vmatprep.subr.mxu0 0.0
    %3732 = vmatpush1.msra.mxu0 0.0
    %3733 = vmatprep.subr.mxu0 0.0
    %3734 = vmatpush1.msra.mxu0 0.0
    %3735 = vmatprep.subr.mxu0 0.0
    %3736 = vmatpush1.msra.mxu0 0.0
    %3737 = vmatprep.subr.mxu0 0.0
    %3738 = vmatpush1.msra.mxu0 0.0
    %3739 = vmatprep.subr.mxu0 0.0
    %3740 = vmatpush1.msra.mxu0 0.0
    %3741 = vmatprep.subr.mxu0 0.0
    %3742 = vmatpush1.msra.mxu0 0.0
    %3743 = vmatprep.subr.mxu0 0.0
    %3744 = vmatpush1.msra.mxu0 0.0
    %3745 = vmatprep.subr.mxu0 0.0
    %3746 = vmatpush1.msra.mxu0 0.0
    %3747 = vmatprep.subr.mxu0 0.0
    %3748 = vmatpush1.msra.mxu0 0.0
    %3749 = vmatprep.subr.mxu0 0.0
    %3750 = vmatpush1.msra.mxu0 0.0
    %3751 = vmatprep.subr.mxu0 0.0
    %3752 = vmatpush1.msra.mxu0 0.0
    %3753 = vmatprep.subr.mxu0 0.0
    %3754 = vmatpush1.msra.mxu0 0.0
    %3755 = vmatprep.subr.mxu0 0.0
    %3756 = vmatpush1.msra.mxu0 0.0
    %3757 = vmatprep.subr.mxu0 0.0
    %3758 = vmatpush1.msra.mxu0 0.0
    %3759 = vmatprep.subr.mxu0 0.0
    %3760 = vmatpush1.msra.mxu0 0.0
    %3761 = vmatprep.subr.mxu0 0.0
    %3762 = vmatpush1.msra.mxu0 0.0
    %3763 = vmatprep.subr.mxu0 0.0
    %3764 = vmatpush1.msra.mxu0 0.0
    %3765 = vmatprep.subr.mxu0 0.0
    %3766 = vmatpush1.msra.mxu0 0.0
    %3767 = vmatprep.mubr.f32.mxu0 0.0
    %3768 = vmatmul.mubr.f32.gmra.mrb[0].mxu0 %v3699
    %v3769 = vpop.f32.mrb[0].mxu0
    %v3770 = vadd.f32 %v1061, %v3769
    %v3771 = vpop.f32.mrb[0].mxu0
    %3772 = vmatprep.mubr.f32.mxu0 0.0
    %3773 = vmatmul.mubr.f32.gmra.mrb[0].mxu0 %v3701
    %v3774 = vpop.f32.mrb[0].mxu0
    %v3775 = vadd.f32 %v1061, %v3774
    %v3776 = vpop.f32.mrb[0].mxu0
    %3777 = vdwg.mxu0
    %v3778 = vxor.u32 %v3770, 2147483648
    %v3779 = vxor.u32 %v3775, 2147483648
    %v3780 = vmul.f32 %v3778, 1.442695
    %v3781 = vpow.pop %v3780
    %v3782 = vmul.f32 %v3779, 1.442695
    %v3783 = vpow.pop %v3782
    %v3784 = vadd.f32 %v3781, 1.0
    %v3785 = vadd.f32 %v3783, 1.0
    %v3786 = vrcp.pop %v3784
    %v3787 = vmul.f32 1.0, %v3786
    %v3788 = vrcp.pop %v3785
    %v3789 = vmul.f32 1.0, %v3788
    %v3790 = vmul.f32 %v3651, %v1166
    %3792 = vrot.lane.b32.xlu0 %v3790, 96
    %v3793 = vpop.permute.xlu0 %3792
    %v3795 = vsel %vm1173, %v3793, 0.0
    %3796 = vadd.xlane.f32.xlu0 %v3795
    %v3797 = vpop.xlane.xlu0 %3796
    %v3798 = vadd.f32 %v3797, %v1181
    %v3799 = vxor.u32 %v3798, 2147483648
    %v3800 = vmul.f32 %v3799, 1.442695
    %v3801 = vpow.pop %v3800
    %v3802 = vadd.f32 %v3801, 1.0
    %v3803 = vrcp.pop %v3802
    %v3804 = vmul.f32 1.0, %v3803
    %v3807 = vunpack.c.l.s4 1966171168
    %v3808 = vunpack.c.0.s8 %v3807
    %v3809 = vlaneseq
    %v3810 = vshrl.u32 %v3809, 7
    %v3811 = vsub.s32 %v3808, %v3810
    %v3812 = vrot.slane %v3804, %v3811
    %v3813 = vcombine.high %v3812, %v3812
    %v3815 = vunpack.c.l.s4 1966171168
    %v3816 = vunpack.c.0.s8 %v3815
    %v3817 = vlaneseq
    %v3818 = vshrl.u32 %v3817, 7
    %v3819 = vsub.s32 %v3816, %v3818
    %v3820 = vrot.slane %v3812, %v3819
    %v3822 = vunpack.c.l.s4 1966171168
    %v3823 = vunpack.c.0.s8 %v3822
    %v3824 = vlaneseq
    %v3825 = vshrl.u32 %v3824, 7
    %v3826 = vsub.s32 %v3823, %v3825
    %v3827 = vrot.slane %v3813, %v3826
    %v3828 = vlaneseq
    %v3829 = vshrl.u32 %v3828, 7
    %v3830 = vsub.s32 0, %v3829
    %v3831 = vrot.slane %v3820, %v3830
    %v3832 = vlaneseq
    %v3833 = vshrl.u32 %v3832, 7
    %v3834 = vsub.s32 0, %v3833
    %v3835 = vrot.slane %v3827, %v3834
    %v3838 = vmul.f32 %v3368, %v3831
    %v3839 = vmul.f32 %v3369, %v3835
    %3841 = vset.pattern.permute.xlu0 0
    %3842 = vperm.xlu0 %3841, %v3838
    %v3843 = vpop.permute.xlu0 %3842
    %3846 = vset.pattern.permute.xlu0 0
    %3847 = vperm.xlu0 %3846, %v3839
    %v3848 = vpop.permute.xlu0 %3847
    %v3850 = vmul.f32 %v3843, %v3787
    %v3851 = vmul.f32 %v3848, %v3789
    %v3852 = vsub.f32 1.0, %v3850
    %v3853 = vsub.f32 1.0, %v3851
    %v3854 = vmul.f32 %v2995, %v3852
    %v3855 = vmul.f32 %v2996, %v3853
    %v3856 = vmul.f32 %v3843, %v3770
    %v3857 = vmul.f32 %v3848, %v3775
    %3860 = vrot.lane.b32.xlu0 %v3856, 96
    %v3861 = vpop.permute.xlu0 %3860
    %3862 = vrot.lane.b32.xlu0 %v3857, 96
    %v3863 = vpop.permute.xlu0 %3862
    %v3866 = vadd.f32 %v3854, %v3861
    %v3867 = vadd.f32 %v3855, %v3863
    %v3869 = vcombine.low %v3578, %v3647
    %v3871 = vunpack.c.l.s4 1983009808
    %v3872 = vunpack.c.0.s8 %v3871
    %v3873 = vlaneseq
    %v3874 = vshrl.u32 %v3873, 7
    %v3875 = vsub.s32 %v3872, %v3874
    %v3876 = vrot.slane %v3869, %v3875
    %3877 = vrot.lane.b32.xlu0 %v3876, 64
    %v3878 = vpop.permute.xlu0 %3877
    %v3879 = vrot.slane %v3878, 2
    %v3880 = vsel %vm1265, %v3878, %v3879
    %v3882 = vadd.f32 %v305, %v3880
    %v3884 = vcombine.low %v3132, %v3201
    %v3886 = vunpack.c.l.s4 1983009808
    %v3887 = vunpack.c.0.s8 %v3886
    %v3888 = vlaneseq
    %v3889 = vshrl.u32 %v3888, 7
    %v3890 = vsub.s32 %v3887, %v3889
    %v3891 = vrot.slane %v3884, %v3890
    %3892 = vrot.lane.b32.xlu0 %v3891, 96
    %v3893 = vpop.permute.xlu0 %3892
    %v3894 = vrot.slane %v3893, 2
    %v3895 = vsel %vm1281, %v3893, %v3894
    %v3897 = vadd.f32 %v3882, %v3895
    %v3898 = vxor.u32 %v3897, 2147483648
    %v3899 = vmul.f32 %v3898, 1.442695
    %v3900 = vpow.pop %v3899
    %v3901 = vadd.f32 %v3900, 1.0
    %v3902 = vrcp.pop %v3901
    %v3903 = vmul.f32 1.0, %v3902
    %v3904 = vtanh.pop %v3897
    %v3905 = vmul.f32 %v3903, %v3044
    %3907 = vrot.lane.b32.xlu0 %v3904, 32
    %v3908 = vpop.permute.xlu0 %3907
    %v3910 = vmul.f32 %v3903, %v3908
    %3912 = vrot.lane.b32.xlu0 %v3910, 32
    %v3913 = vpop.permute.xlu0 %3912
    %v3915 = vadd.f32 %v3905, %v3913
    %v3916 = vtanh.pop %v3915
    %3918 = vrot.lane.b32.xlu0 %v3916, 32
    %v3919 = vpop.permute.xlu0 %3918
    %v3921 = vmul.f32 %v3903, %v3919
    %v3924 = vunpack.c.l.s4 1983009808
    %v3925 = vunpack.c.0.s8 %v3924
    %v3926 = vlaneseq
    %v3927 = vshrl.u32 %v3926, 7
    %v3928 = vsub.s32 %v3925, %v3927
    %v3929 = vrot.slane %v3921, %v3928
    %3930 = vrot.lane.b32.xlu0 %v3929, 64
    %v3931 = vpop.permute.xlu0 %3930
    %v3932 = vsel %vm79, %v3931, 0
    %3934 = vmatprep.subr.mxu0 %v335
    %3935 = vmatpush1.msra.mxu0 %v334
    %3936 = vmatprep.subr.mxu0 %v338
    %3937 = vmatpush1.msra.mxu0 %v337
    %3938 = vmatprep.subr.mxu0 %v341
    %3939 = vmatpush1.msra.mxu0 %v340
    %3940 = vmatprep.subr.mxu0 %v344
    %3941 = vmatpush1.msra.mxu0 %v343
    %3942 = vmatprep.subr.mxu0 0.0
    %3943 = vmatpush1.msra.mxu0 0.0
    %3944 = vmatprep.subr.mxu0 0.0
    %3945 = vmatpush1.msra.mxu0 0.0
    %3946 = vmatprep.subr.mxu0 0.0
    %3947 = vmatpush1.msra.mxu0 0.0
    %3948 = vmatprep.subr.mxu0 0.0
    %3949 = vmatpush1.msra.mxu0 0.0
    %3950 = vmatprep.subr.mxu0 0.0
    %3951 = vmatpush1.msra.mxu0 0.0
    %3952 = vmatprep.subr.mxu0 0.0
    %3953 = vmatpush1.msra.mxu0 0.0
    %3954 = vmatprep.subr.mxu0 0.0
    %3955 = vmatpush1.msra.mxu0 0.0
    %3956 = vmatprep.subr.mxu0 0.0
    %3957 = vmatpush1.msra.mxu0 0.0
    %3958 = vmatprep.subr.mxu0 0.0
    %3959 = vmatpush1.msra.mxu0 0.0
    %3960 = vmatprep.subr.mxu0 0.0
    %3961 = vmatpush1.msra.mxu0 0.0
    %3962 = vmatprep.subr.mxu0 0.0
    %3963 = vmatpush1.msra.mxu0 0.0
    %3964 = vmatprep.subr.mxu0 0.0
    %3965 = vmatpush1.msra.mxu0 0.0
    %3966 = vmatprep.subr.mxu0 0.0
    %3967 = vmatpush1.msra.mxu0 0.0
    %3968 = vmatprep.subr.mxu0 0.0
    %3969 = vmatpush1.msra.mxu0 0.0
    %3970 = vmatprep.subr.mxu0 0.0
    %3971 = vmatpush1.msra.mxu0 0.0
    %3972 = vmatprep.subr.mxu0 0.0
    %3973 = vmatpush1.msra.mxu0 0.0
    %3974 = vmatprep.subr.mxu0 0.0
    %3975 = vmatpush1.msra.mxu0 0.0
    %3976 = vmatprep.subr.mxu0 0.0
    %3977 = vmatpush1.msra.mxu0 0.0
    %3978 = vmatprep.subr.mxu0 0.0
    %3979 = vmatpush1.msra.mxu0 0.0
    %3980 = vmatprep.subr.mxu0 0.0
    %3981 = vmatpush1.msra.mxu0 0.0
    %3982 = vmatprep.subr.mxu0 0.0
    %3983 = vmatpush1.msra.mxu0 0.0
    %3984 = vmatprep.subr.mxu0 0.0
    %3985 = vmatpush1.msra.mxu0 0.0
    %3986 = vmatprep.subr.mxu0 0.0
    %3987 = vmatpush1.msra.mxu0 0.0
    %3988 = vmatprep.subr.mxu0 0.0
    %3989 = vmatpush1.msra.mxu0 0.0
    %3990 = vmatprep.subr.mxu0 0.0
    %3991 = vmatpush1.msra.mxu0 0.0
    %3992 = vmatprep.subr.mxu0 0.0
    %3993 = vmatpush1.msra.mxu0 0.0
    %3994 = vmatprep.subr.mxu0 0.0
    %3995 = vmatpush1.msra.mxu0 0.0
    %3996 = vmatprep.subr.mxu0 0.0
    %3997 = vmatpush1.msra.mxu0 0.0
    %3998 = vmatprep.mubr.f32.mxu0 0.0
    %3999 = vmatmul.mubr.f32.gmra.mrb[0].mxu0 %v3932
    %v4000 = vpop.f32.mrb[0].mxu0
    %v4001 = vadd.f32 %v351, %v4000
    %v4002 = vpop.f32.mrb[0].mxu0
    %v4003 = vadd.f32 %v355, %v4002
    %4004 = vdwg.mxu0
    %v4006 = vsel %vm79, %v3866, 0
    %v4009 = vsel %vm79, %v3867, 0
    %4011 = vmatprep.subr.mxu0 0.0
    %4012 = vmatpush1.msra.mxu0 %v516
    %4013 = vmatprep.subr.mxu0 0.0
    %4014 = vmatpush1.msra.mxu0 %v517
    %4015 = vmatprep.subr.mxu0 0.0
    %4016 = vmatpush1.msra.mxu0 %v518
    %4017 = vmatprep.subr.mxu0 0.0
    %4018 = vmatpush1.msra.mxu0 %v519
    %4019 = vmatprep.subr.mxu0 0.0
    %4020 = vmatpush1.msra.mxu0 0.0
    %4021 = vmatprep.subr.mxu0 0.0
    %4022 = vmatpush1.msra.mxu0 0.0
    %4023 = vmatprep.subr.mxu0 0.0
    %4024 = vmatpush1.msra.mxu0 0.0
    %4025 = vmatprep.subr.mxu0 0.0
    %4026 = vmatpush1.msra.mxu0 0.0
    %4027 = vmatprep.subr.mxu0 0.0
    %4028 = vmatpush1.msra.mxu0 0.0
    %4029 = vmatprep.subr.mxu0 0.0
    %4030 = vmatpush1.msra.mxu0 0.0
    %4031 = vmatprep.subr.mxu0 0.0
    %4032 = vmatpush1.msra.mxu0 0.0
    %4033 = vmatprep.subr.mxu0 0.0
    %4034 = vmatpush1.msra.mxu0 0.0
    %4035 = vmatprep.subr.mxu0 0.0
    %4036 = vmatpush1.msra.mxu0 0.0
    %4037 = vmatprep.subr.mxu0 0.0
    %4038 = vmatpush1.msra.mxu0 0.0
    %4039 = vmatprep.subr.mxu0 0.0
    %4040 = vmatpush1.msra.mxu0 0.0
    %4041 = vmatprep.subr.mxu0 0.0
    %4042 = vmatpush1.msra.mxu0 0.0
    %4043 = vmatprep.subr.mxu0 0.0
    %4044 = vmatpush1.msra.mxu0 0.0
    %4045 = vmatprep.subr.mxu0 0.0
    %4046 = vmatpush1.msra.mxu0 0.0
    %4047 = vmatprep.subr.mxu0 0.0
    %4048 = vmatpush1.msra.mxu0 0.0
    %4049 = vmatprep.subr.mxu0 0.0
    %4050 = vmatpush1.msra.mxu0 0.0
    %4051 = vmatprep.subr.mxu0 0.0
    %4052 = vmatpush1.msra.mxu0 0.0
    %4053 = vmatprep.subr.mxu0 0.0
    %4054 = vmatpush1.msra.mxu0 0.0
    %4055 = vmatprep.subr.mxu0 0.0
    %4056 = vmatpush1.msra.mxu0 0.0
    %4057 = vmatprep.subr.mxu0 0.0
    %4058 = vmatpush1.msra.mxu0 0.0
    %4059 = vmatprep.subr.mxu0 0.0
    %4060 = vmatpush1.msra.mxu0 0.0
    %4061 = vmatprep.subr.mxu0 0.0
    %4062 = vmatpush1.msra.mxu0 0.0
    %4063 = vmatprep.subr.mxu0 0.0
    %4064 = vmatpush1.msra.mxu0 0.0
    %4065 = vmatprep.subr.mxu0 0.0
    %4066 = vmatpush1.msra.mxu0 0.0
    %4067 = vmatprep.subr.mxu0 0.0
    %4068 = vmatpush1.msra.mxu0 0.0
    %4069 = vmatprep.subr.mxu0 0.0
    %4070 = vmatpush1.msra.mxu0 0.0
    %4071 = vmatprep.subr.mxu0 0.0
    %4072 = vmatpush1.msra.mxu0 0.0
    %4073 = vmatprep.subr.mxu0 0.0
    %4074 = vmatpush1.msra.mxu0 0.0
    %4075 = vmatprep.mubr.f32.mxu0 0.0
    %4076 = vmatmul.mubr.f32.gmra.mrb[0].mxu0 %v4006
    %v4077 = vpop.f32.mrb[0].mxu0
    %v4078 = vadd.f32 0.0, %v4077
    %v4079 = vpop.f32.mrb[0].mxu0
    %4080 = vmatprep.mubr.f32.mxu0 0.0
    %4081 = vmatmul.mubr.f32.gmra.mrb[0].mxu0 %v4009
    %v4082 = vpop.f32.mrb[0].mxu0
    %v4083 = vadd.f32 0.0, %v4082
    %v4084 = vpop.f32.mrb[0].mxu0
    %4085 = vdwg.mxu0
    %v4088 = vunpack.c.l.s4 1966171168
    %v4089 = vunpack.c.0.s8 %v4088
    %v4090 = vlaneseq
    %v4091 = vshrl.u32 %v4090, 7
    %v4092 = vsub.s32 %v4089, %v4091
    %v4093 = vrot.slane %v4003, %v4092
    %v4094 = vcombine.high %v4093, %v4093
    %v4096 = vunpack.c.l.s4 1966171168
    %v4097 = vunpack.c.0.s8 %v4096
    %v4098 = vlaneseq
    %v4099 = vshrl.u32 %v4098, 7
    %v4100 = vsub.s32 %v4097, %v4099
    %v4101 = vrot.slane %v4093, %v4100
    %v4103 = vunpack.c.l.s4 1966171168
    %v4104 = vunpack.c.0.s8 %v4103
    %v4105 = vlaneseq
    %v4106 = vshrl.u32 %v4105, 7
    %v4107 = vsub.s32 %v4104, %v4106
    %v4108 = vrot.slane %v4094, %v4107
    %v4109 = vlaneseq
    %v4110 = vshrl.u32 %v4109, 7
    %v4111 = vsub.s32 0, %v4110
    %v4112 = vrot.slane %v4101, %v4111
    %v4113 = vlaneseq
    %v4114 = vshrl.u32 %v4113, 7
    %v4115 = vsub.s32 0, %v4114
    %v4116 = vrot.slane %v4108, %v4115
    %v4119 = vadd.f32 %v4078, %v4112
    %v4120 = vadd.f32 %v4083, %v4116
    %v4121 = vtanh.pop %v4119
    %v4122 = vtanh.pop %v4120
    %v4123 = vmul.f32 %v4121, %v642
    %v4124 = vmul.f32 %v4122, %v642
    %v4125 = vsel %vm79, %v4123, 0.0
    %4126 = vadd.xlane.f32.xlu0 %v4125
    %v4127 = vpop.xlane.xlu0 %4126
    %v4128 = vsel %vm79, %v4124, 0.0
    %4129 = vadd.xlane.f32.xlu0 %v4128
    %v4130 = vpop.xlane.xlu0 %4129
    %v4131 = vadd.f32 %v4127, %v62
    %v4132 = vadd.f32 %v4130, %v63
    %v4133 = vsel %vm654, %v4131, -inf
    %v4134 = vrot.slane %v4133, 4
    %v4135 = vmax.f32 %v4133, %v4134
    %v4136 = vrot.slane %v4135, 2
    %v4137 = vmax.f32 %v4135, %v4136
    %v4138 = vrot.slane %v4137, 1
    %v4139 = vmax.f32 %v4137, %v4138
    %v4140 = vsel %vm654, %v4132, -inf
    %v4141 = vrot.slane %v4140, 4
    %v4142 = vmax.f32 %v4140, %v4141
    %v4143 = vrot.slane %v4142, 2
    %v4144 = vmax.f32 %v4142, %v4143
    %v4145 = vrot.slane %v4144, 1
    %v4146 = vmax.f32 %v4144, %v4145
    %v4147 = vsub.f32 %v4131, %v4139
    %v4148 = vsub.f32 %v4132, %v4146
    %v4149 = vmul.f32 %v4147, 1.442695
    %v4150 = vpow.pop %v4149
    %v4151 = vmul.f32 %v4148, 1.442695
    %v4152 = vpow.pop %v4151
    %v4153 = vsel %vm654, %v4150, 0.0
    %v4154 = vrot.slane %v4153, 4
    %v4155 = vadd.f32 %v4153, %v4154
    %v4156 = vrot.slane %v4155, 2
    %v4157 = vadd.f32 %v4155, %v4156
    %v4158 = vrot.slane %v4157, 1
    %v4159 = vadd.f32 %v4157, %v4158
    %v4160 = vsel %vm654, %v4152, 0.0
    %v4161 = vrot.slane %v4160, 4
    %v4162 = vadd.f32 %v4160, %v4161
    %v4163 = vrot.slane %v4162, 2
    %v4164 = vadd.f32 %v4162, %v4163
    %v4165 = vrot.slane %v4164, 1
    %v4166 = vadd.f32 %v4164, %v4165
    %v4167 = vrcp.pop %v4159
    %v4168 = vrcp.pop %v4166
    %v4169 = vmul.f32 %v4150, %v4167
    %v4170 = vmul.f32 %v4152, %v4168
    %4172 = vset.pattern.permute.xlu0 0
    %4173 = vperm.xlu0 %4172, %v4169
    %v4174 = vpop.permute.xlu0 %4173
    %4177 = vset.pattern.permute.xlu0 0
    %4178 = vperm.xlu0 %4177, %v4170
    %v4179 = vpop.permute.xlu0 %4178
    %v4181 = vmul.f32 %v4174, %v3866
    %v4182 = vmul.f32 %v4179, %v3867
    %v4183 = vsel %vm79, %v4181, 0.0
    %v4184 = vrot.slane %v4183, 4
    %v4185 = vadd.f32 %v4183, %v4184
    %v4186 = vrot.slane %v4185, 2
    %v4187 = vadd.f32 %v4185, %v4186
    %v4188 = vrot.slane %v4187, 1
    %v4189 = vadd.f32 %v4187, %v4188
    %v4190 = vsel %vm79, %v4182, 0.0
    %v4191 = vrot.slane %v4190, 4
    %v4192 = vadd.f32 %v4190, %v4191
    %v4193 = vrot.slane %v4192, 2
    %v4194 = vadd.f32 %v4192, %v4193
    %v4195 = vrot.slane %v4194, 1
    %v4196 = vadd.f32 %v4194, %v4195
    %4198 = vrot.lane.b32.xlu0 %v3647, 64
    %v4199 = vpop.permute.xlu0 %4198
    %4200 = vrot.lane.b32.xlu0 %v3649, 64
    %v4201 = vpop.permute.xlu0 %4200
    %v4202 = vsel %vm1265, %v4199, %v4201
    %v4204 = vadd.f32 %v4001, %v4202
    %v4207 = vsel %vm726, %v4196, %v4189
    %v4208 = vsel %vm79, %v4207, 0
    %4210 = vmatprep.subr.mxu0 0.0
    %4211 = vmatpush1.msra.mxu0 %v720
    %4212 = vmatprep.subr.mxu0 0.0
    %4213 = vmatpush1.msra.mxu0 %v721
    %4214 = vmatprep.subr.mxu0 0.0
    %4215 = vmatpush1.msra.mxu0 %v722
    %4216 = vmatprep.subr.mxu0 0.0
    %4217 = vmatpush1.msra.mxu0 %v723
    %4218 = vmatprep.subr.mxu0 0.0
    %4219 = vmatpush1.msra.mxu0 0.0
    %4220 = vmatprep.subr.mxu0 0.0
    %4221 = vmatpush1.msra.mxu0 0.0
    %4222 = vmatprep.subr.mxu0 0.0
    %4223 = vmatpush1.msra.mxu0 0.0
    %4224 = vmatprep.subr.mxu0 0.0
    %4225 = vmatpush1.msra.mxu0 0.0
    %4226 = vmatprep.subr.mxu0 0.0
    %4227 = vmatpush1.msra.mxu0 0.0
    %4228 = vmatprep.subr.mxu0 0.0
    %4229 = vmatpush1.msra.mxu0 0.0
    %4230 = vmatprep.subr.mxu0 0.0
    %4231 = vmatpush1.msra.mxu0 0.0
    %4232 = vmatprep.subr.mxu0 0.0
    %4233 = vmatpush1.msra.mxu0 0.0
    %4234 = vmatprep.subr.mxu0 0.0
    %4235 = vmatpush1.msra.mxu0 0.0
    %4236 = vmatprep.subr.mxu0 0.0
    %4237 = vmatpush1.msra.mxu0 0.0
    %4238 = vmatprep.subr.mxu0 0.0
    %4239 = vmatpush1.msra.mxu0 0.0
    %4240 = vmatprep.subr.mxu0 0.0
    %4241 = vmatpush1.msra.mxu0 0.0
    %4242 = vmatprep.subr.mxu0 0.0
    %4243 = vmatpush1.msra.mxu0 0.0
    %4244 = vmatprep.subr.mxu0 0.0
    %4245 = vmatpush1.msra.mxu0 0.0
    %4246 = vmatprep.subr.mxu0 0.0
    %4247 = vmatpush1.msra.mxu0 0.0
    %4248 = vmatprep.subr.mxu0 0.0
    %4249 = vmatpush1.msra.mxu0 0.0
    %4250 = vmatprep.subr.mxu0 0.0
    %4251 = vmatpush1.msra.mxu0 0.0
    %4252 = vmatprep.subr.mxu0 0.0
    %4253 = vmatpush1.msra.mxu0 0.0
    %4254 = vmatprep.subr.mxu0 0.0
    %4255 = vmatpush1.msra.mxu0 0.0
    %4256 = vmatprep.subr.mxu0 0.0
    %4257 = vmatpush1.msra.mxu0 0.0
    %4258 = vmatprep.subr.mxu0 0.0
    %4259 = vmatpush1.msra.mxu0 0.0
    %4260 = vmatprep.subr.mxu0 0.0
    %4261 = vmatpush1.msra.mxu0 0.0
    %4262 = vmatprep.subr.mxu0 0.0
    %4263 = vmatpush1.msra.mxu0 0.0
    %4264 = vmatprep.subr.mxu0 0.0
    %4265 = vmatpush1.msra.mxu0 0.0
    %4266 = vmatprep.subr.mxu0 0.0
    %4267 = vmatpush1.msra.mxu0 0.0
    %4268 = vmatprep.subr.mxu0 0.0
    %4269 = vmatpush1.msra.mxu0 0.0
    %4270 = vmatprep.subr.mxu0 0.0
    %4271 = vmatpush1.msra.mxu0 0.0
    %4272 = vmatprep.subr.mxu0 0.0
    %4273 = vmatpush1.msra.mxu0 0.0
    %4274 = vmatprep.mubr.f32.mxu0 0.0
    %4275 = vmatmul.mubr.f32.gmra.mrb[0].mxu0 %v4208
    %v4276 = vpop.f32.mrb[0].mxu0
    %v4277 = vadd.f32 0.0, %v4276
    %v4278 = vpop.f32.mrb[0].mxu0
    %4279 = vdwg.mxu0
    %v4280 = vadd.f32 %v4204, %v4277
    %v4281 = vxor.u32 %v4280, 2147483648
    %v4282 = vmul.f32 %v4281, 1.442695
    %v4283 = vpow.pop %v4282
    %v4284 = vadd.f32 %v4283, 1.0
    %v4285 = vrcp.pop %v4284
    %v4286 = vmul.f32 1.0, %v4285
    %v4287 = vtanh.pop %v4280
    %v4288 = vmul.f32 %v4286, %v3497
    %4290 = vrot.lane.b32.xlu0 %v4287, 32
    %v4291 = vpop.permute.xlu0 %4290
    %v4293 = vmul.f32 %v4286, %v4291
    %4295 = vrot.lane.b32.xlu0 %v4293, 32
    %v4296 = vpop.permute.xlu0 %4295
    %v4298 = vadd.f32 %v4288, %v4296
    %v4299 = vtanh.pop %v4298
    %4301 = vrot.lane.b32.xlu0 %v4299, 32
    %v4302 = vpop.permute.xlu0 %4301
    %v4304 = vmul.f32 %v4286, %v4302
    %4306 = vrot.lane.b32.xlu0 %v4304, 64
    %v4307 = vpop.permute.xlu0 %4306
    %v4308 = vsel %vm79, %v4307, 0
    %4310 = vmatprep.subr.mxu0 %v826
    %4311 = vmatpush1.msra.mxu0 %v825
    %4312 = vmatprep.subr.mxu0 %v830
    %4313 = vmatpush1.msra.mxu0 %v829
    %4314 = vmatprep.subr.mxu0 %v834
    %4315 = vmatpush1.msra.mxu0 %v833
    %4316 = vmatprep.subr.mxu0 %v838
    %4317 = vmatpush1.msra.mxu0 %v837
    %4318 = vmatprep.subr.mxu0 0.0
    %4319 = vmatpush1.msra.mxu0 0.0
    %4320 = vmatprep.subr.mxu0 0.0
    %4321 = vmatpush1.msra.mxu0 0.0
    %4322 = vmatprep.subr.mxu0 0.0
    %4323 = vmatpush1.msra.mxu0 0.0
    %4324 = vmatprep.subr.mxu0 0.0
    %4325 = vmatpush1.msra.mxu0 0.0
    %4326 = vmatprep.subr.mxu0 0.0
    %4327 = vmatpush1.msra.mxu0 0.0
    %4328 = vmatprep.subr.mxu0 0.0
    %4329 = vmatpush1.msra.mxu0 0.0
    %4330 = vmatprep.subr.mxu0 0.0
    %4331 = vmatpush1.msra.mxu0 0.0
    %4332 = vmatprep.subr.mxu0 0.0
    %4333 = vmatpush1.msra.mxu0 0.0
    %4334 = vmatprep.subr.mxu0 0.0
    %4335 = vmatpush1.msra.mxu0 0.0
    %4336 = vmatprep.subr.mxu0 0.0
    %4337 = vmatpush1.msra.mxu0 0.0
    %4338 = vmatprep.subr.mxu0 0.0
    %4339 = vmatpush1.msra.mxu0 0.0
    %4340 = vmatprep.subr.mxu0 0.0
    %4341 = vmatpush1.msra.mxu0 0.0
    %4342 = vmatprep.subr.mxu0 0.0
    %4343 = vmatpush1.msra.mxu0 0.0
    %4344 = vmatprep.subr.mxu0 0.0
    %4345 = vmatpush1.msra.mxu0 0.0
    %4346 = vmatprep.subr.mxu0 0.0
    %4347 = vmatpush1.msra.mxu0 0.0
    %4348 = vmatprep.subr.mxu0 0.0
    %4349 = vmatpush1.msra.mxu0 0.0
    %4350 = vmatprep.subr.mxu0 0.0
    %4351 = vmatpush1.msra.mxu0 0.0
    %4352 = vmatprep.subr.mxu0 0.0
    %4353 = vmatpush1.msra.mxu0 0.0
    %4354 = vmatprep.subr.mxu0 0.0
    %4355 = vmatpush1.msra.mxu0 0.0
    %4356 = vmatprep.subr.mxu0 0.0
    %4357 = vmatpush1.msra.mxu0 0.0
    %4358 = vmatprep.subr.mxu0 0.0
    %4359 = vmatpush1.msra.mxu0 0.0
    %4360 = vmatprep.subr.mxu0 0.0
    %4361 = vmatpush1.msra.mxu0 0.0
    %4362 = vmatprep.subr.mxu0 0.0
    %4363 = vmatpush1.msra.mxu0 0.0
    %4364 = vmatprep.subr.mxu0 0.0
    %4365 = vmatpush1.msra.mxu0 0.0
    %4366 = vmatprep.subr.mxu0 0.0
    %4367 = vmatpush1.msra.mxu0 0.0
    %4368 = vmatprep.subr.mxu0 0.0
    %4369 = vmatpush1.msra.mxu0 0.0
    %4370 = vmatprep.subr.mxu0 0.0
    %4371 = vmatpush1.msra.mxu0 0.0
    %4372 = vmatprep.subr.mxu0 0.0
    %4373 = vmatpush1.msra.mxu0 0.0
    %4374 = vmatprep.mubr.f32.mxu0 0.0
    %4375 = vmatmul.mubr.f32.gmra.mrb[0].mxu0 %v4308
    %v4376 = vpop.f32.mrb[0].mxu0
    %v4377 = vadd.f32 %v846, %v4376
    %v4378 = vpop.f32.mrb[0].mxu0
    %4379 = vdwg.mxu0
    %v4382 = vunpack.c.l.s4 1966171168
    %v4383 = vunpack.c.0.s8 %v4382
    %v4384 = vlaneseq
    %v4385 = vshrl.u32 %v4384, 7
    %v4386 = vsub.s32 %v4383, %v4385
    %v4387 = vrot.slane %v935, %v4386
    %v4388 = vcombine.high %v4387, %v4387
    %v4390 = vunpack.c.l.s4 1966171168
    %v4391 = vunpack.c.0.s8 %v4390
    %v4392 = vlaneseq
    %v4393 = vshrl.u32 %v4392, 7
    %v4394 = vsub.s32 %v4391, %v4393
    %v4395 = vrot.slane %v4387, %v4394
    %v4397 = vunpack.c.l.s4 1966171168
    %v4398 = vunpack.c.0.s8 %v4397
    %v4399 = vlaneseq
    %v4400 = vshrl.u32 %v4399, 7
    %v4401 = vsub.s32 %v4398, %v4400
    %v4402 = vrot.slane %v4388, %v4401
    %v4407 = vunpack.c.l.s4 1966171168
    %v4408 = vunpack.c.0.s8 %v4407
    %v4409 = vlaneseq
    %v4410 = vshrl.u32 %v4409, 7
    %v4411 = vsub.s32 %v4408, %v4410
    %v4412 = vrot.slane %v1834, %v4411
    %v4413 = vcombine.high %v4412, %v4412
    %v4415 = vunpack.c.l.s4 1966171168
    %v4416 = vunpack.c.0.s8 %v4415
    %v4417 = vlaneseq
    %v4418 = vshrl.u32 %v4417, 7
    %v4419 = vsub.s32 %v4416, %v4418
    %v4420 = vrot.slane %v4412, %v4419
    %v4422 = vunpack.c.l.s4 1966171168
    %v4423 = vunpack.c.0.s8 %v4422
    %v4424 = vlaneseq
    %v4425 = vshrl.u32 %v4424, 7
    %v4426 = vsub.s32 %v4423, %v4425
    %v4427 = vrot.slane %v4413, %v4426
    %v4430 = vunpack.c.l.s4 1966171168
    %v4431 = vunpack.c.0.s8 %v4430
    %v4432 = vlaneseq
    %v4433 = vshrl.u32 %v4432, 7
    %v4434 = vsub.s32 %v4431, %v4433
    %v4435 = vrot.slane %v2705, %v4434
    %v4436 = vcombine.high %v4435, %v4435
    %v4438 = vunpack.c.l.s4 1966171168
    %v4439 = vunpack.c.0.s8 %v4438
    %v4440 = vlaneseq
    %v4441 = vshrl.u32 %v4440, 7
    %v4442 = vsub.s32 %v4439, %v4441
    %v4443 = vrot.slane %v4435, %v4442
    %v4445 = vunpack.c.l.s4 1966171168
    %v4446 = vunpack.c.0.s8 %v4445
    %v4447 = vlaneseq
    %v4448 = vshrl.u32 %v4447, 7
    %v4449 = vsub.s32 %v4446, %v4448
    %v4450 = vrot.slane %v4436, %v4449
    %v4453 = vunpack.c.l.s4 1966171168
    %v4454 = vunpack.c.0.s8 %v4453
    %v4455 = vlaneseq
    %v4456 = vshrl.u32 %v4455, 7
    %v4457 = vsub.s32 %v4454, %v4456
    %v4458 = vrot.slane %v3576, %v4457
    %v4459 = vcombine.high %v4458, %v4458
    %v4461 = vunpack.c.l.s4 1966171168
    %v4462 = vunpack.c.0.s8 %v4461
    %v4463 = vlaneseq
    %v4464 = vshrl.u32 %v4463, 7
    %v4465 = vsub.s32 %v4462, %v4464
    %v4466 = vrot.slane %v4458, %v4465
    %v4468 = vunpack.c.l.s4 1966171168
    %v4469 = vunpack.c.0.s8 %v4468
    %v4470 = vlaneseq
    %v4471 = vshrl.u32 %v4470, 7
    %v4472 = vsub.s32 %v4469, %v4471
    %v4473 = vrot.slane %v4459, %v4472
    %v4476 = vunpack.c.l.s4 1966171168
    %v4477 = vunpack.c.0.s8 %v4476
    %v4478 = vlaneseq
    %v4479 = vshrl.u32 %v4478, 7
    %v4480 = vsub.s32 %v4477, %v4479
    %v4481 = vrot.slane %v4377, %v4480
    %v4482 = vcombine.high %v4481, %v4481
    %v4484 = vunpack.c.l.s4 1966171168
    %v4485 = vunpack.c.0.s8 %v4484
    %v4486 = vlaneseq
    %v4487 = vshrl.u32 %v4486, 7
    %v4488 = vsub.s32 %v4485, %v4487
    %v4489 = vrot.slane %v4481, %v4488
    %v4491 = vunpack.c.l.s4 1966171168
    %v4492 = vunpack.c.0.s8 %v4491
    %v4493 = vlaneseq
    %v4494 = vshrl.u32 %v4493, 7
    %v4495 = vsub.s32 %v4492, %v4494
    %v4496 = vrot.slane %v4482, %v4495
    %v4497 = vlaneseq
    %v4498 = vshrl.u32 %v4497, 7
    %v4499 = vsub.s32 0, %v4498
    %v4500 = vrot.slane %v4420, %v4499
    %v4501 = vlaneseq
    %v4502 = vshrl.u32 %v4501, 7
    %v4503 = vsub.s32 0, %v4502
    %v4504 = vrot.slane %v4427, %v4503
    %v4507 = vlaneseq
    %v4508 = vshrl.u32 %v4507, 7
    %v4509 = vsub.s32 0, %v4508
    %v4510 = vrot.slane %v4443, %v4509
    %v4511 = vlaneseq
    %v4512 = vshrl.u32 %v4511, 7
    %v4513 = vsub.s32 0, %v4512
    %v4514 = vrot.slane %v4450, %v4513
    %v4517 = vlaneseq
    %v4518 = vshrl.u32 %v4517, 7
    %v4519 = vsub.s32 0, %v4518
    %v4520 = vrot.slane %v4466, %v4519
    %v4521 = vlaneseq
    %v4522 = vshrl.u32 %v4521, 7
    %v4523 = vsub.s32 0, %v4522
    %v4524 = vrot.slane %v4473, %v4523
    %v4527 = vlaneseq
    %v4528 = vshrl.u32 %v4527, 7
    %v4529 = vsub.s32 0, %v4528
    %v4530 = vrot.slane %v4489, %v4529
    %v4531 = vlaneseq
    %v4532 = vshrl.u32 %v4531, 7
    %v4533 = vsub.s32 0, %v4532
    %v4534 = vrot.slane %v4496, %v4533
    %vm4537 = vcmask 1040384
    %v4538 = vsel %vm4537, %v4395, %v4500
    %v4539 = vsel %vm4537, %v4402, %v4504
    %vm4540 = vcmask 1041408
    %v4541 = vsel %vm4540, %v4538, %v4510
    %v4542 = vsel %vm4540, %v4539, %v4514
    %vm4543 = vcmask 1042432
    %v4544 = vsel %vm4543, %v4541, %v4520
    %v4545 = vsel %vm4543, %v4542, %v4524
    %vm4546 = vcmask 1043456
    %v4547 = vsel %vm4546, %v4544, %v4530
    %v4548 = vsel %vm4546, %v4545, %v4534
    %4549 = vst [vmem:[%s6] sm:$0x1f] %v4547
    %4550 = vst [vmem:[%s6 + $0x8] sm:$0x1f] %v4548
    // Predicated region
    $region38: #{memory_decoder.1} parent=1 // pred_check
      _
    $region39: #{memory_decoder.1} parent=1 // pred_check_branch
      %4552 = sbr.rel (0) target = $region41
    $region40: #{memory_decoder.1} parent=1 // pred_region
      _
    $region41: #{memory_decoder.1} parent=1 // pred_fallthru
      _
    // Predicated region
    $region42: #{memory_decoder.1} parent=1 // pred_check
      _
    $region43: #{memory_decoder.1} parent=1 // pred_check_branch
      %4554 = sbr.rel (0) target = $region45
    $region44: #{memory_decoder.1} parent=1 // pred_region
      _
    $region45: #{memory_decoder.1} parent=1 // pred_fallthru
      _
    %4555 = vsyncpa [#allocation3], 1
    %4556 = vsyncpa [#allocation5], 1

</llo_original>
